<compile_context>
chip_gen: v7x
topology: tpu7x:2x2x1
jax: 0.10.0
libtpu: 0.0.40
codegen_flags: <defaults>
</compile_context>

<pallas_src>
import jax
import jax.numpy as jnp
import numpy as np
from jax.experimental import pallas as pl
from jax.experimental.pallas import tpu as pltpu

EPS = 1e-5        # nn.BatchNorm2d default eps
CATEGORY = 20


# ---------------------------------------------------------------------------
# Fused kernel (runs once per image via the batch grid)
# ---------------------------------------------------------------------------
def _softmax_bn(z, p_ref):
    """z: (M, C) f32 conv pre-activation (no bias).
    p_ref: (3, C) f32 = [conv bias; folded BN scale; folded BN shift]."""
    z = z + p_ref[0:1, :]                                   # conv bias
    z = z - jnp.max(z, axis=-1, keepdims=True)              # softmax over channels (dim=1)
    e = jnp.exp(z)
    s = e / jnp.sum(e, axis=-1, keepdims=True)              # exact division (cheap here)
    return s * p_ref[1:2, :] + p_ref[2:3, :]                # folded BatchNorm (eval mode)


def _conv_block(x, s_ref, w_ref, p_ref):
    """Conv2d(stride 2) -> Softmax(dim=1) -> folded BatchNorm, one image.

    x:     (M_in, C_in) bf16 activation rows (row-major spatial, incl. pad rows).
    s_ref: (taps*M_out_pad, M_in) bf16 per-image 0/1 im2col gather matrix.
    w_ref: (taps, C_in, C_out) bf16 per-tap weights.
    p_ref: (3, C_out) f32 packed bias / BN scale / BN shift.
    """
    taps, _, c_out = w_ref.shape
    m_out = s_ref.shape[0] // taps
    # One gather matmul for ALL taps; S is 0/1 so the bf16 round trip is exact.
    g = jnp.dot(s_ref[...], x, preferred_element_type=jnp.float32)
    g = g.astype(jnp.bfloat16)
    acc = jnp.zeros((m_out, c_out), jnp.float32)
    for t in range(taps):                                   # unrolled at trace time
        acc = acc + jnp.dot(g[t * m_out:(t + 1) * m_out, :], w_ref[t],
                            preferred_element_type=jnp.float32)
    return _softmax_bn(acc, p_ref)


def _cnn_kernel(pat1_ref, w1_ref, p1_ref,
                s2_ref, w2_ref, p2_ref,
                s3_ref, w3_ref, p3_ref,
                w4_ref, p4_ref, wout_ref,
                out_ref, feat_ref):
    # Layer 1 (C_in = 1): pre-built im2col patches (M1_pad, 9) @ (9, 128), f32.
    z1 = jnp.dot(pat1_ref[0], w1_ref[...], preferred_element_type=jnp.float32)
    x = _softmax_bn(z1, p1_ref)                             # (176, 128) f32
    # Layers 2, 3: selection-matmul gather + per-tap weight matmuls.
    x = _conv_block(x.astype(jnp.bfloat16), s2_ref, w2_ref, p2_ref)   # (40, 64)
    x = _conv_block(x.astype(jnp.bfloat16), s3_ref, w3_ref, p3_ref)   # (8, 32)
    # Layer 4: 2x2 input, 2x2 kernel, stride 2 -> one output position; collapse
    # the conv into 4 dense taps (no selection matrix, no strided ref slicing).
    z4 = jnp.zeros((1, 16), jnp.float32)
    for p in range(4):
        z4 = z4 + jnp.dot(x[p:p + 1, :], w4_ref[p],
                          preferred_element_type=jnp.float32)
    feat = _softmax_bn(z4, p4_ref)                          # (1, 16) f32
    feat_ref[0] = feat                                      # flattened features
    out_ref[0] = jnp.dot(feat, wout_ref[...],               # fused Linear(16 -> 20)
                         preferred_element_type=jnp.float32)


# ---------------------------------------------------------------------------
# One-time parameter packing (BN fold, weight layout, per-image selection mats)
# ---------------------------------------------------------------------------
def _round_up8(n):
    return (n + 7) // 8 * 8


def _selection_matrix(h, w, k, stride, m_in_pad, m_out_pad):
    """Per-image 0/1 gather matrix of shape (k*k*m_out_pad, m_in_pad).

    Block t = i*k + j holds (in its first ho*wo rows) one-hot gathers of the
    stride-`stride` im2col tap (i, j) from a row-major (h*w)-row activation
    matrix.  Output-padding rows and input-padding columns (>= h*w) stay zero,
    so padded/garbage activation rows never propagate to the next layer.
    """
    ho = (h - k) // stride + 1
    wo = (w - k) // stride + 1
    sel = np.zeros((k * k * m_out_pad, m_in_pad), np.float32)
    for i in range(k):
        for j in range(k):
            t = i * k + j
            for p in range(ho):
                for q in range(wo):
                    row = t * m_out_pad + p * wo + q
                    col = (stride * p + i) * w + (stride * q + j)
                    sel[row, col] = 1.0
    return sel


def prepare(layers, w_out, height, width):
    """Pack parameters into kernel-ready tensors (done once, outside the hot path)."""
    def fold_bn(l):
        scale = l["gamma"] * jax.lax.rsqrt(l["var"] + EPS)
        shift = l["beta"] - l["mean"] * scale
        return jnp.stack([l["b"], scale, shift], axis=0).astype(jnp.float32)

    # Spatial size at the input of each conv layer (stride 2, padding 0).
    sizes, (h, w) = [], (height, width)
    for l in layers:
        k = int(l["w"].shape[-1])
        sizes.append((h, w, k))
        h, w = (h - k) // 2 + 1, (w - k) // 2 + 1
    assert (h, w) == (1, 1), "spatial size must reduce to 1x1 (e.g. 28x28 input)"

    prep = {}
    # Layer 1 (C_in = 1): plain im2col weight, columns ordered (i, j).
    w0 = layers[0]["w"]
    co, ci, kh, kw = w0.shape
    prep["w1"] = jnp.asarray(w0.reshape(co, ci * kh * kw).T, jnp.float32)  # (9, 128)
    prep["p1"] = fold_bn(layers[0])

    m_in_pad = _round_up8(sizes[1][0] * sizes[1][1])        # rows of pat1 / layer-1 out
    for n in (2, 3):
        l = layers[n - 1]
        wl = l["w"]
        co, ci, kh, kw = wl.shape
        hh, ww, _ = sizes[n - 1]
        ho, wo = (hh - kh) // 2 + 1, (ww - kw) // 2 + 1
        m_out_pad = _round_up8(ho * wo)
        prep[f"s{n}"] = jnp.asarray(
            _selection_matrix(hh, ww, kh, 2, m_in_pad, m_out_pad), jnp.bfloat16)
        # (C_out, C_in, kh, kw) -> (kh*kw, C_in, C_out); tap index t = i*kw + j.
        prep[f"w{n}"] = (jnp.transpose(wl, (2, 3, 1, 0))
                         .reshape(kh * kw, ci, co).astype(jnp.bfloat16))
        prep[f"p{n}"] = fold_bn(l)
        m_in_pad = m_out_pad

    # Layer 4 collapsed: (16, 32, 2, 2) -> (4, 32, 16); tap p = i*2 + j matches
    # the row-major 2x2 rows of layer-3's output.
    w4 = layers[3]["w"]
    prep["w4"] = (jnp.transpose(w4, (2, 3, 1, 0))
                  .reshape(4, 32, 16).astype(jnp.float32))
    prep["p4"] = fold_bn(layers[3])
    prep["wout"] = jnp.asarray(w_out.T, jnp.float32)        # (16, 20)
    return prep


# ---------------------------------------------------------------------------
# Forward pass (single pallas_call; only the layer-1 im2col happens outside)
# ---------------------------------------------------------------------------
@jax.jit
def cnn_forward(x, prep):
    """x: (B, 1, H, W) NCHW f32.  Returns (logits (B, 20), features (B, 16))."""
    B, _, H, W = x.shape
    k = 3
    Ho, Wo = (H - k) // 2 + 1, (W - k) // 2 + 1
    m1 = Ho * Wo
    m1_pad = prep["s2"].shape[1]                            # static

    # Layer-1 im2col at the model boundary (C_in == 1), columns ordered (i, j);
    # rows padded to a sublane multiple so all in-kernel slices are 8-aligned.
    cols = [x[:, 0, i:i + 2 * Ho - 1:2, j:j + 2 * Wo - 1:2]
            for i in range(k) for j in range(k)]
    pat1 = jnp.stack(cols, axis=-1).reshape(B, m1, k * k)
    pat1 = jnp.pad(pat1, ((0, 0), (0, m1_pad - m1), (0, 0))).astype(jnp.float32)

    def resident(a):                                        # same block every grid step
        zeros = (0,) * a.ndim
        return pl.BlockSpec(a.shape, lambda b, _z=zeros: _z)

    weights = (prep["w1"], prep["p1"], prep["s2"], prep["w2"], prep["p2"],
               prep["s3"], prep["w3"], prep["p3"], prep["w4"], prep["p4"],
               prep["wout"])

    grid_spec = pltpu.PrefetchScalarGridSpec(
        num_scalar_prefetch=0,
        grid=(B,),
        in_specs=[pl.BlockSpec((1, m1_pad, k * k), lambda b: (b, 0, 0))]
                 + [resident(a) for a in weights],
        out_specs=[pl.BlockSpec((1, 1, CATEGORY), lambda b: (b, 0, 0)),
                   pl.BlockSpec((1, 1, 16), lambda b: (b, 0, 0))],
    )
    out, feat = pl.pallas_call(
        _cnn_kernel,
        out_shape=(jax.ShapeDtypeStruct((B, 1, CATEGORY), jnp.float32),
                   jax.ShapeDtypeStruct((B, 1, 16), jnp.float32)),
        grid_spec=grid_spec,
        compiler_params=pltpu.CompilerParams(
            dimension_semantics=("parallel",),              # batch across TCs on v7x
            vmem_limit_bytes=32 * 1024 * 1024),             # explicit scoped VMEM
    )(pat1, *weights)
    return out.reshape(B, CATEGORY), feat.reshape(B, 16)


# ---------------------------------------------------------------------------
# Parameters (deterministic synthetic init; shapes from CNN.__init__)
# ---------------------------------------------------------------------------
def init_params(key):
    # (C_in, C_out, kernel) per conv layer; all strides are 2, padding 0.
    specs = [(1, 128, 3), (128, 64, 3), (64, 32, 3), (32, 16, 2)]
    layers = []
    for cin, cout, kk in specs:
        key, k1, k2, k3, k4, k5, k6 = jax.random.split(key, 7)
        layers.append(dict(
            w=jax.random.normal(k1, (cout, cin, kk, kk), jnp.float32) * 0.1,
            b=jax.random.normal(k2, (cout,), jnp.float32) * 0.1,
            gamma=1.0 + 0.1 * jax.random.normal(k3, (cout,), jnp.float32),
            beta=0.1 * jax.random.normal(k4, (cout,), jnp.float32),
            mean=0.05 * jax.random.normal(k5, (cout,), jnp.float32),
            var=jax.random.uniform(k6, (cout,), jnp.float32, 0.5, 1.5),
        ))
    key, kw = jax.random.split(key)
    w_out = jax.random.normal(kw, (CATEGORY, 16), jnp.float32) * 0.1
    return layers, w_out


# ---------------------------------------------------------------------------
# Pure-JAX reference (eval-mode BN, softmax over channels) for validation
# ---------------------------------------------------------------------------
def _ref_forward(x, layers, w_out):
    hi = jax.lax.Precision.HIGHEST
    a = x
    for l in layers:
        a = jax.lax.conv_general_dilated(
            a, l["w"], window_strides=(2, 2), padding="VALID",
            dimension_numbers=("NCHW", "OIHW", "NCHW"), precision=hi)
        a = a + l["b"][None, :, None, None]
        a = jax.nn.softmax(a, axis=1)
        inv = jax.lax.rsqrt(l["var"] + EPS)
        a = ((a - l["mean"][None, :, None, None])
             * (inv * l["gamma"])[None, :, None, None]
             + l["beta"][None, :, None, None])
    feat = a.reshape(a.shape[0], -1)
    return jnp.dot(feat, w_out.T, precision=hi), feat


if __name__ == "__main__":
    key = jax.random.PRNGKey(0)
    key, kx, kp = jax.random.split(key, 3)

    # 28x28 single-channel input so the conv stack reduces to 1x1x16, matching
    # Linear(in_features=16).  Batch = 2.
    B, H, W = 2, 28, 28
    x = jax.random.normal(kx, (B, 1, H, W), jnp.float32)
    layers, w_out = init_params(kp)

    prep = prepare(layers, w_out, H, W)
    out, feat = cnn_forward(x, prep)
    jax.block_until_ready((out, feat))

    assert out.shape == (B, CATEGORY), out.shape
    assert feat.shape == (B, 16), feat.shape

    # Validate against the pure-JAX reference (tolerance covers the bf16 MXU
    # operands; accumulation and softmax/BN math stay in f32).
    ref_out, ref_feat = _ref_forward(x, layers, w_out)
    assert jnp.allclose(feat, ref_feat, rtol=2e-2, atol=2e-3), \
        float(jnp.max(jnp.abs(feat - ref_feat)))
    assert jnp.allclose(out, ref_out, rtol=2e-2, atol=2e-3), \
        float(jnp.max(jnp.abs(out - ref_out)))

    print("KERNEL_OK")
</pallas_src>

<mosaic_0001>
module attributes {stable_mosaic.version = 11 : i64} {
  func.func @_cnn_kernel(%arg0: i32, %arg1: memref<1x176x9xf32, #tpu.memory_space<vmem>>, %arg2: memref<9x128xf32, #tpu.memory_space<vmem>>, %arg3: memref<3x128xf32, #tpu.memory_space<vmem>>, %arg4: memref<360x176xbf16, #tpu.memory_space<vmem>>, %arg5: memref<9x128x64xbf16, #tpu.memory_space<vmem>>, %arg6: memref<3x64xf32, #tpu.memory_space<vmem>>, %arg7: memref<72x40xbf16, #tpu.memory_space<vmem>>, %arg8: memref<9x64x32xbf16, #tpu.memory_space<vmem>>, %arg9: memref<3x32xf32, #tpu.memory_space<vmem>>, %arg10: memref<4x32x16xf32, #tpu.memory_space<vmem>>, %arg11: memref<3x16xf32, #tpu.memory_space<vmem>>, %arg12: memref<16x20xf32, #tpu.memory_space<vmem>>, %arg13: memref<1x1x20xf32, #tpu.memory_space<vmem>>, %arg14: memref<1x1x16xf32, #tpu.memory_space<vmem>>) attributes {dimension_semantics = [#tpu.dimension_semantics<parallel>], iteration_bounds = array<i64: 2>, scalar_prefetch = 0 : i64, scratch_operands = 0 : i64, tpu.core_type = #tpu.core_type<tc>, window_params = [{transform_indices = @transform_0, window_bounds = array<i64: 1, 176, 9>}, {pipeline_mode = #tpu.pipeline_mode<synchronous>, transform_indices = @transform_1, window_bounds = array<i64: 9, 128>}, {pipeline_mode = #tpu.pipeline_mode<synchronous>, transform_indices = @transform_2, window_bounds = array<i64: 3, 128>}, {pipeline_mode = #tpu.pipeline_mode<synchronous>, transform_indices = @transform_3, window_bounds = array<i64: 360, 176>}, {pipeline_mode = #tpu.pipeline_mode<synchronous>, transform_indices = @transform_4, window_bounds = array<i64: 9, 128, 64>}, {pipeline_mode = #tpu.pipeline_mode<synchronous>, transform_indices = @transform_5, window_bounds = array<i64: 3, 64>}, {pipeline_mode = #tpu.pipeline_mode<synchronous>, transform_indices = @transform_6, window_bounds = array<i64: 72, 40>}, {pipeline_mode = #tpu.pipeline_mode<synchronous>, transform_indices = @transform_7, window_bounds = array<i64: 9, 64, 32>}, {pipeline_mode = #tpu.pipeline_mode<synchronous>, transform_indices = @transform_8, window_bounds = array<i64: 3, 32>}, {pipeline_mode = #tpu.pipeline_mode<synchronous>, transform_indices = @transform_9, window_bounds = array<i64: 4, 32, 16>}, {pipeline_mode = #tpu.pipeline_mode<synchronous>, transform_indices = @transform_10, window_bounds = array<i64: 3, 16>}, {pipeline_mode = #tpu.pipeline_mode<synchronous>, transform_indices = @transform_11, window_bounds = array<i64: 16, 20>}, {transform_indices = @transform_12, window_bounds = array<i64: 1, 1, 20>}, {transform_indices = @transform_13, window_bounds = array<i64: 1, 1, 16>}]} {
    %c0 = arith.constant 0 : index
    %c0_0 = arith.constant 0 : index
    %c0_1 = arith.constant 0 : index
    %0 = vector.load %arg1[%c0, %c0_0, %c0_1] : memref<1x176x9xf32, #tpu.memory_space<vmem>>, vector<1x176x9xf32>
    %1 = vector.shape_cast %0 : vector<1x176x9xf32> to vector<176x9xf32>
    %c0_2 = arith.constant 0 : index
    %c0_3 = arith.constant 0 : index
    %2 = vector.load %arg2[%c0_2, %c0_3] : memref<9x128xf32, #tpu.memory_space<vmem>>, vector<9x128xf32>
    %cst = arith.constant dense<0.000000e+00> : vector<176x128xf32>
    %3 = tpu.matmul %1, %2, %cst {dimension_numbers = #tpu.dot_dimension_numbers<[1], [0], [0], [1], [0, 0, 1, 1], [], []>} : vector<176x9xf32>, vector<9x128xf32>, vector<176x128xf32> -> vector<176x128xf32>
    %c0_4 = arith.constant 0 : index
    %c0_5 = arith.constant 0 : index
    %4 = vector.load %arg3[%c0_4, %c0_5] : memref<3x128xf32, #tpu.memory_space<vmem>>, vector<1x128xf32>
    %5 = vector.broadcast %4 : vector<1x128xf32> to vector<176x128xf32>
    %6 = arith.addf %3, %5 : vector<176x128xf32>
    %cst_6 = arith.constant dense<0xFF800000> : vector<176xf32>
    %7 = vector.multi_reduction <maximumf>, %6, %cst_6 [1] : vector<176x128xf32> to vector<176xf32>
    %8 = vector.shape_cast %7 : vector<176xf32> to vector<176x1xf32>
    %9 = vector.broadcast %8 : vector<176x1xf32> to vector<176x128xf32>
    %10 = arith.subf %6, %9 : vector<176x128xf32>
    %11 = math.exp %10 : vector<176x128xf32>
    %cst_7 = arith.constant dense<0.000000e+00> : vector<176xf32>
    %12 = vector.multi_reduction <add>, %11, %cst_7 [1] : vector<176x128xf32> to vector<176xf32>
    %13 = vector.shape_cast %12 : vector<176xf32> to vector<176x1xf32>
    %14 = vector.broadcast %13 : vector<176x1xf32> to vector<176x128xf32>
    %15 = arith.divf %11, %14 : vector<176x128xf32>
    %c1 = arith.constant 1 : index
    %c0_8 = arith.constant 0 : index
    %16 = vector.load %arg3[%c1, %c0_8] : memref<3x128xf32, #tpu.memory_space<vmem>>, vector<1x128xf32>
    %17 = vector.broadcast %16 : vector<1x128xf32> to vector<176x128xf32>
    %18 = arith.mulf %15, %17 : vector<176x128xf32>
    %c2 = arith.constant 2 : index
    %c0_9 = arith.constant 0 : index
    %19 = vector.load %arg3[%c2, %c0_9] : memref<3x128xf32, #tpu.memory_space<vmem>>, vector<1x128xf32>
    %20 = vector.broadcast %19 : vector<1x128xf32> to vector<176x128xf32>
    %21 = arith.addf %18, %20 : vector<176x128xf32>
    %22 = arith.truncf %21 : vector<176x128xf32> to vector<176x128xbf16>
    %c0_10 = arith.constant 0 : index
    %c0_11 = arith.constant 0 : index
    %23 = vector.load %arg4[%c0_10, %c0_11] : memref<360x176xbf16, #tpu.memory_space<vmem>>, vector<360x176xbf16>
    %cst_12 = arith.constant dense<0.000000e+00> : vector<360x128xf32>
    %24 = tpu.matmul %23, %22, %cst_12 {dimension_numbers = #tpu.dot_dimension_numbers<[1], [0], [0], [1], [0, 0, 1, 1], [], []>} : vector<360x176xbf16>, vector<176x128xbf16>, vector<360x128xf32> -> vector<360x128xf32>
    %25 = arith.truncf %24 : vector<360x128xf32> to vector<360x128xbf16>
    %cst_13 = arith.constant 0.000000e+00 : f32
    %26 = vector.broadcast %cst_13 : f32 to vector<40x64xf32>
    %27 = vector.extract_strided_slice %25 {offsets = [0, 0], sizes = [40, 128], strides = [1, 1]} : vector<360x128xbf16> to vector<40x128xbf16>
    %c0_14 = arith.constant 0 : index
    %c0_15 = arith.constant 0 : index
    %c0_16 = arith.constant 0 : index
    %28 = vector.load %arg5[%c0_14, %c0_15, %c0_16] : memref<9x128x64xbf16, #tpu.memory_space<vmem>>, vector<1x128x64xbf16>
    %29 = vector.shape_cast %28 : vector<1x128x64xbf16> to vector<128x64xbf16>
    %cst_17 = arith.constant dense<0.000000e+00> : vector<40x64xf32>
    %30 = tpu.matmul %27, %29, %cst_17 {dimension_numbers = #tpu.dot_dimension_numbers<[1], [0], [0], [1], [0, 0, 1, 1], [], []>} : vector<40x128xbf16>, vector<128x64xbf16>, vector<40x64xf32> -> vector<40x64xf32>
    %31 = arith.addf %26, %30 : vector<40x64xf32>
    %32 = vector.extract_strided_slice %25 {offsets = [40, 0], sizes = [40, 128], strides = [1, 1]} : vector<360x128xbf16> to vector<40x128xbf16>
    %c1_18 = arith.constant 1 : index
    %c0_19 = arith.constant 0 : index
    %c0_20 = arith.constant 0 : index
    %33 = vector.load %arg5[%c1_18, %c0_19, %c0_20] : memref<9x128x64xbf16, #tpu.memory_space<vmem>>, vector<1x128x64xbf16>
    %34 = vector.shape_cast %33 : vector<1x128x64xbf16> to vector<128x64xbf16>
    %cst_21 = arith.constant dense<0.000000e+00> : vector<40x64xf32>
    %35 = tpu.matmul %32, %34, %cst_21 {dimension_numbers = #tpu.dot_dimension_numbers<[1], [0], [0], [1], [0, 0, 1, 1], [], []>} : vector<40x128xbf16>, vector<128x64xbf16>, vector<40x64xf32> -> vector<40x64xf32>
    %36 = arith.addf %31, %35 : vector<40x64xf32>
    %37 = vector.extract_strided_slice %25 {offsets = [80, 0], sizes = [40, 128], strides = [1, 1]} : vector<360x128xbf16> to vector<40x128xbf16>
    %c2_22 = arith.constant 2 : index
    %c0_23 = arith.constant 0 : index
    %c0_24 = arith.constant 0 : index
    %38 = vector.load %arg5[%c2_22, %c0_23, %c0_24] : memref<9x128x64xbf16, #tpu.memory_space<vmem>>, vector<1x128x64xbf16>
    %39 = vector.shape_cast %38 : vector<1x128x64xbf16> to vector<128x64xbf16>
    %cst_25 = arith.constant dense<0.000000e+00> : vector<40x64xf32>
    %40 = tpu.matmul %37, %39, %cst_25 {dimension_numbers = #tpu.dot_dimension_numbers<[1], [0], [0], [1], [0, 0, 1, 1], [], []>} : vector<40x128xbf16>, vector<128x64xbf16>, vector<40x64xf32> -> vector<40x64xf32>
    %41 = arith.addf %36, %40 : vector<40x64xf32>
    %42 = vector.extract_strided_slice %25 {offsets = [120, 0], sizes = [40, 128], strides = [1, 1]} : vector<360x128xbf16> to vector<40x128xbf16>
    %c3 = arith.constant 3 : index
    %c0_26 = arith.constant 0 : index
    %c0_27 = arith.constant 0 : index
    %43 = vector.load %arg5[%c3, %c0_26, %c0_27] : memref<9x128x64xbf16, #tpu.memory_space<vmem>>, vector<1x128x64xbf16>
    %44 = vector.shape_cast %43 : vector<1x128x64xbf16> to vector<128x64xbf16>
    %cst_28 = arith.constant dense<0.000000e+00> : vector<40x64xf32>
    %45 = tpu.matmul %42, %44, %cst_28 {dimension_numbers = #tpu.dot_dimension_numbers<[1], [0], [0], [1], [0, 0, 1, 1], [], []>} : vector<40x128xbf16>, vector<128x64xbf16>, vector<40x64xf32> -> vector<40x64xf32>
    %46 = arith.addf %41, %45 : vector<40x64xf32>
    %47 = vector.extract_strided_slice %25 {offsets = [160, 0], sizes = [40, 128], strides = [1, 1]} : vector<360x128xbf16> to vector<40x128xbf16>
    %c4 = arith.constant 4 : index
    %c0_29 = arith.constant 0 : index
    %c0_30 = arith.constant 0 : index
    %48 = vector.load %arg5[%c4, %c0_29, %c0_30] : memref<9x128x64xbf16, #tpu.memory_space<vmem>>, vector<1x128x64xbf16>
    %49 = vector.shape_cast %48 : vector<1x128x64xbf16> to vector<128x64xbf16>
    %cst_31 = arith.constant dense<0.000000e+00> : vector<40x64xf32>
    %50 = tpu.matmul %47, %49, %cst_31 {dimension_numbers = #tpu.dot_dimension_numbers<[1], [0], [0], [1], [0, 0, 1, 1], [], []>} : vector<40x128xbf16>, vector<128x64xbf16>, vector<40x64xf32> -> vector<40x64xf32>
    %51 = arith.addf %46, %50 : vector<40x64xf32>
    %52 = vector.extract_strided_slice %25 {offsets = [200, 0], sizes = [40, 128], strides = [1, 1]} : vector<360x128xbf16> to vector<40x128xbf16>
    %c5 = arith.constant 5 : index
    %c0_32 = arith.constant 0 : index
    %c0_33 = arith.constant 0 : index
    %53 = vector.load %arg5[%c5, %c0_32, %c0_33] : memref<9x128x64xbf16, #tpu.memory_space<vmem>>, vector<1x128x64xbf16>
    %54 = vector.shape_cast %53 : vector<1x128x64xbf16> to vector<128x64xbf16>
    %cst_34 = arith.constant dense<0.000000e+00> : vector<40x64xf32>
    %55 = tpu.matmul %52, %54, %cst_34 {dimension_numbers = #tpu.dot_dimension_numbers<[1], [0], [0], [1], [0, 0, 1, 1], [], []>} : vector<40x128xbf16>, vector<128x64xbf16>, vector<40x64xf32> -> vector<40x64xf32>
    %56 = arith.addf %51, %55 : vector<40x64xf32>
    %57 = vector.extract_strided_slice %25 {offsets = [240, 0], sizes = [40, 128], strides = [1, 1]} : vector<360x128xbf16> to vector<40x128xbf16>
    %c6 = arith.constant 6 : index
    %c0_35 = arith.constant 0 : index
    %c0_36 = arith.constant 0 : index
    %58 = vector.load %arg5[%c6, %c0_35, %c0_36] : memref<9x128x64xbf16, #tpu.memory_space<vmem>>, vector<1x128x64xbf16>
    %59 = vector.shape_cast %58 : vector<1x128x64xbf16> to vector<128x64xbf16>
    %cst_37 = arith.constant dense<0.000000e+00> : vector<40x64xf32>
    %60 = tpu.matmul %57, %59, %cst_37 {dimension_numbers = #tpu.dot_dimension_numbers<[1], [0], [0], [1], [0, 0, 1, 1], [], []>} : vector<40x128xbf16>, vector<128x64xbf16>, vector<40x64xf32> -> vector<40x64xf32>
    %61 = arith.addf %56, %60 : vector<40x64xf32>
    %62 = vector.extract_strided_slice %25 {offsets = [280, 0], sizes = [40, 128], strides = [1, 1]} : vector<360x128xbf16> to vector<40x128xbf16>
    %c7 = arith.constant 7 : index
    %c0_38 = arith.constant 0 : index
    %c0_39 = arith.constant 0 : index
    %63 = vector.load %arg5[%c7, %c0_38, %c0_39] : memref<9x128x64xbf16, #tpu.memory_space<vmem>>, vector<1x128x64xbf16>
    %64 = vector.shape_cast %63 : vector<1x128x64xbf16> to vector<128x64xbf16>
    %cst_40 = arith.constant dense<0.000000e+00> : vector<40x64xf32>
    %65 = tpu.matmul %62, %64, %cst_40 {dimension_numbers = #tpu.dot_dimension_numbers<[1], [0], [0], [1], [0, 0, 1, 1], [], []>} : vector<40x128xbf16>, vector<128x64xbf16>, vector<40x64xf32> -> vector<40x64xf32>
    %66 = arith.addf %61, %65 : vector<40x64xf32>
    %67 = vector.extract_strided_slice %25 {offsets = [320, 0], sizes = [40, 128], strides = [1, 1]} : vector<360x128xbf16> to vector<40x128xbf16>
    %c8 = arith.constant 8 : index
    %c0_41 = arith.constant 0 : index
    %c0_42 = arith.constant 0 : index
    %68 = vector.load %arg5[%c8, %c0_41, %c0_42] : memref<9x128x64xbf16, #tpu.memory_space<vmem>>, vector<1x128x64xbf16>
    %69 = vector.shape_cast %68 : vector<1x128x64xbf16> to vector<128x64xbf16>
    %cst_43 = arith.constant dense<0.000000e+00> : vector<40x64xf32>
    %70 = tpu.matmul %67, %69, %cst_43 {dimension_numbers = #tpu.dot_dimension_numbers<[1], [0], [0], [1], [0, 0, 1, 1], [], []>} : vector<40x128xbf16>, vector<128x64xbf16>, vector<40x64xf32> -> vector<40x64xf32>
    %71 = arith.addf %66, %70 : vector<40x64xf32>
    %c0_44 = arith.constant 0 : index
    %c0_45 = arith.constant 0 : index
    %72 = vector.load %arg6[%c0_44, %c0_45] : memref<3x64xf32, #tpu.memory_space<vmem>>, vector<1x64xf32>
    %73 = vector.broadcast %72 : vector<1x64xf32> to vector<40x64xf32>
    %74 = arith.addf %71, %73 : vector<40x64xf32>
    %cst_46 = arith.constant dense<0xFF800000> : vector<40xf32>
    %75 = vector.multi_reduction <maximumf>, %74, %cst_46 [1] : vector<40x64xf32> to vector<40xf32>
    %76 = vector.shape_cast %75 : vector<40xf32> to vector<40x1xf32>
    %77 = vector.broadcast %76 : vector<40x1xf32> to vector<40x64xf32>
    %78 = arith.subf %74, %77 : vector<40x64xf32>
    %79 = math.exp %78 : vector<40x64xf32>
    %cst_47 = arith.constant dense<0.000000e+00> : vector<40xf32>
    %80 = vector.multi_reduction <add>, %79, %cst_47 [1] : vector<40x64xf32> to vector<40xf32>
    %81 = vector.shape_cast %80 : vector<40xf32> to vector<40x1xf32>
    %82 = vector.broadcast %81 : vector<40x1xf32> to vector<40x64xf32>
    %83 = arith.divf %79, %82 : vector<40x64xf32>
    %c1_48 = arith.constant 1 : index
    %c0_49 = arith.constant 0 : index
    %84 = vector.load %arg6[%c1_48, %c0_49] : memref<3x64xf32, #tpu.memory_space<vmem>>, vector<1x64xf32>
    %85 = vector.broadcast %84 : vector<1x64xf32> to vector<40x64xf32>
    %86 = arith.mulf %83, %85 : vector<40x64xf32>
    %c2_50 = arith.constant 2 : index
    %c0_51 = arith.constant 0 : index
    %87 = vector.load %arg6[%c2_50, %c0_51] : memref<3x64xf32, #tpu.memory_space<vmem>>, vector<1x64xf32>
    %88 = vector.broadcast %87 : vector<1x64xf32> to vector<40x64xf32>
    %89 = arith.addf %86, %88 : vector<40x64xf32>
    %90 = arith.truncf %89 : vector<40x64xf32> to vector<40x64xbf16>
    %c0_52 = arith.constant 0 : index
    %c0_53 = arith.constant 0 : index
    %91 = vector.load %arg7[%c0_52, %c0_53] : memref<72x40xbf16, #tpu.memory_space<vmem>>, vector<72x40xbf16>
    %cst_54 = arith.constant dense<0.000000e+00> : vector<72x64xf32>
    %92 = tpu.matmul %91, %90, %cst_54 {dimension_numbers = #tpu.dot_dimension_numbers<[1], [0], [0], [1], [0, 0, 1, 1], [], []>} : vector<72x40xbf16>, vector<40x64xbf16>, vector<72x64xf32> -> vector<72x64xf32>
    %93 = arith.truncf %92 : vector<72x64xf32> to vector<72x64xbf16>
    %cst_55 = arith.constant 0.000000e+00 : f32
    %94 = vector.broadcast %cst_55 : f32 to vector<8x32xf32>
    %95 = vector.extract_strided_slice %93 {offsets = [0, 0], sizes = [8, 64], strides = [1, 1]} : vector<72x64xbf16> to vector<8x64xbf16>
    %c0_56 = arith.constant 0 : index
    %c0_57 = arith.constant 0 : index
    %c0_58 = arith.constant 0 : index
    %96 = vector.load %arg8[%c0_56, %c0_57, %c0_58] : memref<9x64x32xbf16, #tpu.memory_space<vmem>>, vector<1x64x32xbf16>
    %97 = vector.shape_cast %96 : vector<1x64x32xbf16> to vector<64x32xbf16>
    %cst_59 = arith.constant dense<0.000000e+00> : vector<8x32xf32>
    %98 = tpu.matmul %95, %97, %cst_59 {dimension_numbers = #tpu.dot_dimension_numbers<[1], [0], [0], [1], [0, 0, 1, 1], [], []>} : vector<8x64xbf16>, vector<64x32xbf16>, vector<8x32xf32> -> vector<8x32xf32>
    %99 = arith.addf %94, %98 : vector<8x32xf32>
    %100 = vector.extract_strided_slice %93 {offsets = [8, 0], sizes = [8, 64], strides = [1, 1]} : vector<72x64xbf16> to vector<8x64xbf16>
    %c1_60 = arith.constant 1 : index
    %c0_61 = arith.constant 0 : index
    %c0_62 = arith.constant 0 : index
    %101 = vector.load %arg8[%c1_60, %c0_61, %c0_62] : memref<9x64x32xbf16, #tpu.memory_space<vmem>>, vector<1x64x32xbf16>
    %102 = vector.shape_cast %101 : vector<1x64x32xbf16> to vector<64x32xbf16>
    %cst_63 = arith.constant dense<0.000000e+00> : vector<8x32xf32>
    %103 = tpu.matmul %100, %102, %cst_63 {dimension_numbers = #tpu.dot_dimension_numbers<[1], [0], [0], [1], [0, 0, 1, 1], [], []>} : vector<8x64xbf16>, vector<64x32xbf16>, vector<8x32xf32> -> vector<8x32xf32>
    %104 = arith.addf %99, %103 : vector<8x32xf32>
    %105 = vector.extract_strided_slice %93 {offsets = [16, 0], sizes = [8, 64], strides = [1, 1]} : vector<72x64xbf16> to vector<8x64xbf16>
    %c2_64 = arith.constant 2 : index
    %c0_65 = arith.constant 0 : index
    %c0_66 = arith.constant 0 : index
    %106 = vector.load %arg8[%c2_64, %c0_65, %c0_66] : memref<9x64x32xbf16, #tpu.memory_space<vmem>>, vector<1x64x32xbf16>
    %107 = vector.shape_cast %106 : vector<1x64x32xbf16> to vector<64x32xbf16>
    %cst_67 = arith.constant dense<0.000000e+00> : vector<8x32xf32>
    %108 = tpu.matmul %105, %107, %cst_67 {dimension_numbers = #tpu.dot_dimension_numbers<[1], [0], [0], [1], [0, 0, 1, 1], [], []>} : vector<8x64xbf16>, vector<64x32xbf16>, vector<8x32xf32> -> vector<8x32xf32>
    %109 = arith.addf %104, %108 : vector<8x32xf32>
    %110 = vector.extract_strided_slice %93 {offsets = [24, 0], sizes = [8, 64], strides = [1, 1]} : vector<72x64xbf16> to vector<8x64xbf16>
    %c3_68 = arith.constant 3 : index
    %c0_69 = arith.constant 0 : index
    %c0_70 = arith.constant 0 : index
    %111 = vector.load %arg8[%c3_68, %c0_69, %c0_70] : memref<9x64x32xbf16, #tpu.memory_space<vmem>>, vector<1x64x32xbf16>
    %112 = vector.shape_cast %111 : vector<1x64x32xbf16> to vector<64x32xbf16>
    %cst_71 = arith.constant dense<0.000000e+00> : vector<8x32xf32>
    %113 = tpu.matmul %110, %112, %cst_71 {dimension_numbers = #tpu.dot_dimension_numbers<[1], [0], [0], [1], [0, 0, 1, 1], [], []>} : vector<8x64xbf16>, vector<64x32xbf16>, vector<8x32xf32> -> vector<8x32xf32>
    %114 = arith.addf %109, %113 : vector<8x32xf32>
    %115 = vector.extract_strided_slice %93 {offsets = [32, 0], sizes = [8, 64], strides = [1, 1]} : vector<72x64xbf16> to vector<8x64xbf16>
    %c4_72 = arith.constant 4 : index
    %c0_73 = arith.constant 0 : index
    %c0_74 = arith.constant 0 : index
    %116 = vector.load %arg8[%c4_72, %c0_73, %c0_74] : memref<9x64x32xbf16, #tpu.memory_space<vmem>>, vector<1x64x32xbf16>
    %117 = vector.shape_cast %116 : vector<1x64x32xbf16> to vector<64x32xbf16>
    %cst_75 = arith.constant dense<0.000000e+00> : vector<8x32xf32>
    %118 = tpu.matmul %115, %117, %cst_75 {dimension_numbers = #tpu.dot_dimension_numbers<[1], [0], [0], [1], [0, 0, 1, 1], [], []>} : vector<8x64xbf16>, vector<64x32xbf16>, vector<8x32xf32> -> vector<8x32xf32>
    %119 = arith.addf %114, %118 : vector<8x32xf32>
    %120 = vector.extract_strided_slice %93 {offsets = [40, 0], sizes = [8, 64], strides = [1, 1]} : vector<72x64xbf16> to vector<8x64xbf16>
    %c5_76 = arith.constant 5 : index
    %c0_77 = arith.constant 0 : index
    %c0_78 = arith.constant 0 : index
    %121 = vector.load %arg8[%c5_76, %c0_77, %c0_78] : memref<9x64x32xbf16, #tpu.memory_space<vmem>>, vector<1x64x32xbf16>
    %122 = vector.shape_cast %121 : vector<1x64x32xbf16> to vector<64x32xbf16>
    %cst_79 = arith.constant dense<0.000000e+00> : vector<8x32xf32>
    %123 = tpu.matmul %120, %122, %cst_79 {dimension_numbers = #tpu.dot_dimension_numbers<[1], [0], [0], [1], [0, 0, 1, 1], [], []>} : vector<8x64xbf16>, vector<64x32xbf16>, vector<8x32xf32> -> vector<8x32xf32>
    %124 = arith.addf %119, %123 : vector<8x32xf32>
    %125 = vector.extract_strided_slice %93 {offsets = [48, 0], sizes = [8, 64], strides = [1, 1]} : vector<72x64xbf16> to vector<8x64xbf16>
    %c6_80 = arith.constant 6 : index
    %c0_81 = arith.constant 0 : index
    %c0_82 = arith.constant 0 : index
    %126 = vector.load %arg8[%c6_80, %c0_81, %c0_82] : memref<9x64x32xbf16, #tpu.memory_space<vmem>>, vector<1x64x32xbf16>
    %127 = vector.shape_cast %126 : vector<1x64x32xbf16> to vector<64x32xbf16>
    %cst_83 = arith.constant dense<0.000000e+00> : vector<8x32xf32>
    %128 = tpu.matmul %125, %127, %cst_83 {dimension_numbers = #tpu.dot_dimension_numbers<[1], [0], [0], [1], [0, 0, 1, 1], [], []>} : vector<8x64xbf16>, vector<64x32xbf16>, vector<8x32xf32> -> vector<8x32xf32>
    %129 = arith.addf %124, %128 : vector<8x32xf32>
    %130 = vector.extract_strided_slice %93 {offsets = [56, 0], sizes = [8, 64], strides = [1, 1]} : vector<72x64xbf16> to vector<8x64xbf16>
    %c7_84 = arith.constant 7 : index
    %c0_85 = arith.constant 0 : index
    %c0_86 = arith.constant 0 : index
    %131 = vector.load %arg8[%c7_84, %c0_85, %c0_86] : memref<9x64x32xbf16, #tpu.memory_space<vmem>>, vector<1x64x32xbf16>
    %132 = vector.shape_cast %131 : vector<1x64x32xbf16> to vector<64x32xbf16>
    %cst_87 = arith.constant dense<0.000000e+00> : vector<8x32xf32>
    %133 = tpu.matmul %130, %132, %cst_87 {dimension_numbers = #tpu.dot_dimension_numbers<[1], [0], [0], [1], [0, 0, 1, 1], [], []>} : vector<8x64xbf16>, vector<64x32xbf16>, vector<8x32xf32> -> vector<8x32xf32>
    %134 = arith.addf %129, %133 : vector<8x32xf32>
    %135 = vector.extract_strided_slice %93 {offsets = [64, 0], sizes = [8, 64], strides = [1, 1]} : vector<72x64xbf16> to vector<8x64xbf16>
    %c8_88 = arith.constant 8 : index
    %c0_89 = arith.constant 0 : index
    %c0_90 = arith.constant 0 : index
    %136 = vector.load %arg8[%c8_88, %c0_89, %c0_90] : memref<9x64x32xbf16, #tpu.memory_space<vmem>>, vector<1x64x32xbf16>
    %137 = vector.shape_cast %136 : vector<1x64x32xbf16> to vector<64x32xbf16>
    %cst_91 = arith.constant dense<0.000000e+00> : vector<8x32xf32>
    %138 = tpu.matmul %135, %137, %cst_91 {dimension_numbers = #tpu.dot_dimension_numbers<[1], [0], [0], [1], [0, 0, 1, 1], [], []>} : vector<8x64xbf16>, vector<64x32xbf16>, vector<8x32xf32> -> vector<8x32xf32>
    %139 = arith.addf %134, %138 : vector<8x32xf32>
    %c0_92 = arith.constant 0 : index
    %c0_93 = arith.constant 0 : index
    %140 = vector.load %arg9[%c0_92, %c0_93] : memref<3x32xf32, #tpu.memory_space<vmem>>, vector<1x32xf32>
    %141 = vector.broadcast %140 : vector<1x32xf32> to vector<8x32xf32>
    %142 = arith.addf %139, %141 : vector<8x32xf32>
    %cst_94 = arith.constant dense<0xFF800000> : vector<8xf32>
    %143 = vector.multi_reduction <maximumf>, %142, %cst_94 [1] : vector<8x32xf32> to vector<8xf32>
    %144 = vector.shape_cast %143 : vector<8xf32> to vector<8x1xf32>
    %145 = vector.broadcast %144 : vector<8x1xf32> to vector<8x32xf32>
    %146 = arith.subf %142, %145 : vector<8x32xf32>
    %147 = math.exp %146 : vector<8x32xf32>
    %cst_95 = arith.constant dense<0.000000e+00> : vector<8xf32>
    %148 = vector.multi_reduction <add>, %147, %cst_95 [1] : vector<8x32xf32> to vector<8xf32>
    %149 = vector.shape_cast %148 : vector<8xf32> to vector<8x1xf32>
    %150 = vector.broadcast %149 : vector<8x1xf32> to vector<8x32xf32>
    %151 = arith.divf %147, %150 : vector<8x32xf32>
    %c1_96 = arith.constant 1 : index
    %c0_97 = arith.constant 0 : index
    %152 = vector.load %arg9[%c1_96, %c0_97] : memref<3x32xf32, #tpu.memory_space<vmem>>, vector<1x32xf32>
    %153 = vector.broadcast %152 : vector<1x32xf32> to vector<8x32xf32>
    %154 = arith.mulf %151, %153 : vector<8x32xf32>
    %c2_98 = arith.constant 2 : index
    %c0_99 = arith.constant 0 : index
    %155 = vector.load %arg9[%c2_98, %c0_99] : memref<3x32xf32, #tpu.memory_space<vmem>>, vector<1x32xf32>
    %156 = vector.broadcast %155 : vector<1x32xf32> to vector<8x32xf32>
    %157 = arith.addf %154, %156 : vector<8x32xf32>
    %cst_100 = arith.constant 0.000000e+00 : f32
    %158 = vector.broadcast %cst_100 : f32 to vector<1x16xf32>
    %159 = vector.extract_strided_slice %157 {offsets = [0, 0], sizes = [1, 32], strides = [1, 1]} : vector<8x32xf32> to vector<1x32xf32>
    %c0_101 = arith.constant 0 : index
    %c0_102 = arith.constant 0 : index
    %c0_103 = arith.constant 0 : index
    %160 = vector.load %arg10[%c0_101, %c0_102, %c0_103] : memref<4x32x16xf32, #tpu.memory_space<vmem>>, vector<1x32x16xf32>
    %161 = vector.shape_cast %160 : vector<1x32x16xf32> to vector<32x16xf32>
    %cst_104 = arith.constant dense<0.000000e+00> : vector<1x16xf32>
    %162 = tpu.matmul %159, %161, %cst_104 {dimension_numbers = #tpu.dot_dimension_numbers<[1], [0], [0], [1], [0, 0, 1, 1], [], []>} : vector<1x32xf32>, vector<32x16xf32>, vector<1x16xf32> -> vector<1x16xf32>
    %163 = arith.addf %158, %162 : vector<1x16xf32>
    %164 = vector.extract_strided_slice %157 {offsets = [1, 0], sizes = [1, 32], strides = [1, 1]} : vector<8x32xf32> to vector<1x32xf32>
    %c1_105 = arith.constant 1 : index
    %c0_106 = arith.constant 0 : index
    %c0_107 = arith.constant 0 : index
    %165 = vector.load %arg10[%c1_105, %c0_106, %c0_107] : memref<4x32x16xf32, #tpu.memory_space<vmem>>, vector<1x32x16xf32>
    %166 = vector.shape_cast %165 : vector<1x32x16xf32> to vector<32x16xf32>
    %cst_108 = arith.constant dense<0.000000e+00> : vector<1x16xf32>
    %167 = tpu.matmul %164, %166, %cst_108 {dimension_numbers = #tpu.dot_dimension_numbers<[1], [0], [0], [1], [0, 0, 1, 1], [], []>} : vector<1x32xf32>, vector<32x16xf32>, vector<1x16xf32> -> vector<1x16xf32>
    %168 = arith.addf %163, %167 : vector<1x16xf32>
    %169 = vector.extract_strided_slice %157 {offsets = [2, 0], sizes = [1, 32], strides = [1, 1]} : vector<8x32xf32> to vector<1x32xf32>
    %c2_109 = arith.constant 2 : index
    %c0_110 = arith.constant 0 : index
    %c0_111 = arith.constant 0 : index
    %170 = vector.load %arg10[%c2_109, %c0_110, %c0_111] : memref<4x32x16xf32, #tpu.memory_space<vmem>>, vector<1x32x16xf32>
    %171 = vector.shape_cast %170 : vector<1x32x16xf32> to vector<32x16xf32>
    %cst_112 = arith.constant dense<0.000000e+00> : vector<1x16xf32>
    %172 = tpu.matmul %169, %171, %cst_112 {dimension_numbers = #tpu.dot_dimension_numbers<[1], [0], [0], [1], [0, 0, 1, 1], [], []>} : vector<1x32xf32>, vector<32x16xf32>, vector<1x16xf32> -> vector<1x16xf32>
    %173 = arith.addf %168, %172 : vector<1x16xf32>
    %174 = vector.extract_strided_slice %157 {offsets = [3, 0], sizes = [1, 32], strides = [1, 1]} : vector<8x32xf32> to vector<1x32xf32>
    %c3_113 = arith.constant 3 : index
    %c0_114 = arith.constant 0 : index
    %c0_115 = arith.constant 0 : index
    %175 = vector.load %arg10[%c3_113, %c0_114, %c0_115] : memref<4x32x16xf32, #tpu.memory_space<vmem>>, vector<1x32x16xf32>
    %176 = vector.shape_cast %175 : vector<1x32x16xf32> to vector<32x16xf32>
    %cst_116 = arith.constant dense<0.000000e+00> : vector<1x16xf32>
    %177 = tpu.matmul %174, %176, %cst_116 {dimension_numbers = #tpu.dot_dimension_numbers<[1], [0], [0], [1], [0, 0, 1, 1], [], []>} : vector<1x32xf32>, vector<32x16xf32>, vector<1x16xf32> -> vector<1x16xf32>
    %178 = arith.addf %173, %177 : vector<1x16xf32>
    %c0_117 = arith.constant 0 : index
    %c0_118 = arith.constant 0 : index
    %179 = vector.load %arg11[%c0_117, %c0_118] : memref<3x16xf32, #tpu.memory_space<vmem>>, vector<1x16xf32>
    %180 = arith.addf %178, %179 : vector<1x16xf32>
    %cst_119 = arith.constant dense<0xFF800000> : vector<1xf32>
    %181 = vector.multi_reduction <maximumf>, %180, %cst_119 [1] : vector<1x16xf32> to vector<1xf32>
    %182 = vector.shape_cast %181 : vector<1xf32> to vector<1x1xf32>
    %183 = vector.broadcast %182 : vector<1x1xf32> to vector<1x16xf32>
    %184 = arith.subf %180, %183 : vector<1x16xf32>
    %185 = math.exp %184 : vector<1x16xf32>
    %cst_120 = arith.constant dense<0.000000e+00> : vector<1xf32>
    %186 = vector.multi_reduction <add>, %185, %cst_120 [1] : vector<1x16xf32> to vector<1xf32>
    %187 = vector.shape_cast %186 : vector<1xf32> to vector<1x1xf32>
    %188 = vector.broadcast %187 : vector<1x1xf32> to vector<1x16xf32>
    %189 = arith.divf %185, %188 : vector<1x16xf32>
    %c1_121 = arith.constant 1 : index
    %c0_122 = arith.constant 0 : index
    %190 = vector.load %arg11[%c1_121, %c0_122] : memref<3x16xf32, #tpu.memory_space<vmem>>, vector<1x16xf32>
    %191 = arith.mulf %189, %190 : vector<1x16xf32>
    %c2_123 = arith.constant 2 : index
    %c0_124 = arith.constant 0 : index
    %192 = vector.load %arg11[%c2_123, %c0_124] : memref<3x16xf32, #tpu.memory_space<vmem>>, vector<1x16xf32>
    %193 = arith.addf %191, %192 : vector<1x16xf32>
    %c0_125 = arith.constant 0 : index
    %c0_126 = arith.constant 0 : index
    %c0_127 = arith.constant 0 : index
    %194 = vector.load %arg14[%c0_125, %c0_126, %c0_127] : memref<1x1x16xf32, #tpu.memory_space<vmem>>, vector<1x1x16xf32>
    %195 = vector.shape_cast %194 : vector<1x1x16xf32> to vector<1x16xf32>
    %196 = vector.shape_cast %193 : vector<1x16xf32> to vector<1x1x16xf32>
    tpu.vector_store %arg14[%c0_125, %c0_126, %c0_127], %196 {strides = array<i32>} : memref<1x1x16xf32, #tpu.memory_space<vmem>>, vector<1x1x16xf32>,
    %c0_128 = arith.constant 0 : index
    %c0_129 = arith.constant 0 : index
    %197 = vector.load %arg12[%c0_128, %c0_129] : memref<16x20xf32, #tpu.memory_space<vmem>>, vector<16x20xf32>
    %cst_130 = arith.constant dense<0.000000e+00> : vector<1x20xf32>
    %198 = tpu.matmul %193, %197, %cst_130 {dimension_numbers = #tpu.dot_dimension_numbers<[1], [0], [0], [1], [0, 0, 1, 1], [], []>} : vector<1x16xf32>, vector<16x20xf32>, vector<1x20xf32> -> vector<1x20xf32>
    %c0_131 = arith.constant 0 : index
    %c0_132 = arith.constant 0 : index
    %c0_133 = arith.constant 0 : index
    %199 = vector.load %arg13[%c0_131, %c0_132, %c0_133] : memref<1x1x20xf32, #tpu.memory_space<vmem>>, vector<1x1x20xf32>
    %200 = vector.shape_cast %199 : vector<1x1x20xf32> to vector<1x20xf32>
    %201 = vector.shape_cast %198 : vector<1x20xf32> to vector<1x1x20xf32>
    tpu.vector_store %arg13[%c0_131, %c0_132, %c0_133], %201 {strides = array<i32>} : memref<1x1x20xf32, #tpu.memory_space<vmem>>, vector<1x1x20xf32>,
    return
  }
  func.func @transform_0(%arg0: i32) -> (i32, i32, i32) {
    %c0_i32 = arith.constant 0 : i32
    %c0_i32_0 = arith.constant 0 : i32
    %c0_i32_1 = arith.constant 0 : i32
    return %arg0, %c0_i32, %c0_i32_0 : i32, i32, i32
  }
  func.func @transform_1(%arg0: i32) -> (i32, i32) {
    %c0_i32 = arith.constant 0 : i32
    %c0_i32_0 = arith.constant 0 : i32
    %c0_i32_1 = arith.constant 0 : i32
    return %c0_i32, %c0_i32_0 : i32, i32
  }
  func.func @transform_2(%arg0: i32) -> (i32, i32) {
    %c0_i32 = arith.constant 0 : i32
    %c0_i32_0 = arith.constant 0 : i32
    %c0_i32_1 = arith.constant 0 : i32
    return %c0_i32, %c0_i32_0 : i32, i32
  }
  func.func @transform_3(%arg0: i32) -> (i32, i32) {
    %c0_i32 = arith.constant 0 : i32
    %c0_i32_0 = arith.constant 0 : i32
    %c0_i32_1 = arith.constant 0 : i32
    return %c0_i32, %c0_i32_0 : i32, i32
  }
  func.func @transform_4(%arg0: i32) -> (i32, i32, i32) {
    %c0_i32 = arith.constant 0 : i32
    %c0_i32_0 = arith.constant 0 : i32
    %c0_i32_1 = arith.constant 0 : i32
    %c0_i32_2 = arith.constant 0 : i32
    return %c0_i32, %c0_i32_0, %c0_i32_1 : i32, i32, i32
  }
  func.func @transform_5(%arg0: i32) -> (i32, i32) {
    %c0_i32 = arith.constant 0 : i32
    %c0_i32_0 = arith.constant 0 : i32
    %c0_i32_1 = arith.constant 0 : i32
    return %c0_i32, %c0_i32_0 : i32, i32
  }
  func.func @transform_6(%arg0: i32) -> (i32, i32) {
    %c0_i32 = arith.constant 0 : i32
    %c0_i32_0 = arith.constant 0 : i32
    %c0_i32_1 = arith.constant 0 : i32
    return %c0_i32, %c0_i32_0 : i32, i32
  }
  func.func @transform_7(%arg0: i32) -> (i32, i32, i32) {
    %c0_i32 = arith.constant 0 : i32
    %c0_i32_0 = arith.constant 0 : i32
    %c0_i32_1 = arith.constant 0 : i32
    %c0_i32_2 = arith.constant 0 : i32
    return %c0_i32, %c0_i32_0, %c0_i32_1 : i32, i32, i32
  }
  func.func @transform_8(%arg0: i32) -> (i32, i32) {
    %c0_i32 = arith.constant 0 : i32
    %c0_i32_0 = arith.constant 0 : i32
    %c0_i32_1 = arith.constant 0 : i32
    return %c0_i32, %c0_i32_0 : i32, i32
  }
  func.func @transform_9(%arg0: i32) -> (i32, i32, i32) {
    %c0_i32 = arith.constant 0 : i32
    %c0_i32_0 = arith.constant 0 : i32
    %c0_i32_1 = arith.constant 0 : i32
    %c0_i32_2 = arith.constant 0 : i32
    return %c0_i32, %c0_i32_0, %c0_i32_1 : i32, i32, i32
  }
  func.func @transform_10(%arg0: i32) -> (i32, i32) {
    %c0_i32 = arith.constant 0 : i32
    %c0_i32_0 = arith.constant 0 : i32
    %c0_i32_1 = arith.constant 0 : i32
    return %c0_i32, %c0_i32_0 : i32, i32
  }
  func.func @transform_11(%arg0: i32) -> (i32, i32) {
    %c0_i32 = arith.constant 0 : i32
    %c0_i32_0 = arith.constant 0 : i32
    %c0_i32_1 = arith.constant 0 : i32
    return %c0_i32, %c0_i32_0 : i32, i32
  }
  func.func @transform_12(%arg0: i32) -> (i32, i32, i32) {
    %c0_i32 = arith.constant 0 : i32
    %c0_i32_0 = arith.constant 0 : i32
    %c0_i32_1 = arith.constant 0 : i32
    return %arg0, %c0_i32, %c0_i32_0 : i32, i32, i32
  }
  func.func @transform_13(%arg0: i32) -> (i32, i32, i32) {
    %c0_i32 = arith.constant 0 : i32
    %c0_i32_0 = arith.constant 0 : i32
    %c0_i32_1 = arith.constant 0 : i32
    return %arg0, %c0_i32, %c0_i32_0 : i32, i32, i32
  }
}

</mosaic_0001>

<llo_original>
// kernel: cnn_forward.1
$region0: #{cnn_forward.1}
  #allocation0 [shape = 'u32[]', space=smem, size = 0x4, offset = 0x4, fixed_abs, tag = 'smem constant byte address 0x4 - core index']
  #allocation1 [shape = 'u32[144,128]{1,0:T(1,128)}', space=vmem, size = 0x12000, scoped, tag = 'internal scratch']
  %s0 = inlined_call_operand.vmem [shape: f32[2,176,9], index: 0, kind: input, shape index: {}]
  %s1 = inlined_call_operand.vmem [shape: f32[9,128], index: 1, kind: input, shape index: {}]
  %s2 = inlined_call_operand.vmem [shape: f32[3,128], index: 2, kind: input, shape index: {}]
  %s3 = inlined_call_operand.vmem [shape: bf16[360,176], index: 3, kind: input, shape index: {}]
  %s4 = inlined_call_operand.vmem [shape: bf16[9,128,64], index: 4, kind: input, shape index: {}]
  %s5 = inlined_call_operand.vmem [shape: f32[3,64], index: 5, kind: input, shape index: {}]
  %s6 = inlined_call_operand.vmem [shape: bf16[72,40], index: 6, kind: input, shape index: {}]
  %s7 = inlined_call_operand.vmem [shape: bf16[9,64,32], index: 7, kind: input, shape index: {}]
  %s8 = inlined_call_operand.vmem [shape: f32[3,32], index: 8, kind: input, shape index: {}]
  %s9 = inlined_call_operand.vmem [shape: f32[4,32,16], index: 9, kind: input, shape index: {}]
  %s10 = inlined_call_operand.vmem [shape: f32[3,16], index: 10, kind: input, shape index: {}]
  %s11 = inlined_call_operand.vmem [shape: f32[16,20], index: 11, kind: input, shape index: {}]
  %s12 = inlined_call_operand.hbm [shape: f32[2,1,20], index: 12, kind: output, shape index: {0}]
  %s13 = inlined_call_operand.hbm [shape: f32[2,1,16], index: 13, kind: output, shape index: {1}]
  %14 = xla_tuple %s12, %s13
  %s15 = sld [smem:[#allocation0]]
  $region89: #{cnn_forward.1} parent=0
    _
  %s17 = ssub.s32 1, %s15
  %s18 = scalar_select 0, %s17, %s15
  $region1: #{cnn_forward.1} parent=0
    #allocation2 [shape = 'u8[1024]{0}', space=vmem, size = 0x400, scoped, tag = 'output window, operand 0']
    #allocation3 [shape = 's32[2]{0}', space=sflag, size = 0x8, scoped, tag = 'scoped memory for cnn_forward.1']
    #allocation4 [shape = 'u8[1024]{0}', space=vmem, size = 0x400, scoped, tag = 'output window, operand 1']
    #allocation5 [shape = 's32[2]{0}', space=sflag, size = 0x8, scoped, tag = 'scoped memory for cnn_forward.1']
    %19 = vsyncpa [#allocation3], 0
    %s20 = scalar_lea.sflag [#allocation3], 1
    %21 = vsyncpa %s20, 0
    %22 = vsyncpa [#allocation5], 0
    %s23 = scalar_lea.sflag [#allocation5], 1
    %24 = vsyncpa %s23, 0
    loop: start=0, step=1, limit=4
    $region2: #{cnn_forward.1} parent=1 // loop_pre_header
      _
    $region3: #{cnn_forward.1} parent=1 // loop_header
      %s26 = sphi 0, %s30
      %p27 = scmp.ge.s32.totalorder %s26, 4
      %s36 = sphi 0, %s38
      %s39 = sphi 0, %s36
      %s40 = sphi 0, %s39
      %s56 = sphi 0, %s40
      %s60 = sphi 0, %s60
      %s62 = sphi 0, %s60
      %s63 = sphi 0, %s62
      %s77 = sphi 0, %s63
      %s81 = sphi 0, %s81
      %s83 = sphi 0, %s81
      %s84 = sphi 0, %s83
      %s98 = sphi 0, %s84
      %s102 = sphi 0, %s102
      %s104 = sphi 0, %s102
      %s105 = sphi 0, %s104
      %s119 = sphi 0, %s105
      %s123 = sphi 0, %s123
      %s125 = sphi 0, %s123
      %s126 = sphi 0, %s125
      %s140 = sphi 0, %s126
      %s144 = sphi 0, %s144
      %s146 = sphi 0, %s144
      %s147 = sphi 0, %s146
      %s161 = sphi 0, %s147
      %s165 = sphi 0, %s165
      %s167 = sphi 0, %s165
      %s168 = sphi 0, %s167
      %s182 = sphi 0, %s168
      %s186 = sphi 0, %s186
      %s188 = sphi 0, %s186
      %s189 = sphi 0, %s188
      %s203 = sphi 0, %s189
      %s207 = sphi 0, %s207
      %s209 = sphi 0, %s207
      %s210 = sphi 0, %s209
      %s224 = sphi 0, %s210
      %s228 = sphi 0, %s228
      %s230 = sphi 0, %s228
      %s231 = sphi 0, %s230
      %s245 = sphi 0, %s231
      %s249 = sphi 0, %s249
      %s251 = sphi 0, %s249
      %s252 = sphi 0, %s251
      %s266 = sphi 0, %s252
      %s270 = sphi 0, %s270
      %s272 = sphi 0, %s270
      %s273 = sphi 0, %s272
      %s287 = sphi 0, %s273
      %s293 = sphi 0, %s295
      %s296 = sphi 0, %s293
      %s297 = sphi 0, %s296
      %s313 = sphi 0, %s297
      %s319 = sphi 0, %s321
      %s322 = sphi 0, %s319
      %s323 = sphi 0, %s322
      %s339 = sphi 0, %s323
    $region4: #{cnn_forward.1} parent=1 // loop_header_branch
      %29 = sbr.rel (%p27) target = $region8
    $region5: #{cnn_forward.1} parent=1 // loop_body
      %s31 = ssub.s32 %s26, 1
      %s32 = ssub.s32 %s26, 2
      %s33 = sadd.s32 %s26, 1
      %s34 = ssub.s32 %s26, %s33
      %p35 = scmp.eq.s32.totalorder %s34, 0
      %s37 = sadd.s32 %s36, 1
      %s38 = scalar_select %p35, %s36, %s37
      %p41 = pneg %p35
      %p42 = scmp.eq.s32.totalorder %s26, 1
      %p43 = por %p41, %p42
      %p44 = scmp.ne.s32.totalorder %s36, %s39
      %p45 = scmp.eq.s32.totalorder %s26, 0
      %p46 = por %p44, %p45
      %p47 = scmp.ne.s32.totalorder %s36, %s39
      %p48 = scmp.eq.s32.totalorder %s31, 1
      %p49 = por %p47, %p48
      %p50 = scmp.ne.s32.totalorder %s39, %s40
      %p51 = scmp.eq.s32.totalorder %s31, 0
      %p52 = por %p50, %p51
      %p53 = scmp.ne.s32.totalorder %s39, %s40
      %p54 = scmp.eq.s32.totalorder %s32, 1
      %p55 = por %p53, %p54
      %p57 = scmp.ne.s32.totalorder %s40, %s56
      %p58 = scmp.eq.s32.totalorder %s32, 0
      %p59 = por %p57, %p58
      %s61 = sadd.s32 %s60, 1
      %p64 = scmp.eq.s32.totalorder %s26, 1
      %p65 = scmp.ne.s32.totalorder %s60, %s62
      %p66 = scmp.eq.s32.totalorder %s26, 0
      %p67 = por %p65, %p66
      %p68 = scmp.ne.s32.totalorder %s60, %s62
      %p69 = scmp.eq.s32.totalorder %s31, 1
      %p70 = por %p68, %p69
      %p71 = scmp.ne.s32.totalorder %s62, %s63
      %p72 = scmp.eq.s32.totalorder %s31, 0
      %p73 = por %p71, %p72
      %p74 = scmp.ne.s32.totalorder %s62, %s63
      %p75 = scmp.eq.s32.totalorder %s32, 1
      %p76 = por %p74, %p75
      %p78 = scmp.ne.s32.totalorder %s63, %s77
      %p79 = scmp.eq.s32.totalorder %s32, 0
      %p80 = por %p78, %p79
      %s82 = sadd.s32 %s81, 1
      %p85 = scmp.eq.s32.totalorder %s26, 1
      %p86 = scmp.ne.s32.totalorder %s81, %s83
      %p87 = scmp.eq.s32.totalorder %s26, 0
      %p88 = por %p86, %p87
      %p89 = scmp.ne.s32.totalorder %s81, %s83
      %p90 = scmp.eq.s32.totalorder %s31, 1
      %p91 = por %p89, %p90
      %p92 = scmp.ne.s32.totalorder %s83, %s84
      %p93 = scmp.eq.s32.totalorder %s31, 0
      %p94 = por %p92, %p93
      %p95 = scmp.ne.s32.totalorder %s83, %s84
      %p96 = scmp.eq.s32.totalorder %s32, 1
      %p97 = por %p95, %p96
      %p99 = scmp.ne.s32.totalorder %s84, %s98
      %p100 = scmp.eq.s32.totalorder %s32, 0
      %p101 = por %p99, %p100
      %s103 = sadd.s32 %s102, 1
      %p106 = scmp.eq.s32.totalorder %s26, 1
      %p107 = scmp.ne.s32.totalorder %s102, %s104
      %p108 = scmp.eq.s32.totalorder %s26, 0
      %p109 = por %p107, %p108
      %p110 = scmp.ne.s32.totalorder %s102, %s104
      %p111 = scmp.eq.s32.totalorder %s31, 1
      %p112 = por %p110, %p111
      %p113 = scmp.ne.s32.totalorder %s104, %s105
      %p114 = scmp.eq.s32.totalorder %s31, 0
      %p115 = por %p113, %p114
      %p116 = scmp.ne.s32.totalorder %s104, %s105
      %p117 = scmp.eq.s32.totalorder %s32, 1
      %p118 = por %p116, %p117
      %p120 = scmp.ne.s32.totalorder %s105, %s119
      %p121 = scmp.eq.s32.totalorder %s32, 0
      %p122 = por %p120, %p121
      %s124 = sadd.s32 %s123, 1
      %p127 = scmp.eq.s32.totalorder %s26, 1
      %p128 = scmp.ne.s32.totalorder %s123, %s125
      %p129 = scmp.eq.s32.totalorder %s26, 0
      %p130 = por %p128, %p129
      %p131 = scmp.ne.s32.totalorder %s123, %s125
      %p132 = scmp.eq.s32.totalorder %s31, 1
      %p133 = por %p131, %p132
      %p134 = scmp.ne.s32.totalorder %s125, %s126
      %p135 = scmp.eq.s32.totalorder %s31, 0
      %p136 = por %p134, %p135
      %p137 = scmp.ne.s32.totalorder %s125, %s126
      %p138 = scmp.eq.s32.totalorder %s32, 1
      %p139 = por %p137, %p138
      %p141 = scmp.ne.s32.totalorder %s126, %s140
      %p142 = scmp.eq.s32.totalorder %s32, 0
      %p143 = por %p141, %p142
      %s145 = sadd.s32 %s144, 1
      %p148 = scmp.eq.s32.totalorder %s26, 1
      %p149 = scmp.ne.s32.totalorder %s144, %s146
      %p150 = scmp.eq.s32.totalorder %s26, 0
      %p151 = por %p149, %p150
      %p152 = scmp.ne.s32.totalorder %s144, %s146
      %p153 = scmp.eq.s32.totalorder %s31, 1
      %p154 = por %p152, %p153
      %p155 = scmp.ne.s32.totalorder %s146, %s147
      %p156 = scmp.eq.s32.totalorder %s31, 0
      %p157 = por %p155, %p156
      %p158 = scmp.ne.s32.totalorder %s146, %s147
      %p159 = scmp.eq.s32.totalorder %s32, 1
      %p160 = por %p158, %p159
      %p162 = scmp.ne.s32.totalorder %s147, %s161
      %p163 = scmp.eq.s32.totalorder %s32, 0
      %p164 = por %p162, %p163
      %s166 = sadd.s32 %s165, 1
      %p169 = scmp.eq.s32.totalorder %s26, 1
      %p170 = scmp.ne.s32.totalorder %s165, %s167
      %p171 = scmp.eq.s32.totalorder %s26, 0
      %p172 = por %p170, %p171
      %p173 = scmp.ne.s32.totalorder %s165, %s167
      %p174 = scmp.eq.s32.totalorder %s31, 1
      %p175 = por %p173, %p174
      %p176 = scmp.ne.s32.totalorder %s167, %s168
      %p177 = scmp.eq.s32.totalorder %s31, 0
      %p178 = por %p176, %p177
      %p179 = scmp.ne.s32.totalorder %s167, %s168
      %p180 = scmp.eq.s32.totalorder %s32, 1
      %p181 = por %p179, %p180
      %p183 = scmp.ne.s32.totalorder %s168, %s182
      %p184 = scmp.eq.s32.totalorder %s32, 0
      %p185 = por %p183, %p184
      %s187 = sadd.s32 %s186, 1
      %p190 = scmp.eq.s32.totalorder %s26, 1
      %p191 = scmp.ne.s32.totalorder %s186, %s188
      %p192 = scmp.eq.s32.totalorder %s26, 0
      %p193 = por %p191, %p192
      %p194 = scmp.ne.s32.totalorder %s186, %s188
      %p195 = scmp.eq.s32.totalorder %s31, 1
      %p196 = por %p194, %p195
      %p197 = scmp.ne.s32.totalorder %s188, %s189
      %p198 = scmp.eq.s32.totalorder %s31, 0
      %p199 = por %p197, %p198
      %p200 = scmp.ne.s32.totalorder %s188, %s189
      %p201 = scmp.eq.s32.totalorder %s32, 1
      %p202 = por %p200, %p201
      %p204 = scmp.ne.s32.totalorder %s189, %s203
      %p205 = scmp.eq.s32.totalorder %s32, 0
      %p206 = por %p204, %p205
      %s208 = sadd.s32 %s207, 1
      %p211 = scmp.eq.s32.totalorder %s26, 1
      %p212 = scmp.ne.s32.totalorder %s207, %s209
      %p213 = scmp.eq.s32.totalorder %s26, 0
      %p214 = por %p212, %p213
      %p215 = scmp.ne.s32.totalorder %s207, %s209
      %p216 = scmp.eq.s32.totalorder %s31, 1
      %p217 = por %p215, %p216
      %p218 = scmp.ne.s32.totalorder %s209, %s210
      %p219 = scmp.eq.s32.totalorder %s31, 0
      %p220 = por %p218, %p219
      %p221 = scmp.ne.s32.totalorder %s209, %s210
      %p222 = scmp.eq.s32.totalorder %s32, 1
      %p223 = por %p221, %p222
      %p225 = scmp.ne.s32.totalorder %s210, %s224
      %p226 = scmp.eq.s32.totalorder %s32, 0
      %p227 = por %p225, %p226
      %s229 = sadd.s32 %s228, 1
      %p232 = scmp.eq.s32.totalorder %s26, 1
      %p233 = scmp.ne.s32.totalorder %s228, %s230
      %p234 = scmp.eq.s32.totalorder %s26, 0
      %p235 = por %p233, %p234
      %p236 = scmp.ne.s32.totalorder %s228, %s230
      %p237 = scmp.eq.s32.totalorder %s31, 1
      %p238 = por %p236, %p237
      %p239 = scmp.ne.s32.totalorder %s230, %s231
      %p240 = scmp.eq.s32.totalorder %s31, 0
      %p241 = por %p239, %p240
      %p242 = scmp.ne.s32.totalorder %s230, %s231
      %p243 = scmp.eq.s32.totalorder %s32, 1
      %p244 = por %p242, %p243
      %p246 = scmp.ne.s32.totalorder %s231, %s245
      %p247 = scmp.eq.s32.totalorder %s32, 0
      %p248 = por %p246, %p247
      %s250 = sadd.s32 %s249, 1
      %p253 = scmp.eq.s32.totalorder %s26, 1
      %p254 = scmp.ne.s32.totalorder %s249, %s251
      %p255 = scmp.eq.s32.totalorder %s26, 0
      %p256 = por %p254, %p255
      %p257 = scmp.ne.s32.totalorder %s249, %s251
      %p258 = scmp.eq.s32.totalorder %s31, 1
      %p259 = por %p257, %p258
      %p260 = scmp.ne.s32.totalorder %s251, %s252
      %p261 = scmp.eq.s32.totalorder %s31, 0
      %p262 = por %p260, %p261
      %p263 = scmp.ne.s32.totalorder %s251, %s252
      %p264 = scmp.eq.s32.totalorder %s32, 1
      %p265 = por %p263, %p264
      %p267 = scmp.ne.s32.totalorder %s252, %s266
      %p268 = scmp.eq.s32.totalorder %s32, 0
      %p269 = por %p267, %p268
      %s271 = sadd.s32 %s270, 1
      %p274 = scmp.eq.s32.totalorder %s26, 1
      %p275 = scmp.ne.s32.totalorder %s270, %s272
      %p276 = scmp.eq.s32.totalorder %s26, 0
      %p277 = por %p275, %p276
      %p278 = scmp.ne.s32.totalorder %s270, %s272
      %p279 = scmp.eq.s32.totalorder %s31, 1
      %p280 = por %p278, %p279
      %p281 = scmp.ne.s32.totalorder %s272, %s273
      %p282 = scmp.eq.s32.totalorder %s31, 0
      %p283 = por %p281, %p282
      %p284 = scmp.ne.s32.totalorder %s272, %s273
      %p285 = scmp.eq.s32.totalorder %s32, 1
      %p286 = por %p284, %p285
      %p288 = scmp.ne.s32.totalorder %s273, %s287
      %p289 = scmp.eq.s32.totalorder %s32, 0
      %p290 = por %p288, %p289
      %s291 = ssub.s32 %s26, %s33
      %p292 = scmp.eq.s32.totalorder %s291, 0
      %s294 = sadd.s32 %s293, 1
      %s295 = scalar_select %p292, %s293, %s294
      %p298 = pneg %p292
      %p299 = scmp.eq.s32.totalorder %s26, 1
      %p300 = por %p298, %p299
      %p301 = scmp.ne.s32.totalorder %s293, %s296
      %p302 = scmp.eq.s32.totalorder %s26, 0
      %p303 = por %p301, %p302
      %p304 = scmp.ne.s32.totalorder %s293, %s296
      %p305 = scmp.eq.s32.totalorder %s31, 1
      %p306 = por %p304, %p305
      %p307 = scmp.ne.s32.totalorder %s296, %s297
      %p308 = scmp.eq.s32.totalorder %s31, 0
      %p309 = por %p307, %p308
      %p310 = scmp.ne.s32.totalorder %s296, %s297
      %p311 = scmp.eq.s32.totalorder %s32, 1
      %p312 = por %p310, %p311
      %p314 = scmp.ne.s32.totalorder %s297, %s313
      %p315 = scmp.eq.s32.totalorder %s32, 0
      %p316 = por %p314, %p315
      %s317 = ssub.s32 %s26, %s33
      %p318 = scmp.eq.s32.totalorder %s317, 0
      %s320 = sadd.s32 %s319, 1
      %s321 = scalar_select %p318, %s319, %s320
      %p324 = pneg %p318
      %p325 = scmp.eq.s32.totalorder %s26, 1
      %p326 = por %p324, %p325
      %p327 = scmp.ne.s32.totalorder %s319, %s322
      %p328 = scmp.eq.s32.totalorder %s26, 0
      %p329 = por %p327, %p328
      %p330 = scmp.ne.s32.totalorder %s319, %s322
      %p331 = scmp.eq.s32.totalorder %s31, 1
      %p332 = por %p330, %p331
      %p333 = scmp.ne.s32.totalorder %s322, %s323
      %p334 = scmp.eq.s32.totalorder %s31, 0
      %p335 = por %p333, %p334
      %p336 = scmp.ne.s32.totalorder %s322, %s323
      %p337 = scmp.eq.s32.totalorder %s32, 1
      %p338 = por %p336, %p337
      %p340 = scmp.ne.s32.totalorder %s323, %s339
      %p341 = scmp.eq.s32.totalorder %s32, 0
      %p342 = por %p340, %p341
      %p343 = scmp.le.s32.totalorder 1, %s26
      %p344 = scmp.lt.s32.totalorder %s26, 3
      %p345 = pnand %p343, %p344
      %p346 = pneg %p345
      // Predicated region
      $region9: #{cnn_forward.1} parent=5 // pred_check
        _
      $region10: #{cnn_forward.1} parent=5 // pred_check_branch
        %348 = sbr.rel (%p345) target = $region12
      $region11: #{cnn_forward.1} parent=5 // pred_region
        %s349 = ssub.s32 %s26, 1
        // Predicated region
        $region13: #{cnn_forward.1} parent=11 // pred_check
          %p350 = pneg %p73
        $region14: #{cnn_forward.1} parent=11 // pred_check_branch
          %352 = sbr.rel (%p350) target = $region16
        $region15: #{cnn_forward.1} parent=11 // pred_region
          _
        $region16: #{cnn_forward.1} parent=11 // pred_fallthru
          _
        // Predicated region
        $region17: #{cnn_forward.1} parent=11 // pred_check
          %p353 = pneg %p94
        $region18: #{cnn_forward.1} parent=11 // pred_check_branch
          %355 = sbr.rel (%p353) target = $region20
        $region19: #{cnn_forward.1} parent=11 // pred_region
          _
        $region20: #{cnn_forward.1} parent=11 // pred_fallthru
          _
        // Predicated region
        $region21: #{cnn_forward.1} parent=11 // pred_check
          %p356 = pneg %p115
        $region22: #{cnn_forward.1} parent=11 // pred_check_branch
          %358 = sbr.rel (%p356) target = $region24
        $region23: #{cnn_forward.1} parent=11 // pred_region
          _
        $region24: #{cnn_forward.1} parent=11 // pred_fallthru
          _
        // Predicated region
        $region25: #{cnn_forward.1} parent=11 // pred_check
          %p359 = pneg %p136
        $region26: #{cnn_forward.1} parent=11 // pred_check_branch
          %361 = sbr.rel (%p359) target = $region28
        $region27: #{cnn_forward.1} parent=11 // pred_region
          _
        $region28: #{cnn_forward.1} parent=11 // pred_fallthru
          _
        // Predicated region
        $region29: #{cnn_forward.1} parent=11 // pred_check
          %p362 = pneg %p157
        $region30: #{cnn_forward.1} parent=11 // pred_check_branch
          %364 = sbr.rel (%p362) target = $region32
        $region31: #{cnn_forward.1} parent=11 // pred_region
          _
        $region32: #{cnn_forward.1} parent=11 // pred_fallthru
          _
        // Predicated region
        $region33: #{cnn_forward.1} parent=11 // pred_check
          %p365 = pneg %p178
        $region34: #{cnn_forward.1} parent=11 // pred_check_branch
          %367 = sbr.rel (%p365) target = $region36
        $region35: #{cnn_forward.1} parent=11 // pred_region
          _
        $region36: #{cnn_forward.1} parent=11 // pred_fallthru
          _
        // Predicated region
        $region37: #{cnn_forward.1} parent=11 // pred_check
          %p368 = pneg %p199
        $region38: #{cnn_forward.1} parent=11 // pred_check_branch
          %370 = sbr.rel (%p368) target = $region40
        $region39: #{cnn_forward.1} parent=11 // pred_region
          _
        $region40: #{cnn_forward.1} parent=11 // pred_fallthru
          _
        // Predicated region
        $region41: #{cnn_forward.1} parent=11 // pred_check
          %p371 = pneg %p220
        $region42: #{cnn_forward.1} parent=11 // pred_check_branch
          %373 = sbr.rel (%p371) target = $region44
        $region43: #{cnn_forward.1} parent=11 // pred_region
          _
        $region44: #{cnn_forward.1} parent=11 // pred_fallthru
          _
        // Predicated region
        $region45: #{cnn_forward.1} parent=11 // pred_check
          %p374 = pneg %p241
        $region46: #{cnn_forward.1} parent=11 // pred_check_branch
          %376 = sbr.rel (%p374) target = $region48
        $region47: #{cnn_forward.1} parent=11 // pred_region
          _
        $region48: #{cnn_forward.1} parent=11 // pred_fallthru
          _
        // Predicated region
        $region49: #{cnn_forward.1} parent=11 // pred_check
          %p377 = pneg %p262
        $region50: #{cnn_forward.1} parent=11 // pred_check_branch
          %379 = sbr.rel (%p377) target = $region52
        $region51: #{cnn_forward.1} parent=11 // pred_region
          _
        $region52: #{cnn_forward.1} parent=11 // pred_fallthru
          _
        // Predicated region
        $region53: #{cnn_forward.1} parent=11 // pred_check
          %p380 = pneg %p283
        $region54: #{cnn_forward.1} parent=11 // pred_check_branch
          %382 = sbr.rel (%p380) target = $region56
        $region55: #{cnn_forward.1} parent=11 // pred_region
          _
        $region56: #{cnn_forward.1} parent=11 // pred_fallthru
          _
      $region12: #{cnn_forward.1} parent=5 // pred_fallthru
        _
      %p383 = scmp.lt.s32.totalorder %s26, 2
      // Predicated region
      $region57: #{cnn_forward.1} parent=5 // pred_check
        %p384 = pneg %p383
      $region58: #{cnn_forward.1} parent=5 // pred_check_branch
        %386 = sbr.rel (%p384) target = $region60
      $region59: #{cnn_forward.1} parent=5 // pred_region
        // Predicated region
        $region61: #{cnn_forward.1} parent=59 // pred_check
          %p387 = pneg %p46
        $region62: #{cnn_forward.1} parent=59 // pred_check_branch
          %389 = sbr.rel (%p387) target = $region64
        $region63: #{cnn_forward.1} parent=59 // pred_region
          %p390 = scmp.lt.s32.totalorder %s26, 1
          %s391 = scalar_select %p390, %s26, 1
          %s392 = smul.addr %s391, 22
          %s393 = smul.addr %s392, 8
          %s394 = scalar_lea.vmem %s0, %s393
        $region64: #{cnn_forward.1} parent=59 // pred_fallthru
          _
      $region60: #{cnn_forward.1} parent=5 // pred_fallthru
        _
      %p395 = scmp.le.s32.totalorder 1, %s26
      %p396 = scmp.lt.s32.totalorder %s26, 3
      %p397 = pnand %p395, %p396
      %p398 = pneg %p397
      // Predicated region
      $region65: #{cnn_forward.1} parent=5 // pred_check
        _
      $region66: #{cnn_forward.1} parent=5 // pred_check_branch
        %400 = sbr.rel (%p397) target = $region68
      $region67: #{cnn_forward.1} parent=5 // pred_region
        %s401 = ssub.s32 %s26, 1
        %p402 = scmp.lt.s32.totalorder %s31, 1
        %s403 = scalar_select %p402, %s31, 1
        %s404 = smul.addr %s403, 22
        %s405 = smul.addr %s404, 8
        %s406 = scalar_lea.vmem %s0, %s405
        %p407 = pneg %p52
        %p408 = pneg %p49
        %p409 = pneg %p73
        %p410 = pneg %p70
        %p411 = pneg %p94
        %p412 = pneg %p91
        %p413 = pneg %p115
        %p414 = pneg %p112
        %p415 = pneg %p136
        %p416 = pneg %p133
        %p417 = pneg %p157
        %p418 = pneg %p154
        %p419 = pneg %p178
        %p420 = pneg %p175
        %p421 = pneg %p199
        %p422 = pneg %p196
        %p423 = pneg %p220
        %p424 = pneg %p217
        %p425 = pneg %p241
        %p426 = pneg %p238
        %p427 = pneg %p262
        %p428 = pneg %p259
        %p429 = pneg %p283
        %p430 = pneg %p280
        %p431 = pneg %p309
        %p432 = pneg %p306
        %s433 = sand.u32 %s296, 1
        %s434 = scalar_lea.sflag [#allocation3], %s433
        %s435 = sand.u32 %s296, 1
        %s436 = scalar_lea.vmem [#allocation2], %s435
        %p437 = pneg %p335
        %p438 = pneg %p332
        %s439 = sand.u32 %s322, 1
        %s440 = scalar_lea.sflag [#allocation5], %s439
        %s441 = sand.u32 %s322, 1
        %s442 = scalar_lea.vmem [#allocation4], %s441
        %p443 = scmp.lt.s32.totalorder %s31, 1
        %s444 = scalar_select %p443, %s31, 1
        %s445 = smul.addr %s444, 22
        %s446 = smul.addr %s445, 8
        %s447 = scalar_lea.vmem %s0, %s446
        %v449 = vld [vmem:[%s447] sm:$0xff]
        %v450 = vld [vmem:[%s447 + $0x8] sm:$0xff]
        %v451 = vld [vmem:[%s447 + $0x10] sm:$0xff]
        %v452 = vld [vmem:[%s447 + $0x18] sm:$0xff]
        %v453 = vld [vmem:[%s447 + $0x20] sm:$0xff]
        %v454 = vld [vmem:[%s447 + $0x28] sm:$0xff]
        %v455 = vld [vmem:[%s447 + $0x30] sm:$0xff]
        %v456 = vld [vmem:[%s447 + $0x38] sm:$0xff]
        %v457 = vld [vmem:[%s447 + $0x40] sm:$0xff]
        %v458 = vld [vmem:[%s447 + $0x48] sm:$0xff]
        %v459 = vld [vmem:[%s447 + $0x50] sm:$0xff]
        %v460 = vld [vmem:[%s447 + $0x58] sm:$0xff]
        %v461 = vld [vmem:[%s447 + $0x60] sm:$0xff]
        %v462 = vld [vmem:[%s447 + $0x68] sm:$0xff]
        %v463 = vld [vmem:[%s447 + $0x70] sm:$0xff]
        %v464 = vld [vmem:[%s447 + $0x78] sm:$0xff]
        %v465 = vld [vmem:[%s447 + $0x80] sm:$0xff]
        %v466 = vld [vmem:[%s447 + $0x88] sm:$0xff]
        %v467 = vld [vmem:[%s447 + $0x90] sm:$0xff]
        %v468 = vld [vmem:[%s447 + $0x98] sm:$0xff]
        %v469 = vld [vmem:[%s447 + $0xa0] sm:$0xff]
        %v470 = vld [vmem:[%s447 + $0xa8] sm:$0xff]
        %v471 = vld [vmem:[%s1] sm:$0xff]
        %v472 = vld [vmem:[%s1 + $0x8] sm:$0x1]
        %v473 = vld [vmem:[%s2] sm:$0x1]
        %v474 = vlaneseq
        %v475 = vshrl.u32 %v474, 7
        %v476 = vsub.s32 0, %v475
        %v477 = vrot.slane %v473, %v476
        %vm478 = vcmask 72704
        %v480 = vsel %vm478, %v449, 0
        %v483 = vsel %vm478, %v450, 0
        %v486 = vsel %vm478, %v451, 0
        %v489 = vsel %vm478, %v452, 0
        %v492 = vsel %vm478, %v453, 0
        %v495 = vsel %vm478, %v454, 0
        %v498 = vsel %vm478, %v455, 0
        %v501 = vsel %vm478, %v456, 0
        %v504 = vsel %vm478, %v457, 0
        %v507 = vsel %vm478, %v458, 0
        %v510 = vsel %vm478, %v459, 0
        %v513 = vsel %vm478, %v460, 0
        %v516 = vsel %vm478, %v461, 0
        %v519 = vsel %vm478, %v462, 0
        %v522 = vsel %vm478, %v463, 0
        %v525 = vsel %vm478, %v464, 0
        %v528 = vsel %vm478, %v465, 0
        %v531 = vsel %vm478, %v466, 0
        %v534 = vsel %vm478, %v467, 0
        %v537 = vsel %vm478, %v468, 0
        %v540 = vsel %vm478, %v469, 0
        %v543 = vsel %vm478, %v470, 0
        %vm545 = vcmask 1040384
        %v547 = vsel %vm545, %v472, 0
        %549 = vmatprep.subr.mxu0 0.0
        %550 = vmatpush1.msra.mxu0 %v471
        %551 = vmatprep.subr.mxu0 0.0
        %552 = vmatpush1.msra.mxu0 %v547
        %553 = vmatprep.subr.mxu0 0.0
        %554 = vmatpush1.msra.mxu0 0.0
        %555 = vmatprep.subr.mxu0 0.0
        %556 = vmatpush1.msra.mxu0 0.0
        %557 = vmatprep.subr.mxu0 0.0
        %558 = vmatpush1.msra.mxu0 0.0
        %559 = vmatprep.subr.mxu0 0.0
        %560 = vmatpush1.msra.mxu0 0.0
        %561 = vmatprep.subr.mxu0 0.0
        %562 = vmatpush1.msra.mxu0 0.0
        %563 = vmatprep.subr.mxu0 0.0
        %564 = vmatpush1.msra.mxu0 0.0
        %565 = vmatprep.subr.mxu0 0.0
        %566 = vmatpush1.msra.mxu0 0.0
        %567 = vmatprep.subr.mxu0 0.0
        %568 = vmatpush1.msra.mxu0 0.0
        %569 = vmatprep.subr.mxu0 0.0
        %570 = vmatpush1.msra.mxu0 0.0
        %571 = vmatprep.subr.mxu0 0.0
        %572 = vmatpush1.msra.mxu0 0.0
        %573 = vmatprep.subr.mxu0 0.0
        %574 = vmatpush1.msra.mxu0 0.0
        %575 = vmatprep.subr.mxu0 0.0
        %576 = vmatpush1.msra.mxu0 0.0
        %577 = vmatprep.subr.mxu0 0.0
        %578 = vmatpush1.msra.mxu0 0.0
        %579 = vmatprep.subr.mxu0 0.0
        %580 = vmatpush1.msra.mxu0 0.0
        %581 = vmatprep.subr.mxu0 0.0
        %582 = vmatpush1.msra.mxu0 0.0
        %583 = vmatprep.subr.mxu0 0.0
        %584 = vmatpush1.msra.mxu0 0.0
        %585 = vmatprep.subr.mxu0 0.0
        %586 = vmatpush1.msra.mxu0 0.0
        %587 = vmatprep.subr.mxu0 0.0
        %588 = vmatpush1.msra.mxu0 0.0
        %589 = vmatprep.subr.mxu0 0.0
        %590 = vmatpush1.msra.mxu0 0.0
        %591 = vmatprep.subr.mxu0 0.0
        %592 = vmatpush1.msra.mxu0 0.0
        %593 = vmatprep.subr.mxu0 0.0
        %594 = vmatpush1.msra.mxu0 0.0
        %595 = vmatprep.subr.mxu0 0.0
        %596 = vmatpush1.msra.mxu0 0.0
        %597 = vmatprep.subr.mxu0 0.0
        %598 = vmatpush1.msra.mxu0 0.0
        %599 = vmatprep.subr.mxu0 0.0
        %600 = vmatpush1.msra.mxu0 0.0
        %601 = vmatprep.subr.mxu0 0.0
        %602 = vmatpush1.msra.mxu0 0.0
        %603 = vmatprep.subr.mxu0 0.0
        %604 = vmatpush1.msra.mxu0 0.0
        %605 = vmatprep.subr.mxu0 0.0
        %606 = vmatpush1.msra.mxu0 0.0
        %607 = vmatprep.subr.mxu0 0.0
        %608 = vmatpush1.msra.mxu0 0.0
        %609 = vmatprep.subr.mxu0 0.0
        %610 = vmatpush1.msra.mxu0 0.0
        %611 = vmatprep.subr.mxu0 0.0
        %612 = vmatpush1.msra.mxu0 0.0
        %613 = vmatprep.mubr.f32.mxu0 0.0
        %614 = vmatmul.mubr.f32.gmra.mrb[0].mxu0 %v480
        %v615 = vpop.f32.mrb[0].mxu0
        %v616 = vadd.f32 %v477, %v615
        %v617 = vpop.f32.mrb[0].mxu0
        %618 = vmatprep.mubr.f32.mxu0 0.0
        %619 = vmatmul.mubr.f32.gmra.mrb[0].mxu0 %v483
        %v620 = vpop.f32.mrb[0].mxu0
        %v621 = vadd.f32 %v477, %v620
        %v622 = vpop.f32.mrb[0].mxu0
        %623 = vmatprep.mubr.f32.mxu0 0.0
        %624 = vmatmul.mubr.f32.gmra.mrb[0].mxu0 %v486
        %v625 = vpop.f32.mrb[0].mxu0
        %v626 = vadd.f32 %v477, %v625
        %v627 = vpop.f32.mrb[0].mxu0
        %628 = vmatprep.mubr.f32.mxu0 0.0
        %629 = vmatmul.mubr.f32.gmra.mrb[0].mxu0 %v489
        %v630 = vpop.f32.mrb[0].mxu0
        %v631 = vadd.f32 %v477, %v630
        %v632 = vpop.f32.mrb[0].mxu0
        %633 = vmatprep.mubr.f32.mxu0 0.0
        %634 = vmatmul.mubr.f32.gmra.mrb[0].mxu0 %v492
        %v635 = vpop.f32.mrb[0].mxu0
        %v636 = vadd.f32 %v477, %v635
        %v637 = vpop.f32.mrb[0].mxu0
        %638 = vmatprep.mubr.f32.mxu0 0.0
        %639 = vmatmul.mubr.f32.gmra.mrb[0].mxu0 %v495
        %v640 = vpop.f32.mrb[0].mxu0
        %v641 = vadd.f32 %v477, %v640
        %v642 = vpop.f32.mrb[0].mxu0
        %643 = vmatprep.mubr.f32.mxu0 0.0
        %644 = vmatmul.mubr.f32.gmra.mrb[0].mxu0 %v498
        %v645 = vpop.f32.mrb[0].mxu0
        %v646 = vadd.f32 %v477, %v645
        %v647 = vpop.f32.mrb[0].mxu0
        %648 = vmatprep.mubr.f32.mxu0 0.0
        %649 = vmatmul.mubr.f32.gmra.mrb[0].mxu0 %v501
        %v650 = vpop.f32.mrb[0].mxu0
        %v651 = vadd.f32 %v477, %v650
        %v652 = vpop.f32.mrb[0].mxu0
        %653 = vmatprep.mubr.f32.mxu0 0.0
        %654 = vmatmul.mubr.f32.gmra.mrb[0].mxu0 %v504
        %v655 = vpop.f32.mrb[0].mxu0
        %v656 = vadd.f32 %v477, %v655
        %v657 = vpop.f32.mrb[0].mxu0
        %658 = vmatprep.mubr.f32.mxu0 0.0
        %659 = vmatmul.mubr.f32.gmra.mrb[0].mxu0 %v507
        %v660 = vpop.f32.mrb[0].mxu0
        %v661 = vadd.f32 %v477, %v660
        %v662 = vpop.f32.mrb[0].mxu0
        %663 = vmatprep.mubr.f32.mxu0 0.0
        %664 = vmatmul.mubr.f32.gmra.mrb[0].mxu0 %v510
        %v665 = vpop.f32.mrb[0].mxu0
        %v666 = vadd.f32 %v477, %v665
        %v667 = vpop.f32.mrb[0].mxu0
        %668 = vmatprep.mubr.f32.mxu0 0.0
        %669 = vmatmul.mubr.f32.gmra.mrb[0].mxu0 %v513
        %v670 = vpop.f32.mrb[0].mxu0
        %v671 = vadd.f32 %v477, %v670
        %v672 = vpop.f32.mrb[0].mxu0
        %673 = vmatprep.mubr.f32.mxu0 0.0
        %674 = vmatmul.mubr.f32.gmra.mrb[0].mxu0 %v516
        %v675 = vpop.f32.mrb[0].mxu0
        %v676 = vadd.f32 %v477, %v675
        %v677 = vpop.f32.mrb[0].mxu0
        %678 = vmatprep.mubr.f32.mxu0 0.0
        %679 = vmatmul.mubr.f32.gmra.mrb[0].mxu0 %v519
        %v680 = vpop.f32.mrb[0].mxu0
        %v681 = vadd.f32 %v477, %v680
        %v682 = vpop.f32.mrb[0].mxu0
        %683 = vmatprep.mubr.f32.mxu0 0.0
        %684 = vmatmul.mubr.f32.gmra.mrb[0].mxu0 %v522
        %v685 = vpop.f32.mrb[0].mxu0
        %v686 = vadd.f32 %v477, %v685
        %v687 = vpop.f32.mrb[0].mxu0
        %688 = vmatprep.mubr.f32.mxu0 0.0
        %689 = vmatmul.mubr.f32.gmra.mrb[0].mxu0 %v525
        %v690 = vpop.f32.mrb[0].mxu0
        %v691 = vadd.f32 %v477, %v690
        %v692 = vpop.f32.mrb[0].mxu0
        %693 = vmatprep.mubr.f32.mxu0 0.0
        %694 = vmatmul.mubr.f32.gmra.mrb[0].mxu0 %v528
        %v695 = vpop.f32.mrb[0].mxu0
        %v696 = vadd.f32 %v477, %v695
        %v697 = vpop.f32.mrb[0].mxu0
        %698 = vmatprep.mubr.f32.mxu0 0.0
        %699 = vmatmul.mubr.f32.gmra.mrb[0].mxu0 %v531
        %v700 = vpop.f32.mrb[0].mxu0
        %v701 = vadd.f32 %v477, %v700
        %v702 = vpop.f32.mrb[0].mxu0
        %703 = vmatprep.mubr.f32.mxu0 0.0
        %704 = vmatmul.mubr.f32.gmra.mrb[0].mxu0 %v534
        %v705 = vpop.f32.mrb[0].mxu0
        %v706 = vadd.f32 %v477, %v705
        %v707 = vpop.f32.mrb[0].mxu0
        %708 = vmatprep.mubr.f32.mxu0 0.0
        %709 = vmatmul.mubr.f32.gmra.mrb[0].mxu0 %v537
        %v710 = vpop.f32.mrb[0].mxu0
        %v711 = vadd.f32 %v477, %v710
        %v712 = vpop.f32.mrb[0].mxu0
        %713 = vmatprep.mubr.f32.mxu0 0.0
        %714 = vmatmul.mubr.f32.gmra.mrb[0].mxu0 %v540
        %v715 = vpop.f32.mrb[0].mxu0
        %v716 = vadd.f32 %v477, %v715
        %v717 = vpop.f32.mrb[0].mxu0
        %718 = vmatprep.mubr.f32.mxu0 0.0
        %719 = vmatmul.mubr.f32.gmra.mrb[0].mxu0 %v543
        %v720 = vpop.f32.mrb[0].mxu0
        %v721 = vadd.f32 %v477, %v720
        %v722 = vpop.f32.mrb[0].mxu0
        %723 = vdwg.mxu0
        %724 = vmax.xlane.f32.xlu0 %v616
        %v725 = vpop.xlane.xlu0 %724
        %726 = vmax.xlane.f32.xlu0 %v621
        %v727 = vpop.xlane.xlu0 %726
        %728 = vmax.xlane.f32.xlu0 %v626
        %v729 = vpop.xlane.xlu0 %728
        %730 = vmax.xlane.f32.xlu0 %v631
        %v731 = vpop.xlane.xlu0 %730
        %732 = vmax.xlane.f32.xlu0 %v636
        %v733 = vpop.xlane.xlu0 %732
        %734 = vmax.xlane.f32.xlu0 %v641
        %v735 = vpop.xlane.xlu0 %734
        %736 = vmax.xlane.f32.xlu0 %v646
        %v737 = vpop.xlane.xlu0 %736
        %738 = vmax.xlane.f32.xlu0 %v651
        %v739 = vpop.xlane.xlu0 %738
        %740 = vmax.xlane.f32.xlu0 %v656
        %v741 = vpop.xlane.xlu0 %740
        %742 = vmax.xlane.f32.xlu0 %v661
        %v743 = vpop.xlane.xlu0 %742
        %744 = vmax.xlane.f32.xlu0 %v666
        %v745 = vpop.xlane.xlu0 %744
        %746 = vmax.xlane.f32.xlu0 %v671
        %v747 = vpop.xlane.xlu0 %746
        %748 = vmax.xlane.f32.xlu0 %v676
        %v749 = vpop.xlane.xlu0 %748
        %750 = vmax.xlane.f32.xlu0 %v681
        %v751 = vpop.xlane.xlu0 %750
        %752 = vmax.xlane.f32.xlu0 %v686
        %v753 = vpop.xlane.xlu0 %752
        %754 = vmax.xlane.f32.xlu0 %v691
        %v755 = vpop.xlane.xlu0 %754
        %756 = vmax.xlane.f32.xlu0 %v696
        %v757 = vpop.xlane.xlu0 %756
        %758 = vmax.xlane.f32.xlu0 %v701
        %v759 = vpop.xlane.xlu0 %758
        %760 = vmax.xlane.f32.xlu0 %v706
        %v761 = vpop.xlane.xlu0 %760
        %762 = vmax.xlane.f32.xlu0 %v711
        %v763 = vpop.xlane.xlu0 %762
        %764 = vmax.xlane.f32.xlu0 %v716
        %v765 = vpop.xlane.xlu0 %764
        %766 = vmax.xlane.f32.xlu0 %v721
        %v767 = vpop.xlane.xlu0 %766
        %v768 = vsub.f32 %v616, %v725
        %v769 = vsub.f32 %v621, %v727
        %v770 = vsub.f32 %v626, %v729
        %v771 = vsub.f32 %v631, %v731
        %v772 = vsub.f32 %v636, %v733
        %v773 = vsub.f32 %v641, %v735
        %v774 = vsub.f32 %v646, %v737
        %v775 = vsub.f32 %v651, %v739
        %v776 = vsub.f32 %v656, %v741
        %v777 = vsub.f32 %v661, %v743
        %v778 = vsub.f32 %v666, %v745
        %v779 = vsub.f32 %v671, %v747
        %v780 = vsub.f32 %v676, %v749
        %v781 = vsub.f32 %v681, %v751
        %v782 = vsub.f32 %v686, %v753
        %v783 = vsub.f32 %v691, %v755
        %v784 = vsub.f32 %v696, %v757
        %v785 = vsub.f32 %v701, %v759
        %v786 = vsub.f32 %v706, %v761
        %v787 = vsub.f32 %v711, %v763
        %v788 = vsub.f32 %v716, %v765
        %v789 = vsub.f32 %v721, %v767
        %v790 = vmul.f32 %v768, 1.442695
        %v791 = vpow.pop %v790
        %v792 = vmul.f32 %v769, 1.442695
        %v793 = vpow.pop %v792
        %v794 = vmul.f32 %v770, 1.442695
        %v795 = vpow.pop %v794
        %v796 = vmul.f32 %v771, 1.442695
        %v797 = vpow.pop %v796
        %v798 = vmul.f32 %v772, 1.442695
        %v799 = vpow.pop %v798
        %v800 = vmul.f32 %v773, 1.442695
        %v801 = vpow.pop %v800
        %v802 = vmul.f32 %v774, 1.442695
        %v803 = vpow.pop %v802
        %v804 = vmul.f32 %v775, 1.442695
        %v805 = vpow.pop %v804
        %v806 = vmul.f32 %v776, 1.442695
        %v807 = vpow.pop %v806
        %v808 = vmul.f32 %v777, 1.442695
        %v809 = vpow.pop %v808
        %v810 = vmul.f32 %v778, 1.442695
        %v811 = vpow.pop %v810
        %v812 = vmul.f32 %v779, 1.442695
        %v813 = vpow.pop %v812
        %v814 = vmul.f32 %v780, 1.442695
        %v815 = vpow.pop %v814
        %v816 = vmul.f32 %v781, 1.442695
        %v817 = vpow.pop %v816
        %v818 = vmul.f32 %v782, 1.442695
        %v819 = vpow.pop %v818
        %v820 = vmul.f32 %v783, 1.442695
        %v821 = vpow.pop %v820
        %v822 = vmul.f32 %v784, 1.442695
        %v823 = vpow.pop %v822
        %v824 = vmul.f32 %v785, 1.442695
        %v825 = vpow.pop %v824
        %v826 = vmul.f32 %v786, 1.442695
        %v827 = vpow.pop %v826
        %v828 = vmul.f32 %v787, 1.442695
        %v829 = vpow.pop %v828
        %v830 = vmul.f32 %v788, 1.442695
        %v831 = vpow.pop %v830
        %v832 = vmul.f32 %v789, 1.442695
        %v833 = vpow.pop %v832
        %834 = vadd.xlane.f32.xlu0 %v791
        %v835 = vpop.xlane.xlu0 %834
        %836 = vadd.xlane.f32.xlu0 %v793
        %v837 = vpop.xlane.xlu0 %836
        %838 = vadd.xlane.f32.xlu0 %v795
        %v839 = vpop.xlane.xlu0 %838
        %840 = vadd.xlane.f32.xlu0 %v797
        %v841 = vpop.xlane.xlu0 %840
        %842 = vadd.xlane.f32.xlu0 %v799
        %v843 = vpop.xlane.xlu0 %842
        %844 = vadd.xlane.f32.xlu0 %v801
        %v845 = vpop.xlane.xlu0 %844
        %846 = vadd.xlane.f32.xlu0 %v803
        %v847 = vpop.xlane.xlu0 %846
        %848 = vadd.xlane.f32.xlu0 %v805
        %v849 = vpop.xlane.xlu0 %848
        %850 = vadd.xlane.f32.xlu0 %v807
        %v851 = vpop.xlane.xlu0 %850
        %852 = vadd.xlane.f32.xlu0 %v809
        %v853 = vpop.xlane.xlu0 %852
        %854 = vadd.xlane.f32.xlu0 %v811
        %v855 = vpop.xlane.xlu0 %854
        %856 = vadd.xlane.f32.xlu0 %v813
        %v857 = vpop.xlane.xlu0 %856
        %858 = vadd.xlane.f32.xlu0 %v815
        %v859 = vpop.xlane.xlu0 %858
        %860 = vadd.xlane.f32.xlu0 %v817
        %v861 = vpop.xlane.xlu0 %860
        %862 = vadd.xlane.f32.xlu0 %v819
        %v863 = vpop.xlane.xlu0 %862
        %864 = vadd.xlane.f32.xlu0 %v821
        %v865 = vpop.xlane.xlu0 %864
        %866 = vadd.xlane.f32.xlu0 %v823
        %v867 = vpop.xlane.xlu0 %866
        %868 = vadd.xlane.f32.xlu0 %v825
        %v869 = vpop.xlane.xlu0 %868
        %870 = vadd.xlane.f32.xlu0 %v827
        %v871 = vpop.xlane.xlu0 %870
        %872 = vadd.xlane.f32.xlu0 %v829
        %v873 = vpop.xlane.xlu0 %872
        %874 = vadd.xlane.f32.xlu0 %v831
        %v875 = vpop.xlane.xlu0 %874
        %876 = vadd.xlane.f32.xlu0 %v833
        %v877 = vpop.xlane.xlu0 %876
        %v878 = vrcp.pop %v835
        %v879 = vmul.f32 %v791, %v878
        %v880 = vrcp.pop %v837
        %v881 = vmul.f32 %v793, %v880
        %v882 = vrcp.pop %v839
        %v883 = vmul.f32 %v795, %v882
        %v884 = vrcp.pop %v841
        %v885 = vmul.f32 %v797, %v884
        %v886 = vrcp.pop %v843
        %v887 = vmul.f32 %v799, %v886
        %v888 = vrcp.pop %v845
        %v889 = vmul.f32 %v801, %v888
        %v890 = vrcp.pop %v847
        %v891 = vmul.f32 %v803, %v890
        %v892 = vrcp.pop %v849
        %v893 = vmul.f32 %v805, %v892
        %v894 = vrcp.pop %v851
        %v895 = vmul.f32 %v807, %v894
        %v896 = vrcp.pop %v853
        %v897 = vmul.f32 %v809, %v896
        %v898 = vrcp.pop %v855
        %v899 = vmul.f32 %v811, %v898
        %v900 = vrcp.pop %v857
        %v901 = vmul.f32 %v813, %v900
        %v902 = vrcp.pop %v859
        %v903 = vmul.f32 %v815, %v902
        %v904 = vrcp.pop %v861
        %v905 = vmul.f32 %v817, %v904
        %v906 = vrcp.pop %v863
        %v907 = vmul.f32 %v819, %v906
        %v908 = vrcp.pop %v865
        %v909 = vmul.f32 %v821, %v908
        %v910 = vrcp.pop %v867
        %v911 = vmul.f32 %v823, %v910
        %v912 = vrcp.pop %v869
        %v913 = vmul.f32 %v825, %v912
        %v914 = vrcp.pop %v871
        %v915 = vmul.f32 %v827, %v914
        %v916 = vrcp.pop %v873
        %v917 = vmul.f32 %v829, %v916
        %v918 = vrcp.pop %v875
        %v919 = vmul.f32 %v831, %v918
        %v920 = vrcp.pop %v877
        %v921 = vmul.f32 %v833, %v920
        %v922 = vld [vmem:[%s2 + $0x1] sm:$0x1]
        %v923 = vlaneseq
        %v924 = vshrl.u32 %v923, 7
        %v925 = vsub.s32 0, %v924
        %v926 = vrot.slane %v922, %v925
        %v927 = vmul.f32 %v879, %v926
        %v928 = vmul.f32 %v881, %v926
        %v929 = vmul.f32 %v883, %v926
        %v930 = vmul.f32 %v885, %v926
        %v931 = vmul.f32 %v887, %v926
        %v932 = vmul.f32 %v889, %v926
        %v933 = vmul.f32 %v891, %v926
        %v934 = vmul.f32 %v893, %v926
        %v935 = vmul.f32 %v895, %v926
        %v936 = vmul.f32 %v897, %v926
        %v937 = vmul.f32 %v899, %v926
        %v938 = vmul.f32 %v901, %v926
        %v939 = vmul.f32 %v903, %v926
        %v940 = vmul.f32 %v905, %v926
        %v941 = vmul.f32 %v907, %v926
        %v942 = vmul.f32 %v909, %v926
        %v943 = vmul.f32 %v911, %v926
        %v944 = vmul.f32 %v913, %v926
        %v945 = vmul.f32 %v915, %v926
        %v946 = vmul.f32 %v917, %v926
        %v947 = vmul.f32 %v919, %v926
        %v948 = vmul.f32 %v921, %v926
        %v949 = vld [vmem:[%s2 + $0x2] sm:$0x1]
        %v950 = vlaneseq
        %v951 = vshrl.u32 %v950, 7
        %v952 = vsub.s32 0, %v951
        %v953 = vrot.slane %v949, %v952
        %v954 = vadd.f32 %v927, %v953
        %v955 = vadd.f32 %v928, %v953
        %v956 = vadd.f32 %v929, %v953
        %v957 = vadd.f32 %v930, %v953
        %v958 = vadd.f32 %v931, %v953
        %v959 = vadd.f32 %v932, %v953
        %v960 = vadd.f32 %v933, %v953
        %v961 = vadd.f32 %v934, %v953
        %v962 = vadd.f32 %v935, %v953
        %v963 = vadd.f32 %v936, %v953
        %v964 = vadd.f32 %v937, %v953
        %v965 = vadd.f32 %v938, %v953
        %v966 = vadd.f32 %v939, %v953
        %v967 = vadd.f32 %v940, %v953
        %v968 = vadd.f32 %v941, %v953
        %v969 = vadd.f32 %v942, %v953
        %v970 = vadd.f32 %v943, %v953
        %v971 = vadd.f32 %v944, %v953
        %v972 = vadd.f32 %v945, %v953
        %v973 = vadd.f32 %v946, %v953
        %v974 = vadd.f32 %v947, %v953
        %v975 = vadd.f32 %v948, %v953
        %v976 = vpack.c.bf16 %v955, %v954
        %v977 = vpack.c.bf16 %v957, %v956
        %v978 = vpack.c.bf16 %v959, %v958
        %v979 = vpack.c.bf16 %v961, %v960
        %v980 = vpack.c.bf16 %v963, %v962
        %v981 = vpack.c.bf16 %v965, %v964
        %v982 = vpack.c.bf16 %v967, %v966
        %v983 = vpack.c.bf16 %v969, %v968
        %v984 = vpack.c.bf16 %v971, %v970
        %v985 = vpack.c.bf16 %v973, %v972
        %v986 = vpack.c.bf16 %v975, %v974
        %v987 = vld [vmem:[%s3] sm:$0xff]
        %v988 = vld [vmem:[%s3 + $0x8] sm:$0xff]
        %v989 = vld [vmem:[%s3 + $0x10] sm:$0xff]
        %v990 = vld [vmem:[%s3 + $0x18] sm:$0xff]
        %v991 = vld [vmem:[%s3 + $0x20] sm:$0xff]
        %v992 = vld [vmem:[%s3 + $0x28] sm:$0xff]
        %v993 = vld [vmem:[%s3 + $0x30] sm:$0xff]
        %v994 = vld [vmem:[%s3 + $0x38] sm:$0xff]
        %v995 = vld [vmem:[%s3 + $0x40] sm:$0xff]
        %v996 = vld [vmem:[%s3 + $0x48] sm:$0xff]
        %v997 = vld [vmem:[%s3 + $0x50] sm:$0xff]
        %v998 = vld [vmem:[%s3 + $0x58] sm:$0xff]
        %v999 = vld [vmem:[%s3 + $0x60] sm:$0xff]
        %v1000 = vld [vmem:[%s3 + $0x68] sm:$0xff]
        %v1001 = vld [vmem:[%s3 + $0x70] sm:$0xff]
        %v1002 = vld [vmem:[%s3 + $0x78] sm:$0xff]
        %v1003 = vld [vmem:[%s3 + $0x80] sm:$0xff]
        %v1004 = vld [vmem:[%s3 + $0x88] sm:$0xff]
        %v1005 = vld [vmem:[%s3 + $0x90] sm:$0xff]
        %v1006 = vld [vmem:[%s3 + $0x98] sm:$0xff]
        %v1007 = vld [vmem:[%s3 + $0xa0] sm:$0xff]
        %v1008 = vld [vmem:[%s3 + $0xa8] sm:$0xff]
        %v1009 = vld [vmem:[%s3 + $0xb0] sm:$0xff]
        %v1010 = vld [vmem:[%s3 + $0xb8] sm:$0xff]
        %v1011 = vld [vmem:[%s3 + $0xc0] sm:$0xff]
        %v1012 = vld [vmem:[%s3 + $0xc8] sm:$0xff]
        %v1013 = vld [vmem:[%s3 + $0xd0] sm:$0xff]
        %v1014 = vld [vmem:[%s3 + $0xd8] sm:$0xff]
        %v1015 = vld [vmem:[%s3 + $0xe0] sm:$0xff]
        %v1016 = vld [vmem:[%s3 + $0xe8] sm:$0xff]
        %v1017 = vld [vmem:[%s3 + $0xf0] sm:$0xff]
        %v1018 = vld [vmem:[%s3 + $0xf8] sm:$0xff]
        %v1019 = vld [vmem:[%s3 + $0x100] sm:$0xff]
        %v1020 = vld [vmem:[%s3 + $0x108] sm:$0xff]
        %v1021 = vld [vmem:[%s3 + $0x110] sm:$0xff]
        %v1022 = vld [vmem:[%s3 + $0x118] sm:$0xff]
        %v1023 = vld [vmem:[%s3 + $0x120] sm:$0xff]
        %v1024 = vld [vmem:[%s3 + $0x128] sm:$0xff]
        %v1025 = vld [vmem:[%s3 + $0x130] sm:$0xff]
        %v1026 = vld [vmem:[%s3 + $0x138] sm:$0xff]
        %v1027 = vld [vmem:[%s3 + $0x140] sm:$0xff]
        %v1028 = vld [vmem:[%s3 + $0x148] sm:$0xff]
        %v1029 = vld [vmem:[%s3 + $0x150] sm:$0xff]
        %v1030 = vld [vmem:[%s3 + $0x158] sm:$0xff]
        %v1031 = vld [vmem:[%s3 + $0x160] sm:$0xff]
        %v1077 = vunpack.c.l.b16 %v987
        %v1078 = vunpack.c.h.b16 %v987
        %v1079 = vunpack.c.l.b16 %v988
        %v1080 = vunpack.c.h.b16 %v988
        %v1081 = vunpack.c.l.b16 %v989
        %v1082 = vunpack.c.h.b16 %v989
        %v1083 = vunpack.c.l.b16 %v990
        %v1084 = vunpack.c.h.b16 %v990
        %v1085 = vunpack.c.l.b16 %v991
        %v1086 = vunpack.c.h.b16 %v991
        %v1087 = vunpack.c.l.b16 %v992
        %v1088 = vunpack.c.h.b16 %v992
        %v1089 = vunpack.c.l.b16 %v993
        %v1090 = vunpack.c.h.b16 %v993
        %v1091 = vunpack.c.l.b16 %v994
        %v1092 = vunpack.c.h.b16 %v994
        %v1093 = vunpack.c.l.b16 %v995
        %v1094 = vunpack.c.h.b16 %v995
        %v1095 = vunpack.c.l.b16 %v996
        %v1096 = vunpack.c.h.b16 %v996
        %v1097 = vunpack.c.l.b16 %v997
        %v1098 = vunpack.c.h.b16 %v997
        %v1099 = vunpack.c.l.b16 %v998
        %v1100 = vunpack.c.h.b16 %v998
        %v1101 = vunpack.c.l.b16 %v999
        %v1102 = vunpack.c.h.b16 %v999
        %v1103 = vunpack.c.l.b16 %v1000
        %v1104 = vunpack.c.h.b16 %v1000
        %v1105 = vunpack.c.l.b16 %v1001
        %v1106 = vunpack.c.h.b16 %v1001
        %v1107 = vunpack.c.l.b16 %v1002
        %v1108 = vunpack.c.h.b16 %v1002
        %v1109 = vunpack.c.l.b16 %v1003
        %v1110 = vunpack.c.h.b16 %v1003
        %v1111 = vunpack.c.l.b16 %v1004
        %v1112 = vunpack.c.h.b16 %v1004
        %v1113 = vunpack.c.l.b16 %v1005
        %v1114 = vunpack.c.h.b16 %v1005
        %v1115 = vunpack.c.l.b16 %v1006
        %v1116 = vunpack.c.h.b16 %v1006
        %v1117 = vunpack.c.l.b16 %v1007
        %v1118 = vunpack.c.h.b16 %v1007
        %v1119 = vunpack.c.l.b16 %v1008
        %v1120 = vunpack.c.h.b16 %v1008
        %v1121 = vunpack.c.l.b16 %v1009
        %v1122 = vunpack.c.h.b16 %v1009
        %v1123 = vunpack.c.l.b16 %v1010
        %v1124 = vunpack.c.h.b16 %v1010
        %v1125 = vunpack.c.l.b16 %v1011
        %v1126 = vunpack.c.h.b16 %v1011
        %v1127 = vunpack.c.l.b16 %v1012
        %v1128 = vunpack.c.h.b16 %v1012
        %v1129 = vunpack.c.l.b16 %v1013
        %v1130 = vunpack.c.h.b16 %v1013
        %v1131 = vunpack.c.l.b16 %v1014
        %v1132 = vunpack.c.h.b16 %v1014
        %v1133 = vunpack.c.l.b16 %v1015
        %v1134 = vunpack.c.h.b16 %v1015
        %v1135 = vunpack.c.l.b16 %v1016
        %v1136 = vunpack.c.h.b16 %v1016
        %v1137 = vunpack.c.l.b16 %v1017
        %v1138 = vunpack.c.h.b16 %v1017
        %v1139 = vunpack.c.l.b16 %v1018
        %v1140 = vunpack.c.h.b16 %v1018
        %v1141 = vunpack.c.l.b16 %v1019
        %v1142 = vunpack.c.h.b16 %v1019
        %v1143 = vunpack.c.l.b16 %v1020
        %v1144 = vunpack.c.h.b16 %v1020
        %v1145 = vunpack.c.l.b16 %v1021
        %v1146 = vunpack.c.h.b16 %v1021
        %v1147 = vunpack.c.l.b16 %v1022
        %v1148 = vunpack.c.h.b16 %v1022
        %v1149 = vunpack.c.l.b16 %v1023
        %v1150 = vunpack.c.h.b16 %v1023
        %v1151 = vunpack.c.l.b16 %v1024
        %v1152 = vunpack.c.h.b16 %v1024
        %v1153 = vunpack.c.l.b16 %v1025
        %v1154 = vunpack.c.h.b16 %v1025
        %v1155 = vunpack.c.l.b16 %v1026
        %v1156 = vunpack.c.h.b16 %v1026
        %v1157 = vunpack.c.l.b16 %v1027
        %v1158 = vunpack.c.h.b16 %v1027
        %v1159 = vunpack.c.l.b16 %v1028
        %v1160 = vunpack.c.h.b16 %v1028
        %v1161 = vunpack.c.l.b16 %v1029
        %v1162 = vunpack.c.h.b16 %v1029
        %v1163 = vunpack.c.l.b16 %v1030
        %v1164 = vunpack.c.h.b16 %v1030
        %v1165 = vunpack.c.l.b16 %v1031
        %v1166 = vunpack.c.h.b16 %v1031
        %v1167 = vpack.c.b16 %v1079, %v1077
        %v1168 = vpack.c.b16 %v1080, %v1078
        %v1169 = vpack.c.b16 %v1083, %v1081
        %v1170 = vpack.c.b16 %v1084, %v1082
        %v1171 = vpack.c.b16 %v1087, %v1085
        %v1172 = vpack.c.b16 %v1088, %v1086
        %v1173 = vpack.c.b16 %v1091, %v1089
        %v1174 = vpack.c.b16 %v1092, %v1090
        %v1175 = vpack.c.b16 %v1095, %v1093
        %v1176 = vpack.c.b16 %v1096, %v1094
        %v1177 = vpack.c.b16 %v1099, %v1097
        %v1178 = vpack.c.b16 %v1100, %v1098
        %v1179 = vpack.c.b16 %v1103, %v1101
        %v1180 = vpack.c.b16 %v1104, %v1102
        %v1181 = vpack.c.b16 %v1107, %v1105
        %v1182 = vpack.c.b16 %v1108, %v1106
        %v1183 = vpack.c.b16 %v1111, %v1109
        %v1184 = vpack.c.b16 %v1112, %v1110
        %v1185 = vpack.c.b16 %v1115, %v1113
        %v1186 = vpack.c.b16 %v1116, %v1114
        %v1187 = vpack.c.b16 %v1119, %v1117
        %v1188 = vpack.c.b16 %v1120, %v1118
        %v1189 = vpack.c.b16 %v1123, %v1121
        %v1190 = vpack.c.b16 %v1124, %v1122
        %v1191 = vpack.c.b16 %v1127, %v1125
        %v1192 = vpack.c.b16 %v1128, %v1126
        %v1193 = vpack.c.b16 %v1131, %v1129
        %v1194 = vpack.c.b16 %v1132, %v1130
        %v1195 = vpack.c.b16 %v1135, %v1133
        %v1196 = vpack.c.b16 %v1136, %v1134
        %v1197 = vpack.c.b16 %v1139, %v1137
        %v1198 = vpack.c.b16 %v1140, %v1138
        %v1199 = vpack.c.b16 %v1143, %v1141
        %v1200 = vpack.c.b16 %v1144, %v1142
        %v1201 = vpack.c.b16 %v1147, %v1145
        %v1202 = vpack.c.b16 %v1148, %v1146
        %v1203 = vpack.c.b16 %v1151, %v1149
        %v1204 = vpack.c.b16 %v1152, %v1150
        %v1205 = vpack.c.b16 %v1155, %v1153
        %v1206 = vpack.c.b16 %v1156, %v1154
        %v1207 = vpack.c.b16 %v1159, %v1157
        %v1208 = vpack.c.b16 %v1160, %v1158
        %v1209 = vpack.c.b16 %v1163, %v1161
        %v1210 = vpack.c.b16 %v1164, %v1162
        %v1211 = vpack.c.b16 %v1165, %v1165
        %v1212 = vpack.c.b16 %v1166, %v1166
        %vm1236 = vcmask 392192
        %v1238 = vsel %vm1236, %v1168, 0
        %v1241 = vsel %vm1236, %v1170, 0
        %v1244 = vsel %vm1236, %v1172, 0
        %v1247 = vsel %vm1236, %v1174, 0
        %v1250 = vsel %vm1236, %v1176, 0
        %v1253 = vsel %vm1236, %v1178, 0
        %v1256 = vsel %vm1236, %v1180, 0
        %v1259 = vsel %vm1236, %v1182, 0
        %v1262 = vsel %vm1236, %v1184, 0
        %v1265 = vsel %vm1236, %v1186, 0
        %v1268 = vsel %vm1236, %v1188, 0
        %v1271 = vsel %vm1236, %v1190, 0
        %v1274 = vsel %vm1236, %v1192, 0
        %v1277 = vsel %vm1236, %v1194, 0
        %v1280 = vsel %vm1236, %v1196, 0
        %v1283 = vsel %vm1236, %v1198, 0
        %v1286 = vsel %vm1236, %v1200, 0
        %v1289 = vsel %vm1236, %v1202, 0
        %v1292 = vsel %vm1236, %v1204, 0
        %v1295 = vsel %vm1236, %v1206, 0
        %v1298 = vsel %vm1236, %v1208, 0
        %v1301 = vsel %vm1236, %v1210, 0
        %v1304 = vsel %vm1236, %v1212, 0
        %1306 = vmatprep.subr.bf16.mxu0 0
        %1307 = vmatpush1.bf16.msra.mxu0 %v976
        %1308 = vmatprep.subr.bf16.mxu0 0
        %1309 = vmatpush1.bf16.msra.mxu0 %v977
        %1310 = vmatprep.subr.bf16.mxu0 0
        %1311 = vmatpush1.bf16.msra.mxu0 %v978
        %1312 = vmatprep.subr.bf16.mxu0 0
        %1313 = vmatpush1.bf16.msra.mxu0 %v979
        %1314 = vmatprep.subr.bf16.mxu0 0
        %1315 = vmatpush1.bf16.msra.mxu0 %v980
        %1316 = vmatprep.subr.bf16.mxu0 0
        %1317 = vmatpush1.bf16.msra.mxu0 %v981
        %1318 = vmatprep.subr.bf16.mxu0 0
        %1319 = vmatpush1.bf16.msra.mxu0 %v982
        %1320 = vmatprep.subr.bf16.mxu0 0
        %1321 = vmatpush1.bf16.msra.mxu0 %v983
        %1322 = vmatprep.subr.bf16.mxu0 0
        %1323 = vmatpush1.bf16.msra.mxu0 %v984
        %1324 = vmatprep.subr.bf16.mxu0 0
        %1325 = vmatpush1.bf16.msra.mxu0 %v985
        %1326 = vmatprep.subr.bf16.mxu0 0
        %1327 = vmatpush1.bf16.msra.mxu0 %v986
        %1328 = vmatprep.subr.bf16.mxu0 0
        %1329 = vmatpush1.bf16.msra.mxu0 0
        %1330 = vmatprep.subr.bf16.mxu0 0
        %1331 = vmatpush1.bf16.msra.mxu0 0
        %1332 = vmatprep.subr.bf16.mxu0 0
        %1333 = vmatpush1.bf16.msra.mxu0 0
        %1334 = vmatprep.subr.bf16.mxu0 0
        %1335 = vmatpush1.bf16.msra.mxu0 0
        %1336 = vmatprep.subr.bf16.mxu0 0
        %1337 = vmatpush1.bf16.msra.mxu0 0
        %1338 = vmatprep.mubr.bf16.mxu0 %v1238
        %1339 = vmatmul.mubr.bf16.gmra.mrb[0].mxu0 %v1167
        %v1340 = vpop.f32.mrb[0].mxu0
        %v1341 = vadd.f32 0.0, %v1340
        %v1342 = vpop.f32.mrb[0].mxu0
        %v1343 = vpop.f32.mrb[0].mxu0
        %v1344 = vadd.f32 0.0, %v1343
        %v1345 = vpop.f32.mrb[0].mxu0
        %1346 = vmatprep.mubr.bf16.mxu0 %v1241
        %1347 = vmatmul.mubr.bf16.gmra.mrb[0].mxu0 %v1169
        %v1348 = vpop.f32.mrb[0].mxu0
        %v1349 = vadd.f32 0.0, %v1348
        %v1350 = vpop.f32.mrb[0].mxu0
        %v1351 = vpop.f32.mrb[0].mxu0
        %v1352 = vadd.f32 0.0, %v1351
        %v1353 = vpop.f32.mrb[0].mxu0
        %1354 = vmatprep.mubr.bf16.mxu0 %v1244
        %1355 = vmatmul.mubr.bf16.gmra.mrb[0].mxu0 %v1171
        %v1356 = vpop.f32.mrb[0].mxu0
        %v1357 = vadd.f32 0.0, %v1356
        %v1358 = vpop.f32.mrb[0].mxu0
        %v1359 = vpop.f32.mrb[0].mxu0
        %v1360 = vadd.f32 0.0, %v1359
        %v1361 = vpop.f32.mrb[0].mxu0
        %1362 = vmatprep.mubr.bf16.mxu0 %v1247
        %1363 = vmatmul.mubr.bf16.gmra.mrb[0].mxu0 %v1173
        %v1364 = vpop.f32.mrb[0].mxu0
        %v1365 = vadd.f32 0.0, %v1364
        %v1366 = vpop.f32.mrb[0].mxu0
        %v1367 = vpop.f32.mrb[0].mxu0
        %v1368 = vadd.f32 0.0, %v1367
        %v1369 = vpop.f32.mrb[0].mxu0
        %1370 = vmatprep.mubr.bf16.mxu0 %v1250
        %1371 = vmatmul.mubr.bf16.gmra.mrb[0].mxu0 %v1175
        %v1372 = vpop.f32.mrb[0].mxu0
        %v1373 = vadd.f32 0.0, %v1372
        %v1374 = vpop.f32.mrb[0].mxu0
        %v1375 = vpop.f32.mrb[0].mxu0
        %v1376 = vadd.f32 0.0, %v1375
        %v1377 = vpop.f32.mrb[0].mxu0
        %1378 = vmatprep.mubr.bf16.mxu0 %v1253
        %1379 = vmatmul.mubr.bf16.gmra.mrb[0].mxu0 %v1177
        %v1380 = vpop.f32.mrb[0].mxu0
        %v1381 = vadd.f32 0.0, %v1380
        %v1382 = vpop.f32.mrb[0].mxu0
        %v1383 = vpop.f32.mrb[0].mxu0
        %v1384 = vadd.f32 0.0, %v1383
        %v1385 = vpop.f32.mrb[0].mxu0
        %1386 = vmatprep.mubr.bf16.mxu0 %v1256
        %1387 = vmatmul.mubr.bf16.gmra.mrb[0].mxu0 %v1179
        %v1388 = vpop.f32.mrb[0].mxu0
        %v1389 = vadd.f32 0.0, %v1388
        %v1390 = vpop.f32.mrb[0].mxu0
        %v1391 = vpop.f32.mrb[0].mxu0
        %v1392 = vadd.f32 0.0, %v1391
        %v1393 = vpop.f32.mrb[0].mxu0
        %1394 = vmatprep.mubr.bf16.mxu0 %v1259
        %1395 = vmatmul.mubr.bf16.gmra.mrb[0].mxu0 %v1181
        %v1396 = vpop.f32.mrb[0].mxu0
        %v1397 = vadd.f32 0.0, %v1396
        %v1398 = vpop.f32.mrb[0].mxu0
        %v1399 = vpop.f32.mrb[0].mxu0
        %v1400 = vadd.f32 0.0, %v1399
        %v1401 = vpop.f32.mrb[0].mxu0
        %1402 = vmatprep.mubr.bf16.mxu0 %v1262
        %1403 = vmatmul.mubr.bf16.gmra.mrb[0].mxu0 %v1183
        %v1404 = vpop.f32.mrb[0].mxu0
        %v1405 = vadd.f32 0.0, %v1404
        %v1406 = vpop.f32.mrb[0].mxu0
        %v1407 = vpop.f32.mrb[0].mxu0
        %v1408 = vadd.f32 0.0, %v1407
        %v1409 = vpop.f32.mrb[0].mxu0
        %1410 = vmatprep.mubr.bf16.mxu0 %v1265
        %1411 = vmatmul.mubr.bf16.gmra.mrb[0].mxu0 %v1185
        %v1412 = vpop.f32.mrb[0].mxu0
        %v1413 = vadd.f32 0.0, %v1412
        %v1414 = vpop.f32.mrb[0].mxu0
        %v1415 = vpop.f32.mrb[0].mxu0
        %v1416 = vadd.f32 0.0, %v1415
        %v1417 = vpop.f32.mrb[0].mxu0
        %1418 = vmatprep.mubr.bf16.mxu0 %v1268
        %1419 = vmatmul.mubr.bf16.gmra.mrb[0].mxu0 %v1187
        %v1420 = vpop.f32.mrb[0].mxu0
        %v1421 = vadd.f32 0.0, %v1420
        %v1422 = vpop.f32.mrb[0].mxu0
        %v1423 = vpop.f32.mrb[0].mxu0
        %v1424 = vadd.f32 0.0, %v1423
        %v1425 = vpop.f32.mrb[0].mxu0
        %1426 = vmatprep.mubr.bf16.mxu0 %v1271
        %1427 = vmatmul.mubr.bf16.gmra.mrb[0].mxu0 %v1189
        %v1428 = vpop.f32.mrb[0].mxu0
        %v1429 = vadd.f32 0.0, %v1428
        %v1430 = vpop.f32.mrb[0].mxu0
        %v1431 = vpop.f32.mrb[0].mxu0
        %v1432 = vadd.f32 0.0, %v1431
        %v1433 = vpop.f32.mrb[0].mxu0
        %1434 = vmatprep.mubr.bf16.mxu0 %v1274
        %1435 = vmatmul.mubr.bf16.gmra.mrb[0].mxu0 %v1191
        %v1436 = vpop.f32.mrb[0].mxu0
        %v1437 = vadd.f32 0.0, %v1436
        %v1438 = vpop.f32.mrb[0].mxu0
        %v1439 = vpop.f32.mrb[0].mxu0
        %v1440 = vadd.f32 0.0, %v1439
        %v1441 = vpop.f32.mrb[0].mxu0
        %1442 = vmatprep.mubr.bf16.mxu0 %v1277
        %1443 = vmatmul.mubr.bf16.gmra.mrb[0].mxu0 %v1193
        %v1444 = vpop.f32.mrb[0].mxu0
        %v1445 = vadd.f32 0.0, %v1444
        %v1446 = vpop.f32.mrb[0].mxu0
        %v1447 = vpop.f32.mrb[0].mxu0
        %v1448 = vadd.f32 0.0, %v1447
        %v1449 = vpop.f32.mrb[0].mxu0
        %1450 = vmatprep.mubr.bf16.mxu0 %v1280
        %1451 = vmatmul.mubr.bf16.gmra.mrb[0].mxu0 %v1195
        %v1452 = vpop.f32.mrb[0].mxu0
        %v1453 = vadd.f32 0.0, %v1452
        %v1454 = vpop.f32.mrb[0].mxu0
        %v1455 = vpop.f32.mrb[0].mxu0
        %v1456 = vadd.f32 0.0, %v1455
        %v1457 = vpop.f32.mrb[0].mxu0
        %1458 = vmatprep.mubr.bf16.mxu0 %v1283
        %1459 = vmatmul.mubr.bf16.gmra.mrb[0].mxu0 %v1197
        %v1460 = vpop.f32.mrb[0].mxu0
        %v1461 = vadd.f32 0.0, %v1460
        %v1462 = vpop.f32.mrb[0].mxu0
        %v1463 = vpop.f32.mrb[0].mxu0
        %v1464 = vadd.f32 0.0, %v1463
        %v1465 = vpop.f32.mrb[0].mxu0
        %1466 = vmatprep.mubr.bf16.mxu0 %v1286
        %1467 = vmatmul.mubr.bf16.gmra.mrb[0].mxu0 %v1199
        %v1468 = vpop.f32.mrb[0].mxu0
        %v1469 = vadd.f32 0.0, %v1468
        %v1470 = vpop.f32.mrb[0].mxu0
        %v1471 = vpop.f32.mrb[0].mxu0
        %v1472 = vadd.f32 0.0, %v1471
        %v1473 = vpop.f32.mrb[0].mxu0
        %1474 = vmatprep.mubr.bf16.mxu0 %v1289
        %1475 = vmatmul.mubr.bf16.gmra.mrb[0].mxu0 %v1201
        %v1476 = vpop.f32.mrb[0].mxu0
        %v1477 = vadd.f32 0.0, %v1476
        %v1478 = vpop.f32.mrb[0].mxu0
        %v1479 = vpop.f32.mrb[0].mxu0
        %v1480 = vadd.f32 0.0, %v1479
        %v1481 = vpop.f32.mrb[0].mxu0
        %1482 = vmatprep.mubr.bf16.mxu0 %v1292
        %1483 = vmatmul.mubr.bf16.gmra.mrb[0].mxu0 %v1203
        %v1484 = vpop.f32.mrb[0].mxu0
        %v1485 = vadd.f32 0.0, %v1484
        %v1486 = vpop.f32.mrb[0].mxu0
        %v1487 = vpop.f32.mrb[0].mxu0
        %v1488 = vadd.f32 0.0, %v1487
        %v1489 = vpop.f32.mrb[0].mxu0
        %1490 = vmatprep.mubr.bf16.mxu0 %v1295
        %1491 = vmatmul.mubr.bf16.gmra.mrb[0].mxu0 %v1205
        %v1492 = vpop.f32.mrb[0].mxu0
        %v1493 = vadd.f32 0.0, %v1492
        %v1494 = vpop.f32.mrb[0].mxu0
        %v1495 = vpop.f32.mrb[0].mxu0
        %v1496 = vadd.f32 0.0, %v1495
        %v1497 = vpop.f32.mrb[0].mxu0
        %1498 = vmatprep.mubr.bf16.mxu0 %v1298
        %1499 = vmatmul.mubr.bf16.gmra.mrb[0].mxu0 %v1207
        %v1500 = vpop.f32.mrb[0].mxu0
        %v1501 = vadd.f32 0.0, %v1500
        %v1502 = vpop.f32.mrb[0].mxu0
        %v1503 = vpop.f32.mrb[0].mxu0
        %v1504 = vadd.f32 0.0, %v1503
        %v1505 = vpop.f32.mrb[0].mxu0
        %1506 = vmatprep.mubr.bf16.mxu0 %v1301
        %1507 = vmatmul.mubr.bf16.gmra.mrb[0].mxu0 %v1209
        %v1508 = vpop.f32.mrb[0].mxu0
        %v1509 = vadd.f32 0.0, %v1508
        %v1510 = vpop.f32.mrb[0].mxu0
        %v1511 = vpop.f32.mrb[0].mxu0
        %v1512 = vadd.f32 0.0, %v1511
        %v1513 = vpop.f32.mrb[0].mxu0
        %1514 = vmatprep.mubr.bf16.mxu0 %v1304
        %1515 = vmatmul.mubr.bf16.gmra.mrb[0].mxu0 %v1211
        %v1516 = vpop.f32.mrb[0].mxu0
        %v1517 = vadd.f32 0.0, %v1516
        %v1518 = vpop.f32.mrb[0].mxu0
        %v1519 = vpop.f32.mrb[0].mxu0
        %v1520 = vpop.f32.mrb[0].mxu0
        %1521 = vdwg.mxu0
        %v1522 = vpack.c.bf16 %v1344, %v1341
        %v1523 = vpack.c.bf16 %v1352, %v1349
        %v1524 = vpack.c.bf16 %v1360, %v1357
        %v1525 = vpack.c.bf16 %v1368, %v1365
        %v1526 = vpack.c.bf16 %v1376, %v1373
        %v1527 = vpack.c.bf16 %v1384, %v1381
        %v1528 = vpack.c.bf16 %v1392, %v1389
        %v1529 = vpack.c.bf16 %v1400, %v1397
        %v1530 = vpack.c.bf16 %v1408, %v1405
        %v1531 = vpack.c.bf16 %v1416, %v1413
        %v1532 = vpack.c.bf16 %v1424, %v1421
        %v1533 = vpack.c.bf16 %v1432, %v1429
        %v1534 = vpack.c.bf16 %v1440, %v1437
        %v1535 = vpack.c.bf16 %v1448, %v1445
        %v1536 = vpack.c.bf16 %v1456, %v1453
        %v1537 = vpack.c.bf16 %v1464, %v1461
        %v1538 = vpack.c.bf16 %v1472, %v1469
        %v1539 = vpack.c.bf16 %v1480, %v1477
        %v1540 = vpack.c.bf16 %v1488, %v1485
        %v1541 = vpack.c.bf16 %v1496, %v1493
        %v1542 = vpack.c.bf16 %v1504, %v1501
        %v1543 = vpack.c.bf16 %v1512, %v1509
        %v1544 = vpack.c.bf16 %v1517, %v1517
        %v1545 = vld [vmem:[%s4] sm:$0xf]
        %v1546 = vld [vmem:[%s4 + $0x4] sm:$0xf]
        %v1547 = vld [vmem:[%s4 + $0x8] sm:$0xf]
        %v1548 = vld [vmem:[%s4 + $0xc] sm:$0xf]
        %v1549 = vld [vmem:[%s4 + $0x10] sm:$0xf]
        %v1550 = vld [vmem:[%s4 + $0x14] sm:$0xf]
        %v1551 = vld [vmem:[%s4 + $0x18] sm:$0xf]
        %v1552 = vld [vmem:[%s4 + $0x1c] sm:$0xf]
        %v1553 = vld [vmem:[%s4 + $0x20] sm:$0xf]
        %v1554 = vld [vmem:[%s4 + $0x24] sm:$0xf]
        %v1555 = vld [vmem:[%s4 + $0x28] sm:$0xf]
        %v1556 = vld [vmem:[%s4 + $0x2c] sm:$0xf]
        %v1557 = vld [vmem:[%s4 + $0x30] sm:$0xf]
        %v1558 = vld [vmem:[%s4 + $0x34] sm:$0xf]
        %v1559 = vld [vmem:[%s4 + $0x38] sm:$0xf]
        %v1560 = vld [vmem:[%s4 + $0x3c] sm:$0xf]
        %s1561 = scalar_lea.vmem %s4, 64
        %v1562 = vld [vmem:[%s1561] sm:$0xf]
        %v1563 = vld [vmem:[%s1561 + $0x4] sm:$0xf]
        %v1564 = vld [vmem:[%s1561 + $0x8] sm:$0xf]
        %v1565 = vld [vmem:[%s1561 + $0xc] sm:$0xf]
        %v1566 = vld [vmem:[%s1561 + $0x10] sm:$0xf]
        %v1567 = vld [vmem:[%s1561 + $0x14] sm:$0xf]
        %v1568 = vld [vmem:[%s1561 + $0x18] sm:$0xf]
        %v1569 = vld [vmem:[%s1561 + $0x1c] sm:$0xf]
        %v1570 = vld [vmem:[%s1561 + $0x20] sm:$0xf]
        %v1571 = vld [vmem:[%s1561 + $0x24] sm:$0xf]
        %v1572 = vld [vmem:[%s1561 + $0x28] sm:$0xf]
        %v1573 = vld [vmem:[%s1561 + $0x2c] sm:$0xf]
        %v1574 = vld [vmem:[%s1561 + $0x30] sm:$0xf]
        %v1575 = vld [vmem:[%s1561 + $0x34] sm:$0xf]
        %v1576 = vld [vmem:[%s1561 + $0x38] sm:$0xf]
        %v1577 = vld [vmem:[%s1561 + $0x3c] sm:$0xf]
        %vm1581 = vcmask 1043456
        %v1582 = vrot.slane %v1524, 4
        %v1583 = vrot.slane %v1525, 4
        %v1584 = vsel %vm1581, %v1582, %v1583
        %v1585 = vrot.slane %v1526, 4
        %v1586 = vsel %vm1581, %v1583, %v1585
        %v1606 = vunpack.c.l.b16 %v1562
        %v1607 = vunpack.c.l.b16 %v1563
        %v1608 = vunpack.c.l.b16 %v1564
        %v1609 = vunpack.c.l.b16 %v1565
        %v1610 = vunpack.c.l.b16 %v1566
        %v1611 = vunpack.c.l.b16 %v1567
        %v1612 = vunpack.c.l.b16 %v1568
        %v1613 = vunpack.c.l.b16 %v1569
        %v1614 = vunpack.c.l.b16 %v1570
        %v1615 = vunpack.c.l.b16 %v1571
        %v1616 = vunpack.c.l.b16 %v1572
        %v1617 = vunpack.c.l.b16 %v1573
        %v1618 = vunpack.c.l.b16 %v1574
        %v1619 = vunpack.c.l.b16 %v1575
        %v1620 = vunpack.c.l.b16 %v1576
        %v1621 = vunpack.c.l.b16 %v1577
        %v1622 = vpack.c.b16 %v1607, %v1606
        %v1623 = vpack.c.b16 %v1609, %v1608
        %v1624 = vpack.c.b16 %v1611, %v1610
        %v1625 = vpack.c.b16 %v1613, %v1612
        %v1626 = vpack.c.b16 %v1615, %v1614
        %v1627 = vpack.c.b16 %v1617, %v1616
        %v1628 = vpack.c.b16 %v1619, %v1618
        %v1629 = vpack.c.b16 %v1621, %v1620
        %1638 = vmatprep.subr.bf16.mxu0 0
        %1639 = vmatpush1.bf16.msra.mxu0 %v1622
        %1640 = vmatprep.subr.bf16.mxu0 0
        %1641 = vmatpush1.bf16.msra.mxu0 %v1623
        %1642 = vmatprep.subr.bf16.mxu0 0
        %1643 = vmatpush1.bf16.msra.mxu0 %v1624
        %1644 = vmatprep.subr.bf16.mxu0 0
        %1645 = vmatpush1.bf16.msra.mxu0 %v1625
        %1646 = vmatprep.subr.bf16.mxu0 0
        %1647 = vmatpush1.bf16.msra.mxu0 %v1626
        %1648 = vmatprep.subr.bf16.mxu0 0
        %1649 = vmatpush1.bf16.msra.mxu0 %v1627
        %1650 = vmatprep.subr.bf16.mxu0 0
        %1651 = vmatpush1.bf16.msra.mxu0 %v1628
        %1652 = vmatprep.subr.bf16.mxu0 0
        %1653 = vmatpush1.bf16.msra.mxu0 %v1629
        %1654 = vmatprep.subr.bf16.mxu0 0
        %1655 = vmatpush1.bf16.msra.mxu0 0
        %1656 = vmatprep.subr.bf16.mxu0 0
        %1657 = vmatpush1.bf16.msra.mxu0 0
        %1658 = vmatprep.subr.bf16.mxu0 0
        %1659 = vmatpush1.bf16.msra.mxu0 0
        %1660 = vmatprep.subr.bf16.mxu0 0
        %1661 = vmatpush1.bf16.msra.mxu0 0
        %1662 = vmatprep.subr.bf16.mxu0 0
        %1663 = vmatpush1.bf16.msra.mxu0 0
        %1664 = vmatprep.subr.bf16.mxu0 0
        %1665 = vmatpush1.bf16.msra.mxu0 0
        %1666 = vmatprep.subr.bf16.mxu0 0
        %1667 = vmatpush1.bf16.msra.mxu0 0
        %1668 = vmatprep.subr.bf16.mxu0 0
        %1669 = vmatpush1.bf16.msra.mxu0 0
        %1670 = vmatprep.mubr.bf16.mxu0 0
        %1671 = vmatmul.mubr.bf16.gmra.mrb[0].mxu0 %v1584
        %v1672 = vpop.f32.mrb[0].mxu0
        %v1673 = vadd.f32 0.0, %v1672
        %v1674 = vpop.f32.mrb[0].mxu0
        %v1675 = vpop.f32.mrb[0].mxu0
        %v1676 = vadd.f32 0.0, %v1675
        %v1677 = vpop.f32.mrb[0].mxu0
        %1678 = vmatprep.mubr.bf16.mxu0 0
        %1679 = vmatmul.mubr.bf16.gmra.mrb[0].mxu0 %v1586
        %v1680 = vpop.f32.mrb[0].mxu0
        %v1681 = vadd.f32 0.0, %v1680
        %v1682 = vpop.f32.mrb[0].mxu0
        %v1683 = vpop.f32.mrb[0].mxu0
        %v1684 = vadd.f32 0.0, %v1683
        %v1685 = vpop.f32.mrb[0].mxu0
        %1686 = vmatprep.mubr.bf16.mxu0 0
        %1687 = vmatmul.mubr.bf16.gmra.mrb[0].mxu0 %v1585
        %v1688 = vpop.f32.mrb[0].mxu0
        %v1689 = vadd.f32 0.0, %v1688
        %v1690 = vpop.f32.mrb[0].mxu0
        %v1691 = vpop.f32.mrb[0].mxu0
        %v1692 = vpop.f32.mrb[0].mxu0
        %1693 = vdwg.mxu0
        %v1710 = vunpack.c.l.b16 %v1545
        %v1711 = vunpack.c.l.b16 %v1546
        %v1712 = vunpack.c.l.b16 %v1547
        %v1713 = vunpack.c.l.b16 %v1548
        %v1714 = vunpack.c.l.b16 %v1549
        %v1715 = vunpack.c.l.b16 %v1550
        %v1716 = vunpack.c.l.b16 %v1551
        %v1717 = vunpack.c.l.b16 %v1552
        %v1718 = vunpack.c.l.b16 %v1553
        %v1719 = vunpack.c.l.b16 %v1554
        %v1720 = vunpack.c.l.b16 %v1555
        %v1721 = vunpack.c.l.b16 %v1556
        %v1722 = vunpack.c.l.b16 %v1557
        %v1723 = vunpack.c.l.b16 %v1558
        %v1724 = vunpack.c.l.b16 %v1559
        %v1725 = vunpack.c.l.b16 %v1560
        %v1726 = vpack.c.b16 %v1711, %v1710
        %v1727 = vpack.c.b16 %v1713, %v1712
        %v1728 = vpack.c.b16 %v1715, %v1714
        %v1729 = vpack.c.b16 %v1717, %v1716
        %v1730 = vpack.c.b16 %v1719, %v1718
        %v1731 = vpack.c.b16 %v1721, %v1720
        %v1732 = vpack.c.b16 %v1723, %v1722
        %v1733 = vpack.c.b16 %v1725, %v1724
        %1742 = vmatprep.subr.bf16.mxu0 0
        %1743 = vmatpush1.bf16.msra.mxu0 %v1726
        %1744 = vmatprep.subr.bf16.mxu0 0
        %1745 = vmatpush1.bf16.msra.mxu0 %v1727
        %1746 = vmatprep.subr.bf16.mxu0 0
        %1747 = vmatpush1.bf16.msra.mxu0 %v1728
        %1748 = vmatprep.subr.bf16.mxu0 0
        %1749 = vmatpush1.bf16.msra.mxu0 %v1729
        %1750 = vmatprep.subr.bf16.mxu0 0
        %1751 = vmatpush1.bf16.msra.mxu0 %v1730
        %1752 = vmatprep.subr.bf16.mxu0 0
        %1753 = vmatpush1.bf16.msra.mxu0 %v1731
        %1754 = vmatprep.subr.bf16.mxu0 0
        %1755 = vmatpush1.bf16.msra.mxu0 %v1732
        %1756 = vmatprep.subr.bf16.mxu0 0
        %1757 = vmatpush1.bf16.msra.mxu0 %v1733
        %1758 = vmatprep.subr.bf16.mxu0 0
        %1759 = vmatpush1.bf16.msra.mxu0 0
        %1760 = vmatprep.subr.bf16.mxu0 0
        %1761 = vmatpush1.bf16.msra.mxu0 0
        %1762 = vmatprep.subr.bf16.mxu0 0
        %1763 = vmatpush1.bf16.msra.mxu0 0
        %1764 = vmatprep.subr.bf16.mxu0 0
        %1765 = vmatpush1.bf16.msra.mxu0 0
        %1766 = vmatprep.subr.bf16.mxu0 0
        %1767 = vmatpush1.bf16.msra.mxu0 0
        %1768 = vmatprep.subr.bf16.mxu0 0
        %1769 = vmatpush1.bf16.msra.mxu0 0
        %1770 = vmatprep.subr.bf16.mxu0 0
        %1771 = vmatpush1.bf16.msra.mxu0 0
        %1772 = vmatprep.subr.bf16.mxu0 0
        %1773 = vmatpush1.bf16.msra.mxu0 0
        %1774 = vmatprep.mubr.bf16.mxu0 0
        %1775 = vmatmul.mubr.bf16.gmra.mrb[0].mxu0 %v1522
        %v1776 = vpop.f32.mrb[0].mxu0
        %v1777 = vadd.f32 %v1673, %v1776
        %v1778 = vpop.f32.mrb[0].mxu0
        %v1779 = vpop.f32.mrb[0].mxu0
        %v1780 = vadd.f32 %v1676, %v1779
        %v1781 = vpop.f32.mrb[0].mxu0
        %1782 = vmatprep.mubr.bf16.mxu0 0
        %1783 = vmatmul.mubr.bf16.gmra.mrb[0].mxu0 %v1523
        %v1784 = vpop.f32.mrb[0].mxu0
        %v1785 = vadd.f32 %v1681, %v1784
        %v1786 = vpop.f32.mrb[0].mxu0
        %v1787 = vpop.f32.mrb[0].mxu0
        %v1788 = vadd.f32 %v1684, %v1787
        %v1789 = vpop.f32.mrb[0].mxu0
        %1790 = vmatprep.mubr.bf16.mxu0 0
        %1791 = vmatmul.mubr.bf16.gmra.mrb[0].mxu0 %v1524
        %v1792 = vpop.f32.mrb[0].mxu0
        %v1793 = vadd.f32 %v1689, %v1792
        %v1794 = vpop.f32.mrb[0].mxu0
        %v1795 = vpop.f32.mrb[0].mxu0
        %v1796 = vpop.f32.mrb[0].mxu0
        %1797 = vdwg.mxu0
        %s1798 = scalar_lea.vmem %s4, 128
        %v1799 = vld [vmem:[%s1798] sm:$0xf]
        %v1800 = vld [vmem:[%s1798 + $0x4] sm:$0xf]
        %v1801 = vld [vmem:[%s1798 + $0x8] sm:$0xf]
        %v1802 = vld [vmem:[%s1798 + $0xc] sm:$0xf]
        %v1803 = vld [vmem:[%s1798 + $0x10] sm:$0xf]
        %v1804 = vld [vmem:[%s1798 + $0x14] sm:$0xf]
        %v1805 = vld [vmem:[%s1798 + $0x18] sm:$0xf]
        %v1806 = vld [vmem:[%s1798 + $0x1c] sm:$0xf]
        %v1807 = vld [vmem:[%s1798 + $0x20] sm:$0xf]
        %v1808 = vld [vmem:[%s1798 + $0x24] sm:$0xf]
        %v1809 = vld [vmem:[%s1798 + $0x28] sm:$0xf]
        %v1810 = vld [vmem:[%s1798 + $0x2c] sm:$0xf]
        %v1811 = vld [vmem:[%s1798 + $0x30] sm:$0xf]
        %v1812 = vld [vmem:[%s1798 + $0x34] sm:$0xf]
        %v1813 = vld [vmem:[%s1798 + $0x38] sm:$0xf]
        %v1814 = vld [vmem:[%s1798 + $0x3c] sm:$0xf]
        %v1831 = vunpack.c.l.b16 %v1799
        %v1832 = vunpack.c.l.b16 %v1800
        %v1833 = vunpack.c.l.b16 %v1801
        %v1834 = vunpack.c.l.b16 %v1802
        %v1835 = vunpack.c.l.b16 %v1803
        %v1836 = vunpack.c.l.b16 %v1804
        %v1837 = vunpack.c.l.b16 %v1805
        %v1838 = vunpack.c.l.b16 %v1806
        %v1839 = vunpack.c.l.b16 %v1807
        %v1840 = vunpack.c.l.b16 %v1808
        %v1841 = vunpack.c.l.b16 %v1809
        %v1842 = vunpack.c.l.b16 %v1810
        %v1843 = vunpack.c.l.b16 %v1811
        %v1844 = vunpack.c.l.b16 %v1812
        %v1845 = vunpack.c.l.b16 %v1813
        %v1846 = vunpack.c.l.b16 %v1814
        %v1847 = vpack.c.b16 %v1832, %v1831
        %v1848 = vpack.c.b16 %v1834, %v1833
        %v1849 = vpack.c.b16 %v1836, %v1835
        %v1850 = vpack.c.b16 %v1838, %v1837
        %v1851 = vpack.c.b16 %v1840, %v1839
        %v1852 = vpack.c.b16 %v1842, %v1841
        %v1853 = vpack.c.b16 %v1844, %v1843
        %v1854 = vpack.c.b16 %v1846, %v1845
        %1863 = vmatprep.subr.bf16.mxu0 0
        %1864 = vmatpush1.bf16.msra.mxu0 %v1847
        %1865 = vmatprep.subr.bf16.mxu0 0
        %1866 = vmatpush1.bf16.msra.mxu0 %v1848
        %1867 = vmatprep.subr.bf16.mxu0 0
        %1868 = vmatpush1.bf16.msra.mxu0 %v1849
        %1869 = vmatprep.subr.bf16.mxu0 0
        %1870 = vmatpush1.bf16.msra.mxu0 %v1850
        %1871 = vmatprep.subr.bf16.mxu0 0
        %1872 = vmatpush1.bf16.msra.mxu0 %v1851
        %1873 = vmatprep.subr.bf16.mxu0 0
        %1874 = vmatpush1.bf16.msra.mxu0 %v1852
        %1875 = vmatprep.subr.bf16.mxu0 0
        %1876 = vmatpush1.bf16.msra.mxu0 %v1853
        %1877 = vmatprep.subr.bf16.mxu0 0
        %1878 = vmatpush1.bf16.msra.mxu0 %v1854
        %1879 = vmatprep.subr.bf16.mxu0 0
        %1880 = vmatpush1.bf16.msra.mxu0 0
        %1881 = vmatprep.subr.bf16.mxu0 0
        %1882 = vmatpush1.bf16.msra.mxu0 0
        %1883 = vmatprep.subr.bf16.mxu0 0
        %1884 = vmatpush1.bf16.msra.mxu0 0
        %1885 = vmatprep.subr.bf16.mxu0 0
        %1886 = vmatpush1.bf16.msra.mxu0 0
        %1887 = vmatprep.subr.bf16.mxu0 0
        %1888 = vmatpush1.bf16.msra.mxu0 0
        %1889 = vmatprep.subr.bf16.mxu0 0
        %1890 = vmatpush1.bf16.msra.mxu0 0
        %1891 = vmatprep.subr.bf16.mxu0 0
        %1892 = vmatpush1.bf16.msra.mxu0 0
        %1893 = vmatprep.subr.bf16.mxu0 0
        %1894 = vmatpush1.bf16.msra.mxu0 0
        %1895 = vmatprep.mubr.bf16.mxu0 0
        %1896 = vmatmul.mubr.bf16.gmra.mrb[0].mxu0 %v1527
        %v1897 = vpop.f32.mrb[0].mxu0
        %v1898 = vadd.f32 0.0, %v1897
        %v1899 = vpop.f32.mrb[0].mxu0
        %v1900 = vpop.f32.mrb[0].mxu0
        %v1901 = vadd.f32 0.0, %v1900
        %v1902 = vpop.f32.mrb[0].mxu0
        %1903 = vmatprep.mubr.bf16.mxu0 0
        %1904 = vmatmul.mubr.bf16.gmra.mrb[0].mxu0 %v1528
        %v1905 = vpop.f32.mrb[0].mxu0
        %v1906 = vadd.f32 0.0, %v1905
        %v1907 = vpop.f32.mrb[0].mxu0
        %v1908 = vpop.f32.mrb[0].mxu0
        %v1909 = vadd.f32 0.0, %v1908
        %v1910 = vpop.f32.mrb[0].mxu0
        %1911 = vmatprep.mubr.bf16.mxu0 0
        %1912 = vmatmul.mubr.bf16.gmra.mrb[0].mxu0 %v1529
        %v1913 = vpop.f32.mrb[0].mxu0
        %v1914 = vadd.f32 0.0, %v1913
        %v1915 = vpop.f32.mrb[0].mxu0
        %v1916 = vpop.f32.mrb[0].mxu0
        %v1917 = vpop.f32.mrb[0].mxu0
        %1918 = vdwg.mxu0
        %v1919 = vadd.f32 %v1777, %v1898
        %v1920 = vadd.f32 %v1780, %v1901
        %v1921 = vadd.f32 %v1785, %v1906
        %v1922 = vadd.f32 %v1788, %v1909
        %v1923 = vadd.f32 %v1793, %v1914
        %s1924 = scalar_lea.vmem %s4, 192
        %v1925 = vld [vmem:[%s1924] sm:$0xf]
        %v1926 = vld [vmem:[%s1924 + $0x4] sm:$0xf]
        %v1927 = vld [vmem:[%s1924 + $0x8] sm:$0xf]
        %v1928 = vld [vmem:[%s1924 + $0xc] sm:$0xf]
        %v1929 = vld [vmem:[%s1924 + $0x10] sm:$0xf]
        %v1930 = vld [vmem:[%s1924 + $0x14] sm:$0xf]
        %v1931 = vld [vmem:[%s1924 + $0x18] sm:$0xf]
        %v1932 = vld [vmem:[%s1924 + $0x1c] sm:$0xf]
        %v1933 = vld [vmem:[%s1924 + $0x20] sm:$0xf]
        %v1934 = vld [vmem:[%s1924 + $0x24] sm:$0xf]
        %v1935 = vld [vmem:[%s1924 + $0x28] sm:$0xf]
        %v1936 = vld [vmem:[%s1924 + $0x2c] sm:$0xf]
        %v1937 = vld [vmem:[%s1924 + $0x30] sm:$0xf]
        %v1938 = vld [vmem:[%s1924 + $0x34] sm:$0xf]
        %v1939 = vld [vmem:[%s1924 + $0x38] sm:$0xf]
        %v1940 = vld [vmem:[%s1924 + $0x3c] sm:$0xf]
        %v1944 = vrot.slane %v1529, 4
        %v1945 = vrot.slane %v1530, 4
        %v1946 = vsel %vm1581, %v1944, %v1945
        %v1947 = vrot.slane %v1531, 4
        %v1948 = vsel %vm1581, %v1945, %v1947
        %v1968 = vunpack.c.l.b16 %v1925
        %v1969 = vunpack.c.l.b16 %v1926
        %v1970 = vunpack.c.l.b16 %v1927
        %v1971 = vunpack.c.l.b16 %v1928
        %v1972 = vunpack.c.l.b16 %v1929
        %v1973 = vunpack.c.l.b16 %v1930
        %v1974 = vunpack.c.l.b16 %v1931
        %v1975 = vunpack.c.l.b16 %v1932
        %v1976 = vunpack.c.l.b16 %v1933
        %v1977 = vunpack.c.l.b16 %v1934
        %v1978 = vunpack.c.l.b16 %v1935
        %v1979 = vunpack.c.l.b16 %v1936
        %v1980 = vunpack.c.l.b16 %v1937
        %v1981 = vunpack.c.l.b16 %v1938
        %v1982 = vunpack.c.l.b16 %v1939
        %v1983 = vunpack.c.l.b16 %v1940
        %v1984 = vpack.c.b16 %v1969, %v1968
        %v1985 = vpack.c.b16 %v1971, %v1970
        %v1986 = vpack.c.b16 %v1973, %v1972
        %v1987 = vpack.c.b16 %v1975, %v1974
        %v1988 = vpack.c.b16 %v1977, %v1976
        %v1989 = vpack.c.b16 %v1979, %v1978
        %v1990 = vpack.c.b16 %v1981, %v1980
        %v1991 = vpack.c.b16 %v1983, %v1982
        %2000 = vmatprep.subr.bf16.mxu0 0
        %2001 = vmatpush1.bf16.msra.mxu0 %v1984
        %2002 = vmatprep.subr.bf16.mxu0 0
        %2003 = vmatpush1.bf16.msra.mxu0 %v1985
        %2004 = vmatprep.subr.bf16.mxu0 0
        %2005 = vmatpush1.bf16.msra.mxu0 %v1986
        %2006 = vmatprep.subr.bf16.mxu0 0
        %2007 = vmatpush1.bf16.msra.mxu0 %v1987
        %2008 = vmatprep.subr.bf16.mxu0 0
        %2009 = vmatpush1.bf16.msra.mxu0 %v1988
        %2010 = vmatprep.subr.bf16.mxu0 0
        %2011 = vmatpush1.bf16.msra.mxu0 %v1989
        %2012 = vmatprep.subr.bf16.mxu0 0
        %2013 = vmatpush1.bf16.msra.mxu0 %v1990
        %2014 = vmatprep.subr.bf16.mxu0 0
        %2015 = vmatpush1.bf16.msra.mxu0 %v1991
        %2016 = vmatprep.subr.bf16.mxu0 0
        %2017 = vmatpush1.bf16.msra.mxu0 0
        %2018 = vmatprep.subr.bf16.mxu0 0
        %2019 = vmatpush1.bf16.msra.mxu0 0
        %2020 = vmatprep.subr.bf16.mxu0 0
        %2021 = vmatpush1.bf16.msra.mxu0 0
        %2022 = vmatprep.subr.bf16.mxu0 0
        %2023 = vmatpush1.bf16.msra.mxu0 0
        %2024 = vmatprep.subr.bf16.mxu0 0
        %2025 = vmatpush1.bf16.msra.mxu0 0
        %2026 = vmatprep.subr.bf16.mxu0 0
        %2027 = vmatpush1.bf16.msra.mxu0 0
        %2028 = vmatprep.subr.bf16.mxu0 0
        %2029 = vmatpush1.bf16.msra.mxu0 0
        %2030 = vmatprep.subr.bf16.mxu0 0
        %2031 = vmatpush1.bf16.msra.mxu0 0
        %2032 = vmatprep.mubr.bf16.mxu0 0
        %2033 = vmatmul.mubr.bf16.gmra.mrb[0].mxu0 %v1946
        %v2034 = vpop.f32.mrb[0].mxu0
        %v2035 = vadd.f32 0.0, %v2034
        %v2036 = vpop.f32.mrb[0].mxu0
        %v2037 = vpop.f32.mrb[0].mxu0
        %v2038 = vadd.f32 0.0, %v2037
        %v2039 = vpop.f32.mrb[0].mxu0
        %2040 = vmatprep.mubr.bf16.mxu0 0
        %2041 = vmatmul.mubr.bf16.gmra.mrb[0].mxu0 %v1948
        %v2042 = vpop.f32.mrb[0].mxu0
        %v2043 = vadd.f32 0.0, %v2042
        %v2044 = vpop.f32.mrb[0].mxu0
        %v2045 = vpop.f32.mrb[0].mxu0
        %v2046 = vadd.f32 0.0, %v2045
        %v2047 = vpop.f32.mrb[0].mxu0
        %2048 = vmatprep.mubr.bf16.mxu0 0
        %2049 = vmatmul.mubr.bf16.gmra.mrb[0].mxu0 %v1947
        %v2050 = vpop.f32.mrb[0].mxu0
        %v2051 = vadd.f32 0.0, %v2050
        %v2052 = vpop.f32.mrb[0].mxu0
        %v2053 = vpop.f32.mrb[0].mxu0
        %v2054 = vpop.f32.mrb[0].mxu0
        %2055 = vdwg.mxu0
        %v2056 = vadd.f32 %v1919, %v2035
        %v2057 = vadd.f32 %v1920, %v2038
        %v2058 = vadd.f32 %v1921, %v2043
        %v2059 = vadd.f32 %v1922, %v2046
        %v2060 = vadd.f32 %v1923, %v2051
        %s2061 = scalar_lea.vmem %s4, 256
        %v2062 = vld [vmem:[%s2061] sm:$0xf]
        %v2063 = vld [vmem:[%s2061 + $0x4] sm:$0xf]
        %v2064 = vld [vmem:[%s2061 + $0x8] sm:$0xf]
        %v2065 = vld [vmem:[%s2061 + $0xc] sm:$0xf]
        %v2066 = vld [vmem:[%s2061 + $0x10] sm:$0xf]
        %v2067 = vld [vmem:[%s2061 + $0x14] sm:$0xf]
        %v2068 = vld [vmem:[%s2061 + $0x18] sm:$0xf]
        %v2069 = vld [vmem:[%s2061 + $0x1c] sm:$0xf]
        %v2070 = vld [vmem:[%s2061 + $0x20] sm:$0xf]
        %v2071 = vld [vmem:[%s2061 + $0x24] sm:$0xf]
        %v2072 = vld [vmem:[%s2061 + $0x28] sm:$0xf]
        %v2073 = vld [vmem:[%s2061 + $0x2c] sm:$0xf]
        %v2074 = vld [vmem:[%s2061 + $0x30] sm:$0xf]
        %v2075 = vld [vmem:[%s2061 + $0x34] sm:$0xf]
        %v2076 = vld [vmem:[%s2061 + $0x38] sm:$0xf]
        %v2077 = vld [vmem:[%s2061 + $0x3c] sm:$0xf]
        %v2094 = vunpack.c.l.b16 %v2062
        %v2095 = vunpack.c.l.b16 %v2063
        %v2096 = vunpack.c.l.b16 %v2064
        %v2097 = vunpack.c.l.b16 %v2065
        %v2098 = vunpack.c.l.b16 %v2066
        %v2099 = vunpack.c.l.b16 %v2067
        %v2100 = vunpack.c.l.b16 %v2068
        %v2101 = vunpack.c.l.b16 %v2069
        %v2102 = vunpack.c.l.b16 %v2070
        %v2103 = vunpack.c.l.b16 %v2071
        %v2104 = vunpack.c.l.b16 %v2072
        %v2105 = vunpack.c.l.b16 %v2073
        %v2106 = vunpack.c.l.b16 %v2074
        %v2107 = vunpack.c.l.b16 %v2075
        %v2108 = vunpack.c.l.b16 %v2076
        %v2109 = vunpack.c.l.b16 %v2077
        %v2110 = vpack.c.b16 %v2095, %v2094
        %v2111 = vpack.c.b16 %v2097, %v2096
        %v2112 = vpack.c.b16 %v2099, %v2098
        %v2113 = vpack.c.b16 %v2101, %v2100
        %v2114 = vpack.c.b16 %v2103, %v2102
        %v2115 = vpack.c.b16 %v2105, %v2104
        %v2116 = vpack.c.b16 %v2107, %v2106
        %v2117 = vpack.c.b16 %v2109, %v2108
        %2126 = vmatprep.subr.bf16.mxu0 0
        %2127 = vmatpush1.bf16.msra.mxu0 %v2110
        %2128 = vmatprep.subr.bf16.mxu0 0
        %2129 = vmatpush1.bf16.msra.mxu0 %v2111
        %2130 = vmatprep.subr.bf16.mxu0 0
        %2131 = vmatpush1.bf16.msra.mxu0 %v2112
        %2132 = vmatprep.subr.bf16.mxu0 0
        %2133 = vmatpush1.bf16.msra.mxu0 %v2113
        %2134 = vmatprep.subr.bf16.mxu0 0
        %2135 = vmatpush1.bf16.msra.mxu0 %v2114
        %2136 = vmatprep.subr.bf16.mxu0 0
        %2137 = vmatpush1.bf16.msra.mxu0 %v2115
        %2138 = vmatprep.subr.bf16.mxu0 0
        %2139 = vmatpush1.bf16.msra.mxu0 %v2116
        %2140 = vmatprep.subr.bf16.mxu0 0
        %2141 = vmatpush1.bf16.msra.mxu0 %v2117
        %2142 = vmatprep.subr.bf16.mxu0 0
        %2143 = vmatpush1.bf16.msra.mxu0 0
        %2144 = vmatprep.subr.bf16.mxu0 0
        %2145 = vmatpush1.bf16.msra.mxu0 0
        %2146 = vmatprep.subr.bf16.mxu0 0
        %2147 = vmatpush1.bf16.msra.mxu0 0
        %2148 = vmatprep.subr.bf16.mxu0 0
        %2149 = vmatpush1.bf16.msra.mxu0 0
        %2150 = vmatprep.subr.bf16.mxu0 0
        %2151 = vmatpush1.bf16.msra.mxu0 0
        %2152 = vmatprep.subr.bf16.mxu0 0
        %2153 = vmatpush1.bf16.msra.mxu0 0
        %2154 = vmatprep.subr.bf16.mxu0 0
        %2155 = vmatpush1.bf16.msra.mxu0 0
        %2156 = vmatprep.subr.bf16.mxu0 0
        %2157 = vmatpush1.bf16.msra.mxu0 0
        %2158 = vmatprep.mubr.bf16.mxu0 0
        %2159 = vmatmul.mubr.bf16.gmra.mrb[0].mxu0 %v1532
        %v2160 = vpop.f32.mrb[0].mxu0
        %v2161 = vadd.f32 0.0, %v2160
        %v2162 = vpop.f32.mrb[0].mxu0
        %v2163 = vpop.f32.mrb[0].mxu0
        %v2164 = vadd.f32 0.0, %v2163
        %v2165 = vpop.f32.mrb[0].mxu0
        %2166 = vmatprep.mubr.bf16.mxu0 0
        %2167 = vmatmul.mubr.bf16.gmra.mrb[0].mxu0 %v1533
        %v2168 = vpop.f32.mrb[0].mxu0
        %v2169 = vadd.f32 0.0, %v2168
        %v2170 = vpop.f32.mrb[0].mxu0
        %v2171 = vpop.f32.mrb[0].mxu0
        %v2172 = vadd.f32 0.0, %v2171
        %v2173 = vpop.f32.mrb[0].mxu0
        %2174 = vmatprep.mubr.bf16.mxu0 0
        %2175 = vmatmul.mubr.bf16.gmra.mrb[0].mxu0 %v1534
        %v2176 = vpop.f32.mrb[0].mxu0
        %v2177 = vadd.f32 0.0, %v2176
        %v2178 = vpop.f32.mrb[0].mxu0
        %v2179 = vpop.f32.mrb[0].mxu0
        %v2180 = vpop.f32.mrb[0].mxu0
        %2181 = vdwg.mxu0
        %v2182 = vadd.f32 %v2056, %v2161
        %v2183 = vadd.f32 %v2057, %v2164
        %v2184 = vadd.f32 %v2058, %v2169
        %v2185 = vadd.f32 %v2059, %v2172
        %v2186 = vadd.f32 %v2060, %v2177
        %s2187 = scalar_lea.vmem %s4, 320
        %v2188 = vld [vmem:[%s2187] sm:$0xf]
        %v2189 = vld [vmem:[%s2187 + $0x4] sm:$0xf]
        %v2190 = vld [vmem:[%s2187 + $0x8] sm:$0xf]
        %v2191 = vld [vmem:[%s2187 + $0xc] sm:$0xf]
        %v2192 = vld [vmem:[%s2187 + $0x10] sm:$0xf]
        %v2193 = vld [vmem:[%s2187 + $0x14] sm:$0xf]
        %v2194 = vld [vmem:[%s2187 + $0x18] sm:$0xf]
        %v2195 = vld [vmem:[%s2187 + $0x1c] sm:$0xf]
        %v2196 = vld [vmem:[%s2187 + $0x20] sm:$0xf]
        %v2197 = vld [vmem:[%s2187 + $0x24] sm:$0xf]
        %v2198 = vld [vmem:[%s2187 + $0x28] sm:$0xf]
        %v2199 = vld [vmem:[%s2187 + $0x2c] sm:$0xf]
        %v2200 = vld [vmem:[%s2187 + $0x30] sm:$0xf]
        %v2201 = vld [vmem:[%s2187 + $0x34] sm:$0xf]
        %v2202 = vld [vmem:[%s2187 + $0x38] sm:$0xf]
        %v2203 = vld [vmem:[%s2187 + $0x3c] sm:$0xf]
        %v2207 = vrot.slane %v1534, 4
        %v2208 = vrot.slane %v1535, 4
        %v2209 = vsel %vm1581, %v2207, %v2208
        %v2210 = vrot.slane %v1536, 4
        %v2211 = vsel %vm1581, %v2208, %v2210
        %v2231 = vunpack.c.l.b16 %v2188
        %v2232 = vunpack.c.l.b16 %v2189
        %v2233 = vunpack.c.l.b16 %v2190
        %v2234 = vunpack.c.l.b16 %v2191
        %v2235 = vunpack.c.l.b16 %v2192
        %v2236 = vunpack.c.l.b16 %v2193
        %v2237 = vunpack.c.l.b16 %v2194
        %v2238 = vunpack.c.l.b16 %v2195
        %v2239 = vunpack.c.l.b16 %v2196
        %v2240 = vunpack.c.l.b16 %v2197
        %v2241 = vunpack.c.l.b16 %v2198
        %v2242 = vunpack.c.l.b16 %v2199
        %v2243 = vunpack.c.l.b16 %v2200
        %v2244 = vunpack.c.l.b16 %v2201
        %v2245 = vunpack.c.l.b16 %v2202
        %v2246 = vunpack.c.l.b16 %v2203
        %v2247 = vpack.c.b16 %v2232, %v2231
        %v2248 = vpack.c.b16 %v2234, %v2233
        %v2249 = vpack.c.b16 %v2236, %v2235
        %v2250 = vpack.c.b16 %v2238, %v2237
        %v2251 = vpack.c.b16 %v2240, %v2239
        %v2252 = vpack.c.b16 %v2242, %v2241
        %v2253 = vpack.c.b16 %v2244, %v2243
        %v2254 = vpack.c.b16 %v2246, %v2245
        %2263 = vmatprep.subr.bf16.mxu0 0
        %2264 = vmatpush1.bf16.msra.mxu0 %v2247
        %2265 = vmatprep.subr.bf16.mxu0 0
        %2266 = vmatpush1.bf16.msra.mxu0 %v2248
        %2267 = vmatprep.subr.bf16.mxu0 0
        %2268 = vmatpush1.bf16.msra.mxu0 %v2249
        %2269 = vmatprep.subr.bf16.mxu0 0
        %2270 = vmatpush1.bf16.msra.mxu0 %v2250
        %2271 = vmatprep.subr.bf16.mxu0 0
        %2272 = vmatpush1.bf16.msra.mxu0 %v2251
        %2273 = vmatprep.subr.bf16.mxu0 0
        %2274 = vmatpush1.bf16.msra.mxu0 %v2252
        %2275 = vmatprep.subr.bf16.mxu0 0
        %2276 = vmatpush1.bf16.msra.mxu0 %v2253
        %2277 = vmatprep.subr.bf16.mxu0 0
        %2278 = vmatpush1.bf16.msra.mxu0 %v2254
        %2279 = vmatprep.subr.bf16.mxu0 0
        %2280 = vmatpush1.bf16.msra.mxu0 0
        %2281 = vmatprep.subr.bf16.mxu0 0
        %2282 = vmatpush1.bf16.msra.mxu0 0
        %2283 = vmatprep.subr.bf16.mxu0 0
        %2284 = vmatpush1.bf16.msra.mxu0 0
        %2285 = vmatprep.subr.bf16.mxu0 0
        %2286 = vmatpush1.bf16.msra.mxu0 0
        %2287 = vmatprep.subr.bf16.mxu0 0
        %2288 = vmatpush1.bf16.msra.mxu0 0
        %2289 = vmatprep.subr.bf16.mxu0 0
        %2290 = vmatpush1.bf16.msra.mxu0 0
        %2291 = vmatprep.subr.bf16.mxu0 0
        %2292 = vmatpush1.bf16.msra.mxu0 0
        %2293 = vmatprep.subr.bf16.mxu0 0
        %2294 = vmatpush1.bf16.msra.mxu0 0
        %2295 = vmatprep.mubr.bf16.mxu0 0
        %2296 = vmatmul.mubr.bf16.gmra.mrb[0].mxu0 %v2209
        %v2297 = vpop.f32.mrb[0].mxu0
        %v2298 = vadd.f32 0.0, %v2297
        %v2299 = vpop.f32.mrb[0].mxu0
        %v2300 = vpop.f32.mrb[0].mxu0
        %v2301 = vadd.f32 0.0, %v2300
        %v2302 = vpop.f32.mrb[0].mxu0
        %2303 = vmatprep.mubr.bf16.mxu0 0
        %2304 = vmatmul.mubr.bf16.gmra.mrb[0].mxu0 %v2211
        %v2305 = vpop.f32.mrb[0].mxu0
        %v2306 = vadd.f32 0.0, %v2305
        %v2307 = vpop.f32.mrb[0].mxu0
        %v2308 = vpop.f32.mrb[0].mxu0
        %v2309 = vadd.f32 0.0, %v2308
        %v2310 = vpop.f32.mrb[0].mxu0
        %2311 = vmatprep.mubr.bf16.mxu0 0
        %2312 = vmatmul.mubr.bf16.gmra.mrb[0].mxu0 %v2210
        %v2313 = vpop.f32.mrb[0].mxu0
        %v2314 = vadd.f32 0.0, %v2313
        %v2315 = vpop.f32.mrb[0].mxu0
        %v2316 = vpop.f32.mrb[0].mxu0
        %v2317 = vpop.f32.mrb[0].mxu0
        %2318 = vdwg.mxu0
        %v2319 = vadd.f32 %v2182, %v2298
        %v2320 = vadd.f32 %v2183, %v2301
        %v2321 = vadd.f32 %v2184, %v2306
        %v2322 = vadd.f32 %v2185, %v2309
        %v2323 = vadd.f32 %v2186, %v2314
        %s2324 = scalar_lea.vmem %s4, 384
        %v2325 = vld [vmem:[%s2324] sm:$0xf]
        %v2326 = vld [vmem:[%s2324 + $0x4] sm:$0xf]
        %v2327 = vld [vmem:[%s2324 + $0x8] sm:$0xf]
        %v2328 = vld [vmem:[%s2324 + $0xc] sm:$0xf]
        %v2329 = vld [vmem:[%s2324 + $0x10] sm:$0xf]
        %v2330 = vld [vmem:[%s2324 + $0x14] sm:$0xf]
        %v2331 = vld [vmem:[%s2324 + $0x18] sm:$0xf]
        %v2332 = vld [vmem:[%s2324 + $0x1c] sm:$0xf]
        %v2333 = vld [vmem:[%s2324 + $0x20] sm:$0xf]
        %v2334 = vld [vmem:[%s2324 + $0x24] sm:$0xf]
        %v2335 = vld [vmem:[%s2324 + $0x28] sm:$0xf]
        %v2336 = vld [vmem:[%s2324 + $0x2c] sm:$0xf]
        %v2337 = vld [vmem:[%s2324 + $0x30] sm:$0xf]
        %v2338 = vld [vmem:[%s2324 + $0x34] sm:$0xf]
        %v2339 = vld [vmem:[%s2324 + $0x38] sm:$0xf]
        %v2340 = vld [vmem:[%s2324 + $0x3c] sm:$0xf]
        %v2357 = vunpack.c.l.b16 %v2325
        %v2358 = vunpack.c.l.b16 %v2326
        %v2359 = vunpack.c.l.b16 %v2327
        %v2360 = vunpack.c.l.b16 %v2328
        %v2361 = vunpack.c.l.b16 %v2329
        %v2362 = vunpack.c.l.b16 %v2330
        %v2363 = vunpack.c.l.b16 %v2331
        %v2364 = vunpack.c.l.b16 %v2332
        %v2365 = vunpack.c.l.b16 %v2333
        %v2366 = vunpack.c.l.b16 %v2334
        %v2367 = vunpack.c.l.b16 %v2335
        %v2368 = vunpack.c.l.b16 %v2336
        %v2369 = vunpack.c.l.b16 %v2337
        %v2370 = vunpack.c.l.b16 %v2338
        %v2371 = vunpack.c.l.b16 %v2339
        %v2372 = vunpack.c.l.b16 %v2340
        %v2373 = vpack.c.b16 %v2358, %v2357
        %v2374 = vpack.c.b16 %v2360, %v2359
        %v2375 = vpack.c.b16 %v2362, %v2361
        %v2376 = vpack.c.b16 %v2364, %v2363
        %v2377 = vpack.c.b16 %v2366, %v2365
        %v2378 = vpack.c.b16 %v2368, %v2367
        %v2379 = vpack.c.b16 %v2370, %v2369
        %v2380 = vpack.c.b16 %v2372, %v2371
        %2389 = vmatprep.subr.bf16.mxu0 0
        %2390 = vmatpush1.bf16.msra.mxu0 %v2373
        %2391 = vmatprep.subr.bf16.mxu0 0
        %2392 = vmatpush1.bf16.msra.mxu0 %v2374
        %2393 = vmatprep.subr.bf16.mxu0 0
        %2394 = vmatpush1.bf16.msra.mxu0 %v2375
        %2395 = vmatprep.subr.bf16.mxu0 0
        %2396 = vmatpush1.bf16.msra.mxu0 %v2376
        %2397 = vmatprep.subr.bf16.mxu0 0
        %2398 = vmatpush1.bf16.msra.mxu0 %v2377
        %2399 = vmatprep.subr.bf16.mxu0 0
        %2400 = vmatpush1.bf16.msra.mxu0 %v2378
        %2401 = vmatprep.subr.bf16.mxu0 0
        %2402 = vmatpush1.bf16.msra.mxu0 %v2379
        %2403 = vmatprep.subr.bf16.mxu0 0
        %2404 = vmatpush1.bf16.msra.mxu0 %v2380
        %2405 = vmatprep.subr.bf16.mxu0 0
        %2406 = vmatpush1.bf16.msra.mxu0 0
        %2407 = vmatprep.subr.bf16.mxu0 0
        %2408 = vmatpush1.bf16.msra.mxu0 0
        %2409 = vmatprep.subr.bf16.mxu0 0
        %2410 = vmatpush1.bf16.msra.mxu0 0
        %2411 = vmatprep.subr.bf16.mxu0 0
        %2412 = vmatpush1.bf16.msra.mxu0 0
        %2413 = vmatprep.subr.bf16.mxu0 0
        %2414 = vmatpush1.bf16.msra.mxu0 0
        %2415 = vmatprep.subr.bf16.mxu0 0
        %2416 = vmatpush1.bf16.msra.mxu0 0
        %2417 = vmatprep.subr.bf16.mxu0 0
        %2418 = vmatpush1.bf16.msra.mxu0 0
        %2419 = vmatprep.subr.bf16.mxu0 0
        %2420 = vmatpush1.bf16.msra.mxu0 0
        %2421 = vmatprep.mubr.bf16.mxu0 0
        %2422 = vmatmul.mubr.bf16.gmra.mrb[0].mxu0 %v1537
        %v2423 = vpop.f32.mrb[0].mxu0
        %v2424 = vadd.f32 0.0, %v2423
        %v2425 = vpop.f32.mrb[0].mxu0
        %v2426 = vpop.f32.mrb[0].mxu0
        %v2427 = vadd.f32 0.0, %v2426
        %v2428 = vpop.f32.mrb[0].mxu0
        %2429 = vmatprep.mubr.bf16.mxu0 0
        %2430 = vmatmul.mubr.bf16.gmra.mrb[0].mxu0 %v1538
        %v2431 = vpop.f32.mrb[0].mxu0
        %v2432 = vadd.f32 0.0, %v2431
        %v2433 = vpop.f32.mrb[0].mxu0
        %v2434 = vpop.f32.mrb[0].mxu0
        %v2435 = vadd.f32 0.0, %v2434
        %v2436 = vpop.f32.mrb[0].mxu0
        %2437 = vmatprep.mubr.bf16.mxu0 0
        %2438 = vmatmul.mubr.bf16.gmra.mrb[0].mxu0 %v1539
        %v2439 = vpop.f32.mrb[0].mxu0
        %v2440 = vadd.f32 0.0, %v2439
        %v2441 = vpop.f32.mrb[0].mxu0
        %v2442 = vpop.f32.mrb[0].mxu0
        %v2443 = vpop.f32.mrb[0].mxu0
        %2444 = vdwg.mxu0
        %v2445 = vadd.f32 %v2319, %v2424
        %v2446 = vadd.f32 %v2320, %v2427
        %v2447 = vadd.f32 %v2321, %v2432
        %v2448 = vadd.f32 %v2322, %v2435
        %v2449 = vadd.f32 %v2323, %v2440
        %s2450 = scalar_lea.vmem %s4, 448
        %v2451 = vld [vmem:[%s2450] sm:$0xf]
        %v2452 = vld [vmem:[%s2450 + $0x4] sm:$0xf]
        %v2453 = vld [vmem:[%s2450 + $0x8] sm:$0xf]
        %v2454 = vld [vmem:[%s2450 + $0xc] sm:$0xf]
        %v2455 = vld [vmem:[%s2450 + $0x10] sm:$0xf]
        %v2456 = vld [vmem:[%s2450 + $0x14] sm:$0xf]
        %v2457 = vld [vmem:[%s2450 + $0x18] sm:$0xf]
        %v2458 = vld [vmem:[%s2450 + $0x1c] sm:$0xf]
        %v2459 = vld [vmem:[%s2450 + $0x20] sm:$0xf]
        %v2460 = vld [vmem:[%s2450 + $0x24] sm:$0xf]
        %v2461 = vld [vmem:[%s2450 + $0x28] sm:$0xf]
        %v2462 = vld [vmem:[%s2450 + $0x2c] sm:$0xf]
        %v2463 = vld [vmem:[%s2450 + $0x30] sm:$0xf]
        %v2464 = vld [vmem:[%s2450 + $0x34] sm:$0xf]
        %v2465 = vld [vmem:[%s2450 + $0x38] sm:$0xf]
        %v2466 = vld [vmem:[%s2450 + $0x3c] sm:$0xf]
        %v2470 = vrot.slane %v1539, 4
        %v2471 = vrot.slane %v1540, 4
        %v2472 = vsel %vm1581, %v2470, %v2471
        %v2473 = vrot.slane %v1541, 4
        %v2474 = vsel %vm1581, %v2471, %v2473
        %v2494 = vunpack.c.l.b16 %v2451
        %v2495 = vunpack.c.l.b16 %v2452
        %v2496 = vunpack.c.l.b16 %v2453
        %v2497 = vunpack.c.l.b16 %v2454
        %v2498 = vunpack.c.l.b16 %v2455
        %v2499 = vunpack.c.l.b16 %v2456
        %v2500 = vunpack.c.l.b16 %v2457
        %v2501 = vunpack.c.l.b16 %v2458
        %v2502 = vunpack.c.l.b16 %v2459
        %v2503 = vunpack.c.l.b16 %v2460
        %v2504 = vunpack.c.l.b16 %v2461
        %v2505 = vunpack.c.l.b16 %v2462
        %v2506 = vunpack.c.l.b16 %v2463
        %v2507 = vunpack.c.l.b16 %v2464
        %v2508 = vunpack.c.l.b16 %v2465
        %v2509 = vunpack.c.l.b16 %v2466
        %v2510 = vpack.c.b16 %v2495, %v2494
        %v2511 = vpack.c.b16 %v2497, %v2496
        %v2512 = vpack.c.b16 %v2499, %v2498
        %v2513 = vpack.c.b16 %v2501, %v2500
        %v2514 = vpack.c.b16 %v2503, %v2502
        %v2515 = vpack.c.b16 %v2505, %v2504
        %v2516 = vpack.c.b16 %v2507, %v2506
        %v2517 = vpack.c.b16 %v2509, %v2508
        %2526 = vmatprep.subr.bf16.mxu0 0
        %2527 = vmatpush1.bf16.msra.mxu0 %v2510
        %2528 = vmatprep.subr.bf16.mxu0 0
        %2529 = vmatpush1.bf16.msra.mxu0 %v2511
        %2530 = vmatprep.subr.bf16.mxu0 0
        %2531 = vmatpush1.bf16.msra.mxu0 %v2512
        %2532 = vmatprep.subr.bf16.mxu0 0
        %2533 = vmatpush1.bf16.msra.mxu0 %v2513
        %2534 = vmatprep.subr.bf16.mxu0 0
        %2535 = vmatpush1.bf16.msra.mxu0 %v2514
        %2536 = vmatprep.subr.bf16.mxu0 0
        %2537 = vmatpush1.bf16.msra.mxu0 %v2515
        %2538 = vmatprep.subr.bf16.mxu0 0
        %2539 = vmatpush1.bf16.msra.mxu0 %v2516
        %2540 = vmatprep.subr.bf16.mxu0 0
        %2541 = vmatpush1.bf16.msra.mxu0 %v2517
        %2542 = vmatprep.subr.bf16.mxu0 0
        %2543 = vmatpush1.bf16.msra.mxu0 0
        %2544 = vmatprep.subr.bf16.mxu0 0
        %2545 = vmatpush1.bf16.msra.mxu0 0
        %2546 = vmatprep.subr.bf16.mxu0 0
        %2547 = vmatpush1.bf16.msra.mxu0 0
        %2548 = vmatprep.subr.bf16.mxu0 0
        %2549 = vmatpush1.bf16.msra.mxu0 0
        %2550 = vmatprep.subr.bf16.mxu0 0
        %2551 = vmatpush1.bf16.msra.mxu0 0
        %2552 = vmatprep.subr.bf16.mxu0 0
        %2553 = vmatpush1.bf16.msra.mxu0 0
        %2554 = vmatprep.subr.bf16.mxu0 0
        %2555 = vmatpush1.bf16.msra.mxu0 0
        %2556 = vmatprep.subr.bf16.mxu0 0
        %2557 = vmatpush1.bf16.msra.mxu0 0
        %2558 = vmatprep.mubr.bf16.mxu0 0
        %2559 = vmatmul.mubr.bf16.gmra.mrb[0].mxu0 %v2472
        %v2560 = vpop.f32.mrb[0].mxu0
        %v2561 = vadd.f32 0.0, %v2560
        %v2562 = vpop.f32.mrb[0].mxu0
        %v2563 = vpop.f32.mrb[0].mxu0
        %v2564 = vadd.f32 0.0, %v2563
        %v2565 = vpop.f32.mrb[0].mxu0
        %2566 = vmatprep.mubr.bf16.mxu0 0
        %2567 = vmatmul.mubr.bf16.gmra.mrb[0].mxu0 %v2474
        %v2568 = vpop.f32.mrb[0].mxu0
        %v2569 = vadd.f32 0.0, %v2568
        %v2570 = vpop.f32.mrb[0].mxu0
        %v2571 = vpop.f32.mrb[0].mxu0
        %v2572 = vadd.f32 0.0, %v2571
        %v2573 = vpop.f32.mrb[0].mxu0
        %2574 = vmatprep.mubr.bf16.mxu0 0
        %2575 = vmatmul.mubr.bf16.gmra.mrb[0].mxu0 %v2473
        %v2576 = vpop.f32.mrb[0].mxu0
        %v2577 = vadd.f32 0.0, %v2576
        %v2578 = vpop.f32.mrb[0].mxu0
        %v2579 = vpop.f32.mrb[0].mxu0
        %v2580 = vpop.f32.mrb[0].mxu0
        %2581 = vdwg.mxu0
        %v2582 = vadd.f32 %v2445, %v2561
        %v2583 = vadd.f32 %v2446, %v2564
        %v2584 = vadd.f32 %v2447, %v2569
        %v2585 = vadd.f32 %v2448, %v2572
        %v2586 = vadd.f32 %v2449, %v2577
        %s2587 = scalar_lea.vmem %s4, 512
        %v2588 = vld [vmem:[%s2587] sm:$0xf]
        %v2589 = vld [vmem:[%s2587 + $0x4] sm:$0xf]
        %v2590 = vld [vmem:[%s2587 + $0x8] sm:$0xf]
        %v2591 = vld [vmem:[%s2587 + $0xc] sm:$0xf]
        %v2592 = vld [vmem:[%s2587 + $0x10] sm:$0xf]
        %v2593 = vld [vmem:[%s2587 + $0x14] sm:$0xf]
        %v2594 = vld [vmem:[%s2587 + $0x18] sm:$0xf]
        %v2595 = vld [vmem:[%s2587 + $0x1c] sm:$0xf]
        %v2596 = vld [vmem:[%s2587 + $0x20] sm:$0xf]
        %v2597 = vld [vmem:[%s2587 + $0x24] sm:$0xf]
        %v2598 = vld [vmem:[%s2587 + $0x28] sm:$0xf]
        %v2599 = vld [vmem:[%s2587 + $0x2c] sm:$0xf]
        %v2600 = vld [vmem:[%s2587 + $0x30] sm:$0xf]
        %v2601 = vld [vmem:[%s2587 + $0x34] sm:$0xf]
        %v2602 = vld [vmem:[%s2587 + $0x38] sm:$0xf]
        %v2603 = vld [vmem:[%s2587 + $0x3c] sm:$0xf]
        %v2620 = vunpack.c.l.b16 %v2588
        %v2621 = vunpack.c.l.b16 %v2589
        %v2622 = vunpack.c.l.b16 %v2590
        %v2623 = vunpack.c.l.b16 %v2591
        %v2624 = vunpack.c.l.b16 %v2592
        %v2625 = vunpack.c.l.b16 %v2593
        %v2626 = vunpack.c.l.b16 %v2594
        %v2627 = vunpack.c.l.b16 %v2595
        %v2628 = vunpack.c.l.b16 %v2596
        %v2629 = vunpack.c.l.b16 %v2597
        %v2630 = vunpack.c.l.b16 %v2598
        %v2631 = vunpack.c.l.b16 %v2599
        %v2632 = vunpack.c.l.b16 %v2600
        %v2633 = vunpack.c.l.b16 %v2601
        %v2634 = vunpack.c.l.b16 %v2602
        %v2635 = vunpack.c.l.b16 %v2603
        %v2636 = vpack.c.b16 %v2621, %v2620
        %v2637 = vpack.c.b16 %v2623, %v2622
        %v2638 = vpack.c.b16 %v2625, %v2624
        %v2639 = vpack.c.b16 %v2627, %v2626
        %v2640 = vpack.c.b16 %v2629, %v2628
        %v2641 = vpack.c.b16 %v2631, %v2630
        %v2642 = vpack.c.b16 %v2633, %v2632
        %v2643 = vpack.c.b16 %v2635, %v2634
        %2652 = vmatprep.subr.bf16.mxu0 0
        %2653 = vmatpush1.bf16.msra.mxu0 %v2636
        %2654 = vmatprep.subr.bf16.mxu0 0
        %2655 = vmatpush1.bf16.msra.mxu0 %v2637
        %2656 = vmatprep.subr.bf16.mxu0 0
        %2657 = vmatpush1.bf16.msra.mxu0 %v2638
        %2658 = vmatprep.subr.bf16.mxu0 0
        %2659 = vmatpush1.bf16.msra.mxu0 %v2639
        %2660 = vmatprep.subr.bf16.mxu0 0
        %2661 = vmatpush1.bf16.msra.mxu0 %v2640
        %2662 = vmatprep.subr.bf16.mxu0 0
        %2663 = vmatpush1.bf16.msra.mxu0 %v2641
        %2664 = vmatprep.subr.bf16.mxu0 0
        %2665 = vmatpush1.bf16.msra.mxu0 %v2642
        %2666 = vmatprep.subr.bf16.mxu0 0
        %2667 = vmatpush1.bf16.msra.mxu0 %v2643
        %2668 = vmatprep.subr.bf16.mxu0 0
        %2669 = vmatpush1.bf16.msra.mxu0 0
        %2670 = vmatprep.subr.bf16.mxu0 0
        %2671 = vmatpush1.bf16.msra.mxu0 0
        %2672 = vmatprep.subr.bf16.mxu0 0
        %2673 = vmatpush1.bf16.msra.mxu0 0
        %2674 = vmatprep.subr.bf16.mxu0 0
        %2675 = vmatpush1.bf16.msra.mxu0 0
        %2676 = vmatprep.subr.bf16.mxu0 0
        %2677 = vmatpush1.bf16.msra.mxu0 0
        %2678 = vmatprep.subr.bf16.mxu0 0
        %2679 = vmatpush1.bf16.msra.mxu0 0
        %2680 = vmatprep.subr.bf16.mxu0 0
        %2681 = vmatpush1.bf16.msra.mxu0 0
        %2682 = vmatprep.subr.bf16.mxu0 0
        %2683 = vmatpush1.bf16.msra.mxu0 0
        %2684 = vmatprep.mubr.bf16.mxu0 0
        %2685 = vmatmul.mubr.bf16.gmra.mrb[0].mxu0 %v1542
        %v2686 = vpop.f32.mrb[0].mxu0
        %v2687 = vadd.f32 0.0, %v2686
        %v2688 = vpop.f32.mrb[0].mxu0
        %v2689 = vpop.f32.mrb[0].mxu0
        %v2690 = vadd.f32 0.0, %v2689
        %v2691 = vpop.f32.mrb[0].mxu0
        %2692 = vmatprep.mubr.bf16.mxu0 0
        %2693 = vmatmul.mubr.bf16.gmra.mrb[0].mxu0 %v1543
        %v2694 = vpop.f32.mrb[0].mxu0
        %v2695 = vadd.f32 0.0, %v2694
        %v2696 = vpop.f32.mrb[0].mxu0
        %v2697 = vpop.f32.mrb[0].mxu0
        %v2698 = vadd.f32 0.0, %v2697
        %v2699 = vpop.f32.mrb[0].mxu0
        %2700 = vmatprep.mubr.bf16.mxu0 0
        %2701 = vmatmul.mubr.bf16.gmra.mrb[0].mxu0 %v1544
        %v2702 = vpop.f32.mrb[0].mxu0
        %v2703 = vadd.f32 0.0, %v2702
        %v2704 = vpop.f32.mrb[0].mxu0
        %v2705 = vpop.f32.mrb[0].mxu0
        %v2706 = vpop.f32.mrb[0].mxu0
        %2707 = vdwg.mxu0
        %v2708 = vadd.f32 %v2582, %v2687
        %v2709 = vadd.f32 %v2583, %v2690
        %v2710 = vadd.f32 %v2584, %v2695
        %v2711 = vadd.f32 %v2585, %v2698
        %v2712 = vadd.f32 %v2586, %v2703
        %v2713 = vld [vmem:[%s5] sm:$0x1]
        %v2714 = vlaneseq
        %v2715 = vshrl.u32 %v2714, 7
        %v2716 = vsub.s32 0, %v2715
        %v2717 = vrot.slane %v2713, %v2716
        %v2718 = vadd.f32 %v2708, %v2717
        %v2719 = vadd.f32 %v2709, %v2717
        %v2720 = vadd.f32 %v2710, %v2717
        %v2721 = vadd.f32 %v2711, %v2717
        %v2722 = vadd.f32 %v2712, %v2717
        %vm2723 = vcmask 523264
        %v2724 = vsel %vm2723, %v2718, -inf
        %2725 = vmax.xlane.f32.xlu0 %v2724
        %v2726 = vpop.xlane.xlu0 %2725
        %v2727 = vsel %vm2723, %v2719, -inf
        %2728 = vmax.xlane.f32.xlu0 %v2727
        %v2729 = vpop.xlane.xlu0 %2728
        %v2730 = vsel %vm2723, %v2720, -inf
        %2731 = vmax.xlane.f32.xlu0 %v2730
        %v2732 = vpop.xlane.xlu0 %2731
        %v2733 = vsel %vm2723, %v2721, -inf
        %2734 = vmax.xlane.f32.xlu0 %v2733
        %v2735 = vpop.xlane.xlu0 %2734
        %v2736 = vsel %vm2723, %v2722, -inf
        %2737 = vmax.xlane.f32.xlu0 %v2736
        %v2738 = vpop.xlane.xlu0 %2737
        %v2739 = vsub.f32 %v2718, %v2726
        %v2740 = vsub.f32 %v2719, %v2729
        %v2741 = vsub.f32 %v2720, %v2732
        %v2742 = vsub.f32 %v2721, %v2735
        %v2743 = vsub.f32 %v2722, %v2738
        %v2744 = vmul.f32 %v2739, 1.442695
        %v2745 = vpow.pop %v2744
        %v2746 = vmul.f32 %v2740, 1.442695
        %v2747 = vpow.pop %v2746
        %v2748 = vmul.f32 %v2741, 1.442695
        %v2749 = vpow.pop %v2748
        %v2750 = vmul.f32 %v2742, 1.442695
        %v2751 = vpow.pop %v2750
        %v2752 = vmul.f32 %v2743, 1.442695
        %v2753 = vpow.pop %v2752
        %v2754 = vsel %vm2723, %v2745, 0.0
        %2755 = vadd.xlane.f32.xlu0 %v2754
        %v2756 = vpop.xlane.xlu0 %2755
        %v2757 = vsel %vm2723, %v2747, 0.0
        %2758 = vadd.xlane.f32.xlu0 %v2757
        %v2759 = vpop.xlane.xlu0 %2758
        %v2760 = vsel %vm2723, %v2749, 0.0
        %2761 = vadd.xlane.f32.xlu0 %v2760
        %v2762 = vpop.xlane.xlu0 %2761
        %v2763 = vsel %vm2723, %v2751, 0.0
        %2764 = vadd.xlane.f32.xlu0 %v2763
        %v2765 = vpop.xlane.xlu0 %2764
        %v2766 = vsel %vm2723, %v2753, 0.0
        %2767 = vadd.xlane.f32.xlu0 %v2766
        %v2768 = vpop.xlane.xlu0 %2767
        %v2769 = vrcp.pop %v2756
        %v2770 = vmul.f32 %v2745, %v2769
        %v2771 = vrcp.pop %v2759
        %v2772 = vmul.f32 %v2747, %v2771
        %v2773 = vrcp.pop %v2762
        %v2774 = vmul.f32 %v2749, %v2773
        %v2775 = vrcp.pop %v2765
        %v2776 = vmul.f32 %v2751, %v2775
        %v2777 = vrcp.pop %v2768
        %v2778 = vmul.f32 %v2753, %v2777
        %v2779 = vld [vmem:[%s5 + $0x1] sm:$0x1]
        %v2780 = vlaneseq
        %v2781 = vshrl.u32 %v2780, 7
        %v2782 = vsub.s32 0, %v2781
        %v2783 = vrot.slane %v2779, %v2782
        %v2784 = vmul.f32 %v2770, %v2783
        %v2785 = vmul.f32 %v2772, %v2783
        %v2786 = vmul.f32 %v2774, %v2783
        %v2787 = vmul.f32 %v2776, %v2783
        %v2788 = vmul.f32 %v2778, %v2783
        %v2789 = vld [vmem:[%s5 + $0x2] sm:$0x1]
        %v2790 = vlaneseq
        %v2791 = vshrl.u32 %v2790, 7
        %v2792 = vsub.s32 0, %v2791
        %v2793 = vrot.slane %v2789, %v2792
        %v2794 = vadd.f32 %v2784, %v2793
        %v2795 = vadd.f32 %v2785, %v2793
        %v2796 = vadd.f32 %v2786, %v2793
        %v2797 = vadd.f32 %v2787, %v2793
        %v2798 = vadd.f32 %v2788, %v2793
        %v2799 = vpack.c.bf16 %v2795, %v2794
        %v2800 = vpack.c.bf16 %v2797, %v2796
        %v2801 = vpack.c.bf16 %v2798, %v2798
        %v2802 = vld [vmem:[%s6] sm:$0xf]
        %v2803 = vld [vmem:[%s6 + $0x4] sm:$0xf]
        %v2804 = vld [vmem:[%s6 + $0x8] sm:$0xf]
        %v2805 = vld [vmem:[%s6 + $0xc] sm:$0xf]
        %v2806 = vld [vmem:[%s6 + $0x10] sm:$0xf]
        %v2807 = vld [vmem:[%s6 + $0x14] sm:$0xf]
        %v2808 = vld [vmem:[%s6 + $0x18] sm:$0xf]
        %v2809 = vld [vmem:[%s6 + $0x1c] sm:$0xf]
        %v2810 = vld [vmem:[%s6 + $0x20] sm:$0xf]
        %v2820 = vunpack.c.l.b16 %v2802
        %v2821 = vunpack.c.l.b16 %v2803
        %v2822 = vunpack.c.l.b16 %v2804
        %v2823 = vunpack.c.l.b16 %v2805
        %v2824 = vunpack.c.l.b16 %v2806
        %v2825 = vunpack.c.l.b16 %v2807
        %v2826 = vunpack.c.l.b16 %v2808
        %v2827 = vunpack.c.l.b16 %v2809
        %v2828 = vunpack.c.l.b16 %v2810
        %v2829 = vpack.c.b16 %v2821, %v2820
        %v2830 = vpack.c.b16 %v2823, %v2822
        %v2831 = vpack.c.b16 %v2825, %v2824
        %v2832 = vpack.c.b16 %v2827, %v2826
        %v2833 = vpack.c.b16 %v2828, %v2828
        %vm2834 = vcmask 326656
        %v2836 = vsel %vm2834, %v2829, 0
        %v2839 = vsel %vm2834, %v2830, 0
        %v2842 = vsel %vm2834, %v2831, 0
        %v2845 = vsel %vm2834, %v2832, 0
        %v2848 = vsel %vm2834, %v2833, 0
        %vm2850 = vcmask 1043456
        %v2852 = vsel %vm2850, %v2801, 0
        %2854 = vmatprep.subr.bf16.mxu0 0
        %2855 = vmatpush1.bf16.msra.mxu0 %v2799
        %2856 = vmatprep.subr.bf16.mxu0 0
        %2857 = vmatpush1.bf16.msra.mxu0 %v2800
        %2858 = vmatprep.subr.bf16.mxu0 0
        %2859 = vmatpush1.bf16.msra.mxu0 %v2852
        %2860 = vmatprep.subr.bf16.mxu0 0
        %2861 = vmatpush1.bf16.msra.mxu0 0
        %2862 = vmatprep.subr.bf16.mxu0 0
        %2863 = vmatpush1.bf16.msra.mxu0 0
        %2864 = vmatprep.subr.bf16.mxu0 0
        %2865 = vmatpush1.bf16.msra.mxu0 0
        %2866 = vmatprep.subr.bf16.mxu0 0
        %2867 = vmatpush1.bf16.msra.mxu0 0
        %2868 = vmatprep.subr.bf16.mxu0 0
        %2869 = vmatpush1.bf16.msra.mxu0 0
        %2870 = vmatprep.subr.bf16.mxu0 0
        %2871 = vmatpush1.bf16.msra.mxu0 0
        %2872 = vmatprep.subr.bf16.mxu0 0
        %2873 = vmatpush1.bf16.msra.mxu0 0
        %2874 = vmatprep.subr.bf16.mxu0 0
        %2875 = vmatpush1.bf16.msra.mxu0 0
        %2876 = vmatprep.subr.bf16.mxu0 0
        %2877 = vmatpush1.bf16.msra.mxu0 0
        %2878 = vmatprep.subr.bf16.mxu0 0
        %2879 = vmatpush1.bf16.msra.mxu0 0
        %2880 = vmatprep.subr.bf16.mxu0 0
        %2881 = vmatpush1.bf16.msra.mxu0 0
        %2882 = vmatprep.subr.bf16.mxu0 0
        %2883 = vmatpush1.bf16.msra.mxu0 0
        %2884 = vmatprep.subr.bf16.mxu0 0
        %2885 = vmatpush1.bf16.msra.mxu0 0
        %2886 = vmatprep.mubr.bf16.mxu0 0
        %2887 = vmatmul.mubr.bf16.gmra.mrb[0].mxu0 %v2836
        %v2888 = vpop.f32.mrb[0].mxu0
        %v2889 = vadd.f32 0.0, %v2888
        %v2890 = vpop.f32.mrb[0].mxu0
        %v2891 = vpop.f32.mrb[0].mxu0
        %v2892 = vadd.f32 0.0, %v2891
        %v2893 = vpop.f32.mrb[0].mxu0
        %2894 = vmatprep.mubr.bf16.mxu0 0
        %2895 = vmatmul.mubr.bf16.gmra.mrb[0].mxu0 %v2839
        %v2896 = vpop.f32.mrb[0].mxu0
        %v2897 = vadd.f32 0.0, %v2896
        %v2898 = vpop.f32.mrb[0].mxu0
        %v2899 = vpop.f32.mrb[0].mxu0
        %v2900 = vadd.f32 0.0, %v2899
        %v2901 = vpop.f32.mrb[0].mxu0
        %2902 = vmatprep.mubr.bf16.mxu0 0
        %2903 = vmatmul.mubr.bf16.gmra.mrb[0].mxu0 %v2842
        %v2904 = vpop.f32.mrb[0].mxu0
        %v2905 = vadd.f32 0.0, %v2904
        %v2906 = vpop.f32.mrb[0].mxu0
        %v2907 = vpop.f32.mrb[0].mxu0
        %v2908 = vadd.f32 0.0, %v2907
        %v2909 = vpop.f32.mrb[0].mxu0
        %2910 = vmatprep.mubr.bf16.mxu0 0
        %2911 = vmatmul.mubr.bf16.gmra.mrb[0].mxu0 %v2845
        %v2912 = vpop.f32.mrb[0].mxu0
        %v2913 = vadd.f32 0.0, %v2912
        %v2914 = vpop.f32.mrb[0].mxu0
        %v2915 = vpop.f32.mrb[0].mxu0
        %v2916 = vadd.f32 0.0, %v2915
        %v2917 = vpop.f32.mrb[0].mxu0
        %2918 = vmatprep.mubr.bf16.mxu0 0
        %2919 = vmatmul.mubr.bf16.gmra.mrb[0].mxu0 %v2848
        %v2920 = vpop.f32.mrb[0].mxu0
        %v2921 = vadd.f32 0.0, %v2920
        %v2922 = vpop.f32.mrb[0].mxu0
        %v2923 = vpop.f32.mrb[0].mxu0
        %v2924 = vpop.f32.mrb[0].mxu0
        %2925 = vdwg.mxu0
        %v2926 = vpack.c.bf16 %v2892, %v2889
        %v2927 = vpack.c.bf16 %v2900, %v2897
        %v2928 = vpack.c.bf16 %v2908, %v2905
        %v2929 = vpack.c.bf16 %v2916, %v2913
        %v2930 = vpack.c.bf16 %v2921, %v2921
        %v2931 = vld [vmem:[%s7] sm:$0xf]
        %v2932 = vld [vmem:[%s7 + $0x4] sm:$0xf]
        %v2933 = vld [vmem:[%s7 + $0x8] sm:$0xf]
        %v2934 = vld [vmem:[%s7 + $0xc] sm:$0xf]
        %v2935 = vld [vmem:[%s7 + $0x10] sm:$0xf]
        %v2936 = vld [vmem:[%s7 + $0x14] sm:$0xf]
        %v2937 = vld [vmem:[%s7 + $0x18] sm:$0xf]
        %v2938 = vld [vmem:[%s7 + $0x1c] sm:$0xf]
        %s2939 = scalar_lea.vmem %s7, 32
        %v2940 = vld [vmem:[%s2939] sm:$0xf]
        %v2941 = vld [vmem:[%s2939 + $0x4] sm:$0xf]
        %v2942 = vld [vmem:[%s2939 + $0x8] sm:$0xf]
        %v2943 = vld [vmem:[%s2939 + $0xc] sm:$0xf]
        %v2944 = vld [vmem:[%s2939 + $0x10] sm:$0xf]
        %v2945 = vld [vmem:[%s2939 + $0x14] sm:$0xf]
        %v2946 = vld [vmem:[%s2939 + $0x18] sm:$0xf]
        %v2947 = vld [vmem:[%s2939 + $0x1c] sm:$0xf]
        %v2949 = vrot.slane %v2926, 4
        %v2958 = vunpack.c.l.b16 %v2940
        %v2959 = vunpack.c.l.b16 %v2941
        %v2960 = vunpack.c.l.b16 %v2942
        %v2961 = vunpack.c.l.b16 %v2943
        %v2962 = vunpack.c.l.b16 %v2944
        %v2963 = vunpack.c.l.b16 %v2945
        %v2964 = vunpack.c.l.b16 %v2946
        %v2965 = vunpack.c.l.b16 %v2947
        %v2966 = vpack.c.b16 %v2959, %v2958
        %v2967 = vpack.c.b16 %v2961, %v2960
        %v2968 = vpack.c.b16 %v2963, %v2962
        %v2969 = vpack.c.b16 %v2965, %v2964
        %v2975 = vsel %vm2723, %v2949, 0
        %2977 = vmatprep.subr.bf16.mxu0 0
        %2978 = vmatpush1.bf16.msra.mxu0 %v2966
        %2979 = vmatprep.subr.bf16.mxu0 0
        %2980 = vmatpush1.bf16.msra.mxu0 %v2967
        %2981 = vmatprep.subr.bf16.mxu0 0
        %2982 = vmatpush1.bf16.msra.mxu0 %v2968
        %2983 = vmatprep.subr.bf16.mxu0 0
        %2984 = vmatpush1.bf16.msra.mxu0 %v2969
        %2985 = vmatprep.subr.bf16.mxu0 0
        %2986 = vmatpush1.bf16.msra.mxu0 0
        %2987 = vmatprep.subr.bf16.mxu0 0
        %2988 = vmatpush1.bf16.msra.mxu0 0
        %2989 = vmatprep.subr.bf16.mxu0 0
        %2990 = vmatpush1.bf16.msra.mxu0 0
        %2991 = vmatprep.subr.bf16.mxu0 0
        %2992 = vmatpush1.bf16.msra.mxu0 0
        %2993 = vmatprep.subr.bf16.mxu0 0
        %2994 = vmatpush1.bf16.msra.mxu0 0
        %2995 = vmatprep.subr.bf16.mxu0 0
        %2996 = vmatpush1.bf16.msra.mxu0 0
        %2997 = vmatprep.subr.bf16.mxu0 0
        %2998 = vmatpush1.bf16.msra.mxu0 0
        %2999 = vmatprep.subr.bf16.mxu0 0
        %3000 = vmatpush1.bf16.msra.mxu0 0
        %3001 = vmatprep.subr.bf16.mxu0 0
        %3002 = vmatpush1.bf16.msra.mxu0 0
        %3003 = vmatprep.subr.bf16.mxu0 0
        %3004 = vmatpush1.bf16.msra.mxu0 0
        %3005 = vmatprep.subr.bf16.mxu0 0
        %3006 = vmatpush1.bf16.msra.mxu0 0
        %3007 = vmatprep.subr.bf16.mxu0 0
        %3008 = vmatpush1.bf16.msra.mxu0 0
        %3009 = vmatprep.mubr.bf16.mxu0 0
        %3010 = vmatmul.mubr.bf16.gmra.mrb[0].mxu0 %v2975
        %v3011 = vpop.f32.mrb[0].mxu0
        %v3012 = vadd.f32 0.0, %v3011
        %v3013 = vpop.f32.mrb[0].mxu0
        %v3014 = vpop.f32.mrb[0].mxu0
        %v3015 = vpop.f32.mrb[0].mxu0
        %3016 = vdwg.mxu0
        %v3025 = vunpack.c.l.b16 %v2931
        %v3026 = vunpack.c.l.b16 %v2932
        %v3027 = vunpack.c.l.b16 %v2933
        %v3028 = vunpack.c.l.b16 %v2934
        %v3029 = vunpack.c.l.b16 %v2935
        %v3030 = vunpack.c.l.b16 %v2936
        %v3031 = vunpack.c.l.b16 %v2937
        %v3032 = vunpack.c.l.b16 %v2938
        %v3033 = vpack.c.b16 %v3026, %v3025
        %v3034 = vpack.c.b16 %v3028, %v3027
        %v3035 = vpack.c.b16 %v3030, %v3029
        %v3036 = vpack.c.b16 %v3032, %v3031
        %v3042 = vsel %vm2723, %v2926, 0
        %3044 = vmatprep.subr.bf16.mxu0 0
        %3045 = vmatpush1.bf16.msra.mxu0 %v3033
        %3046 = vmatprep.subr.bf16.mxu0 0
        %3047 = vmatpush1.bf16.msra.mxu0 %v3034
        %3048 = vmatprep.subr.bf16.mxu0 0
        %3049 = vmatpush1.bf16.msra.mxu0 %v3035
        %3050 = vmatprep.subr.bf16.mxu0 0
        %3051 = vmatpush1.bf16.msra.mxu0 %v3036
        %3052 = vmatprep.subr.bf16.mxu0 0
        %3053 = vmatpush1.bf16.msra.mxu0 0
        %3054 = vmatprep.subr.bf16.mxu0 0
        %3055 = vmatpush1.bf16.msra.mxu0 0
        %3056 = vmatprep.subr.bf16.mxu0 0
        %3057 = vmatpush1.bf16.msra.mxu0 0
        %3058 = vmatprep.subr.bf16.mxu0 0
        %3059 = vmatpush1.bf16.msra.mxu0 0
        %3060 = vmatprep.subr.bf16.mxu0 0
        %3061 = vmatpush1.bf16.msra.mxu0 0
        %3062 = vmatprep.subr.bf16.mxu0 0
        %3063 = vmatpush1.bf16.msra.mxu0 0
        %3064 = vmatprep.subr.bf16.mxu0 0
        %3065 = vmatpush1.bf16.msra.mxu0 0
        %3066 = vmatprep.subr.bf16.mxu0 0
        %3067 = vmatpush1.bf16.msra.mxu0 0
        %3068 = vmatprep.subr.bf16.mxu0 0
        %3069 = vmatpush1.bf16.msra.mxu0 0
        %3070 = vmatprep.subr.bf16.mxu0 0
        %3071 = vmatpush1.bf16.msra.mxu0 0
        %3072 = vmatprep.subr.bf16.mxu0 0
        %3073 = vmatpush1.bf16.msra.mxu0 0
        %3074 = vmatprep.subr.bf16.mxu0 0
        %3075 = vmatpush1.bf16.msra.mxu0 0
        %3076 = vmatprep.mubr.bf16.mxu0 0
        %3077 = vmatmul.mubr.bf16.gmra.mrb[0].mxu0 %v3042
        %v3078 = vpop.f32.mrb[0].mxu0
        %v3079 = vadd.f32 %v3012, %v3078
        %v3080 = vpop.f32.mrb[0].mxu0
        %v3081 = vpop.f32.mrb[0].mxu0
        %v3082 = vpop.f32.mrb[0].mxu0
        %3083 = vdwg.mxu0
        %s3084 = scalar_lea.vmem %s7, 64
        %v3085 = vld [vmem:[%s3084] sm:$0xf]
        %v3086 = vld [vmem:[%s3084 + $0x4] sm:$0xf]
        %v3087 = vld [vmem:[%s3084 + $0x8] sm:$0xf]
        %v3088 = vld [vmem:[%s3084 + $0xc] sm:$0xf]
        %v3089 = vld [vmem:[%s3084 + $0x10] sm:$0xf]
        %v3090 = vld [vmem:[%s3084 + $0x14] sm:$0xf]
        %v3091 = vld [vmem:[%s3084 + $0x18] sm:$0xf]
        %v3092 = vld [vmem:[%s3084 + $0x1c] sm:$0xf]
        %v3101 = vunpack.c.l.b16 %v3085
        %v3102 = vunpack.c.l.b16 %v3086
        %v3103 = vunpack.c.l.b16 %v3087
        %v3104 = vunpack.c.l.b16 %v3088
        %v3105 = vunpack.c.l.b16 %v3089
        %v3106 = vunpack.c.l.b16 %v3090
        %v3107 = vunpack.c.l.b16 %v3091
        %v3108 = vunpack.c.l.b16 %v3092
        %v3109 = vpack.c.b16 %v3102, %v3101
        %v3110 = vpack.c.b16 %v3104, %v3103
        %v3111 = vpack.c.b16 %v3106, %v3105
        %v3112 = vpack.c.b16 %v3108, %v3107
        %v3118 = vsel %vm2723, %v2927, 0
        %3120 = vmatprep.subr.bf16.mxu0 0
        %3121 = vmatpush1.bf16.msra.mxu0 %v3109
        %3122 = vmatprep.subr.bf16.mxu0 0
        %3123 = vmatpush1.bf16.msra.mxu0 %v3110
        %3124 = vmatprep.subr.bf16.mxu0 0
        %3125 = vmatpush1.bf16.msra.mxu0 %v3111
        %3126 = vmatprep.subr.bf16.mxu0 0
        %3127 = vmatpush1.bf16.msra.mxu0 %v3112
        %3128 = vmatprep.subr.bf16.mxu0 0
        %3129 = vmatpush1.bf16.msra.mxu0 0
        %3130 = vmatprep.subr.bf16.mxu0 0
        %3131 = vmatpush1.bf16.msra.mxu0 0
        %3132 = vmatprep.subr.bf16.mxu0 0
        %3133 = vmatpush1.bf16.msra.mxu0 0
        %3134 = vmatprep.subr.bf16.mxu0 0
        %3135 = vmatpush1.bf16.msra.mxu0 0
        %3136 = vmatprep.subr.bf16.mxu0 0
        %3137 = vmatpush1.bf16.msra.mxu0 0
        %3138 = vmatprep.subr.bf16.mxu0 0
        %3139 = vmatpush1.bf16.msra.mxu0 0
        %3140 = vmatprep.subr.bf16.mxu0 0
        %3141 = vmatpush1.bf16.msra.mxu0 0
        %3142 = vmatprep.subr.bf16.mxu0 0
        %3143 = vmatpush1.bf16.msra.mxu0 0
        %3144 = vmatprep.subr.bf16.mxu0 0
        %3145 = vmatpush1.bf16.msra.mxu0 0
        %3146 = vmatprep.subr.bf16.mxu0 0
        %3147 = vmatpush1.bf16.msra.mxu0 0
        %3148 = vmatprep.subr.bf16.mxu0 0
        %3149 = vmatpush1.bf16.msra.mxu0 0
        %3150 = vmatprep.subr.bf16.mxu0 0
        %3151 = vmatpush1.bf16.msra.mxu0 0
        %3152 = vmatprep.mubr.bf16.mxu0 0
        %3153 = vmatmul.mubr.bf16.gmra.mrb[0].mxu0 %v3118
        %v3154 = vpop.f32.mrb[0].mxu0
        %v3155 = vadd.f32 0.0, %v3154
        %v3156 = vpop.f32.mrb[0].mxu0
        %v3157 = vpop.f32.mrb[0].mxu0
        %v3158 = vpop.f32.mrb[0].mxu0
        %3159 = vdwg.mxu0
        %v3160 = vadd.f32 %v3079, %v3155
        %s3161 = scalar_lea.vmem %s7, 96
        %v3162 = vld [vmem:[%s3161] sm:$0xf]
        %v3163 = vld [vmem:[%s3161 + $0x4] sm:$0xf]
        %v3164 = vld [vmem:[%s3161 + $0x8] sm:$0xf]
        %v3165 = vld [vmem:[%s3161 + $0xc] sm:$0xf]
        %v3166 = vld [vmem:[%s3161 + $0x10] sm:$0xf]
        %v3167 = vld [vmem:[%s3161 + $0x14] sm:$0xf]
        %v3168 = vld [vmem:[%s3161 + $0x18] sm:$0xf]
        %v3169 = vld [vmem:[%s3161 + $0x1c] sm:$0xf]
        %v3171 = vrot.slane %v2927, 4
        %v3180 = vunpack.c.l.b16 %v3162
        %v3181 = vunpack.c.l.b16 %v3163
        %v3182 = vunpack.c.l.b16 %v3164
        %v3183 = vunpack.c.l.b16 %v3165
        %v3184 = vunpack.c.l.b16 %v3166
        %v3185 = vunpack.c.l.b16 %v3167
        %v3186 = vunpack.c.l.b16 %v3168
        %v3187 = vunpack.c.l.b16 %v3169
        %v3188 = vpack.c.b16 %v3181, %v3180
        %v3189 = vpack.c.b16 %v3183, %v3182
        %v3190 = vpack.c.b16 %v3185, %v3184
        %v3191 = vpack.c.b16 %v3187, %v3186
        %v3197 = vsel %vm2723, %v3171, 0
        %3199 = vmatprep.subr.bf16.mxu0 0
        %3200 = vmatpush1.bf16.msra.mxu0 %v3188
        %3201 = vmatprep.subr.bf16.mxu0 0
        %3202 = vmatpush1.bf16.msra.mxu0 %v3189
        %3203 = vmatprep.subr.bf16.mxu0 0
        %3204 = vmatpush1.bf16.msra.mxu0 %v3190
        %3205 = vmatprep.subr.bf16.mxu0 0
        %3206 = vmatpush1.bf16.msra.mxu0 %v3191
        %3207 = vmatprep.subr.bf16.mxu0 0
        %3208 = vmatpush1.bf16.msra.mxu0 0
        %3209 = vmatprep.subr.bf16.mxu0 0
        %3210 = vmatpush1.bf16.msra.mxu0 0
        %3211 = vmatprep.subr.bf16.mxu0 0
        %3212 = vmatpush1.bf16.msra.mxu0 0
        %3213 = vmatprep.subr.bf16.mxu0 0
        %3214 = vmatpush1.bf16.msra.mxu0 0
        %3215 = vmatprep.subr.bf16.mxu0 0
        %3216 = vmatpush1.bf16.msra.mxu0 0
        %3217 = vmatprep.subr.bf16.mxu0 0
        %3218 = vmatpush1.bf16.msra.mxu0 0
        %3219 = vmatprep.subr.bf16.mxu0 0
        %3220 = vmatpush1.bf16.msra.mxu0 0
        %3221 = vmatprep.subr.bf16.mxu0 0
        %3222 = vmatpush1.bf16.msra.mxu0 0
        %3223 = vmatprep.subr.bf16.mxu0 0
        %3224 = vmatpush1.bf16.msra.mxu0 0
        %3225 = vmatprep.subr.bf16.mxu0 0
        %3226 = vmatpush1.bf16.msra.mxu0 0
        %3227 = vmatprep.subr.bf16.mxu0 0
        %3228 = vmatpush1.bf16.msra.mxu0 0
        %3229 = vmatprep.subr.bf16.mxu0 0
        %3230 = vmatpush1.bf16.msra.mxu0 0
        %3231 = vmatprep.mubr.bf16.mxu0 0
        %3232 = vmatmul.mubr.bf16.gmra.mrb[0].mxu0 %v3197
        %v3233 = vpop.f32.mrb[0].mxu0
        %v3234 = vadd.f32 0.0, %v3233
        %v3235 = vpop.f32.mrb[0].mxu0
        %v3236 = vpop.f32.mrb[0].mxu0
        %v3237 = vpop.f32.mrb[0].mxu0
        %3238 = vdwg.mxu0
        %v3239 = vadd.f32 %v3160, %v3234
        %s3240 = scalar_lea.vmem %s7, 128
        %v3241 = vld [vmem:[%s3240] sm:$0xf]
        %v3242 = vld [vmem:[%s3240 + $0x4] sm:$0xf]
        %v3243 = vld [vmem:[%s3240 + $0x8] sm:$0xf]
        %v3244 = vld [vmem:[%s3240 + $0xc] sm:$0xf]
        %v3245 = vld [vmem:[%s3240 + $0x10] sm:$0xf]
        %v3246 = vld [vmem:[%s3240 + $0x14] sm:$0xf]
        %v3247 = vld [vmem:[%s3240 + $0x18] sm:$0xf]
        %v3248 = vld [vmem:[%s3240 + $0x1c] sm:$0xf]
        %v3257 = vunpack.c.l.b16 %v3241
        %v3258 = vunpack.c.l.b16 %v3242
        %v3259 = vunpack.c.l.b16 %v3243
        %v3260 = vunpack.c.l.b16 %v3244
        %v3261 = vunpack.c.l.b16 %v3245
        %v3262 = vunpack.c.l.b16 %v3246
        %v3263 = vunpack.c.l.b16 %v3247
        %v3264 = vunpack.c.l.b16 %v3248
        %v3265 = vpack.c.b16 %v3258, %v3257
        %v3266 = vpack.c.b16 %v3260, %v3259
        %v3267 = vpack.c.b16 %v3262, %v3261
        %v3268 = vpack.c.b16 %v3264, %v3263
        %v3274 = vsel %vm2723, %v2928, 0
        %3276 = vmatprep.subr.bf16.mxu0 0
        %3277 = vmatpush1.bf16.msra.mxu0 %v3265
        %3278 = vmatprep.subr.bf16.mxu0 0
        %3279 = vmatpush1.bf16.msra.mxu0 %v3266
        %3280 = vmatprep.subr.bf16.mxu0 0
        %3281 = vmatpush1.bf16.msra.mxu0 %v3267
        %3282 = vmatprep.subr.bf16.mxu0 0
        %3283 = vmatpush1.bf16.msra.mxu0 %v3268
        %3284 = vmatprep.subr.bf16.mxu0 0
        %3285 = vmatpush1.bf16.msra.mxu0 0
        %3286 = vmatprep.subr.bf16.mxu0 0
        %3287 = vmatpush1.bf16.msra.mxu0 0
        %3288 = vmatprep.subr.bf16.mxu0 0
        %3289 = vmatpush1.bf16.msra.mxu0 0
        %3290 = vmatprep.subr.bf16.mxu0 0
        %3291 = vmatpush1.bf16.msra.mxu0 0
        %3292 = vmatprep.subr.bf16.mxu0 0
        %3293 = vmatpush1.bf16.msra.mxu0 0
        %3294 = vmatprep.subr.bf16.mxu0 0
        %3295 = vmatpush1.bf16.msra.mxu0 0
        %3296 = vmatprep.subr.bf16.mxu0 0
        %3297 = vmatpush1.bf16.msra.mxu0 0
        %3298 = vmatprep.subr.bf16.mxu0 0
        %3299 = vmatpush1.bf16.msra.mxu0 0
        %3300 = vmatprep.subr.bf16.mxu0 0
        %3301 = vmatpush1.bf16.msra.mxu0 0
        %3302 = vmatprep.subr.bf16.mxu0 0
        %3303 = vmatpush1.bf16.msra.mxu0 0
        %3304 = vmatprep.subr.bf16.mxu0 0
        %3305 = vmatpush1.bf16.msra.mxu0 0
        %3306 = vmatprep.subr.bf16.mxu0 0
        %3307 = vmatpush1.bf16.msra.mxu0 0
        %3308 = vmatprep.mubr.bf16.mxu0 0
        %3309 = vmatmul.mubr.bf16.gmra.mrb[0].mxu0 %v3274
        %v3310 = vpop.f32.mrb[0].mxu0
        %v3311 = vadd.f32 0.0, %v3310
        %v3312 = vpop.f32.mrb[0].mxu0
        %v3313 = vpop.f32.mrb[0].mxu0
        %v3314 = vpop.f32.mrb[0].mxu0
        %3315 = vdwg.mxu0
        %v3316 = vadd.f32 %v3239, %v3311
        %s3317 = scalar_lea.vmem %s7, 160
        %v3318 = vld [vmem:[%s3317] sm:$0xf]
        %v3319 = vld [vmem:[%s3317 + $0x4] sm:$0xf]
        %v3320 = vld [vmem:[%s3317 + $0x8] sm:$0xf]
        %v3321 = vld [vmem:[%s3317 + $0xc] sm:$0xf]
        %v3322 = vld [vmem:[%s3317 + $0x10] sm:$0xf]
        %v3323 = vld [vmem:[%s3317 + $0x14] sm:$0xf]
        %v3324 = vld [vmem:[%s3317 + $0x18] sm:$0xf]
        %v3325 = vld [vmem:[%s3317 + $0x1c] sm:$0xf]
        %v3327 = vrot.slane %v2928, 4
        %v3336 = vunpack.c.l.b16 %v3318
        %v3337 = vunpack.c.l.b16 %v3319
        %v3338 = vunpack.c.l.b16 %v3320
        %v3339 = vunpack.c.l.b16 %v3321
        %v3340 = vunpack.c.l.b16 %v3322
        %v3341 = vunpack.c.l.b16 %v3323
        %v3342 = vunpack.c.l.b16 %v3324
        %v3343 = vunpack.c.l.b16 %v3325
        %v3344 = vpack.c.b16 %v3337, %v3336
        %v3345 = vpack.c.b16 %v3339, %v3338
        %v3346 = vpack.c.b16 %v3341, %v3340
        %v3347 = vpack.c.b16 %v3343, %v3342
        %v3353 = vsel %vm2723, %v3327, 0
        %3355 = vmatprep.subr.bf16.mxu0 0
        %3356 = vmatpush1.bf16.msra.mxu0 %v3344
        %3357 = vmatprep.subr.bf16.mxu0 0
        %3358 = vmatpush1.bf16.msra.mxu0 %v3345
        %3359 = vmatprep.subr.bf16.mxu0 0
        %3360 = vmatpush1.bf16.msra.mxu0 %v3346
        %3361 = vmatprep.subr.bf16.mxu0 0
        %3362 = vmatpush1.bf16.msra.mxu0 %v3347
        %3363 = vmatprep.subr.bf16.mxu0 0
        %3364 = vmatpush1.bf16.msra.mxu0 0
        %3365 = vmatprep.subr.bf16.mxu0 0
        %3366 = vmatpush1.bf16.msra.mxu0 0
        %3367 = vmatprep.subr.bf16.mxu0 0
        %3368 = vmatpush1.bf16.msra.mxu0 0
        %3369 = vmatprep.subr.bf16.mxu0 0
        %3370 = vmatpush1.bf16.msra.mxu0 0
        %3371 = vmatprep.subr.bf16.mxu0 0
        %3372 = vmatpush1.bf16.msra.mxu0 0
        %3373 = vmatprep.subr.bf16.mxu0 0
        %3374 = vmatpush1.bf16.msra.mxu0 0
        %3375 = vmatprep.subr.bf16.mxu0 0
        %3376 = vmatpush1.bf16.msra.mxu0 0
        %3377 = vmatprep.subr.bf16.mxu0 0
        %3378 = vmatpush1.bf16.msra.mxu0 0
        %3379 = vmatprep.subr.bf16.mxu0 0
        %3380 = vmatpush1.bf16.msra.mxu0 0
        %3381 = vmatprep.subr.bf16.mxu0 0
        %3382 = vmatpush1.bf16.msra.mxu0 0
        %3383 = vmatprep.subr.bf16.mxu0 0
        %3384 = vmatpush1.bf16.msra.mxu0 0
        %3385 = vmatprep.subr.bf16.mxu0 0
        %3386 = vmatpush1.bf16.msra.mxu0 0
        %3387 = vmatprep.mubr.bf16.mxu0 0
        %3388 = vmatmul.mubr.bf16.gmra.mrb[0].mxu0 %v3353
        %v3389 = vpop.f32.mrb[0].mxu0
        %v3390 = vadd.f32 0.0, %v3389
        %v3391 = vpop.f32.mrb[0].mxu0
        %v3392 = vpop.f32.mrb[0].mxu0
        %v3393 = vpop.f32.mrb[0].mxu0
        %3394 = vdwg.mxu0
        %v3395 = vadd.f32 %v3316, %v3390
        %s3396 = scalar_lea.vmem %s7, 192
        %v3397 = vld [vmem:[%s3396] sm:$0xf]
        %v3398 = vld [vmem:[%s3396 + $0x4] sm:$0xf]
        %v3399 = vld [vmem:[%s3396 + $0x8] sm:$0xf]
        %v3400 = vld [vmem:[%s3396 + $0xc] sm:$0xf]
        %v3401 = vld [vmem:[%s3396 + $0x10] sm:$0xf]
        %v3402 = vld [vmem:[%s3396 + $0x14] sm:$0xf]
        %v3403 = vld [vmem:[%s3396 + $0x18] sm:$0xf]
        %v3404 = vld [vmem:[%s3396 + $0x1c] sm:$0xf]
        %v3413 = vunpack.c.l.b16 %v3397
        %v3414 = vunpack.c.l.b16 %v3398
        %v3415 = vunpack.c.l.b16 %v3399
        %v3416 = vunpack.c.l.b16 %v3400
        %v3417 = vunpack.c.l.b16 %v3401
        %v3418 = vunpack.c.l.b16 %v3402
        %v3419 = vunpack.c.l.b16 %v3403
        %v3420 = vunpack.c.l.b16 %v3404
        %v3421 = vpack.c.b16 %v3414, %v3413
        %v3422 = vpack.c.b16 %v3416, %v3415
        %v3423 = vpack.c.b16 %v3418, %v3417
        %v3424 = vpack.c.b16 %v3420, %v3419
        %v3430 = vsel %vm2723, %v2929, 0
        %3432 = vmatprep.subr.bf16.mxu0 0
        %3433 = vmatpush1.bf16.msra.mxu0 %v3421
        %3434 = vmatprep.subr.bf16.mxu0 0
        %3435 = vmatpush1.bf16.msra.mxu0 %v3422
        %3436 = vmatprep.subr.bf16.mxu0 0
        %3437 = vmatpush1.bf16.msra.mxu0 %v3423
        %3438 = vmatprep.subr.bf16.mxu0 0
        %3439 = vmatpush1.bf16.msra.mxu0 %v3424
        %3440 = vmatprep.subr.bf16.mxu0 0
        %3441 = vmatpush1.bf16.msra.mxu0 0
        %3442 = vmatprep.subr.bf16.mxu0 0
        %3443 = vmatpush1.bf16.msra.mxu0 0
        %3444 = vmatprep.subr.bf16.mxu0 0
        %3445 = vmatpush1.bf16.msra.mxu0 0
        %3446 = vmatprep.subr.bf16.mxu0 0
        %3447 = vmatpush1.bf16.msra.mxu0 0
        %3448 = vmatprep.subr.bf16.mxu0 0
        %3449 = vmatpush1.bf16.msra.mxu0 0
        %3450 = vmatprep.subr.bf16.mxu0 0
        %3451 = vmatpush1.bf16.msra.mxu0 0
        %3452 = vmatprep.subr.bf16.mxu0 0
        %3453 = vmatpush1.bf16.msra.mxu0 0
        %3454 = vmatprep.subr.bf16.mxu0 0
        %3455 = vmatpush1.bf16.msra.mxu0 0
        %3456 = vmatprep.subr.bf16.mxu0 0
        %3457 = vmatpush1.bf16.msra.mxu0 0
        %3458 = vmatprep.subr.bf16.mxu0 0
        %3459 = vmatpush1.bf16.msra.mxu0 0
        %3460 = vmatprep.subr.bf16.mxu0 0
        %3461 = vmatpush1.bf16.msra.mxu0 0
        %3462 = vmatprep.subr.bf16.mxu0 0
        %3463 = vmatpush1.bf16.msra.mxu0 0
        %3464 = vmatprep.mubr.bf16.mxu0 0
        %3465 = vmatmul.mubr.bf16.gmra.mrb[0].mxu0 %v3430
        %v3466 = vpop.f32.mrb[0].mxu0
        %v3467 = vadd.f32 0.0, %v3466
        %v3468 = vpop.f32.mrb[0].mxu0
        %v3469 = vpop.f32.mrb[0].mxu0
        %v3470 = vpop.f32.mrb[0].mxu0
        %3471 = vdwg.mxu0
        %v3472 = vadd.f32 %v3395, %v3467
        %s3473 = scalar_lea.vmem %s7, 224
        %v3474 = vld [vmem:[%s3473] sm:$0xf]
        %v3475 = vld [vmem:[%s3473 + $0x4] sm:$0xf]
        %v3476 = vld [vmem:[%s3473 + $0x8] sm:$0xf]
        %v3477 = vld [vmem:[%s3473 + $0xc] sm:$0xf]
        %v3478 = vld [vmem:[%s3473 + $0x10] sm:$0xf]
        %v3479 = vld [vmem:[%s3473 + $0x14] sm:$0xf]
        %v3480 = vld [vmem:[%s3473 + $0x18] sm:$0xf]
        %v3481 = vld [vmem:[%s3473 + $0x1c] sm:$0xf]
        %v3483 = vrot.slane %v2929, 4
        %v3492 = vunpack.c.l.b16 %v3474
        %v3493 = vunpack.c.l.b16 %v3475
        %v3494 = vunpack.c.l.b16 %v3476
        %v3495 = vunpack.c.l.b16 %v3477
        %v3496 = vunpack.c.l.b16 %v3478
        %v3497 = vunpack.c.l.b16 %v3479
        %v3498 = vunpack.c.l.b16 %v3480
        %v3499 = vunpack.c.l.b16 %v3481
        %v3500 = vpack.c.b16 %v3493, %v3492
        %v3501 = vpack.c.b16 %v3495, %v3494
        %v3502 = vpack.c.b16 %v3497, %v3496
        %v3503 = vpack.c.b16 %v3499, %v3498
        %v3509 = vsel %vm2723, %v3483, 0
        %3511 = vmatprep.subr.bf16.mxu0 0
        %3512 = vmatpush1.bf16.msra.mxu0 %v3500
        %3513 = vmatprep.subr.bf16.mxu0 0
        %3514 = vmatpush1.bf16.msra.mxu0 %v3501
        %3515 = vmatprep.subr.bf16.mxu0 0
        %3516 = vmatpush1.bf16.msra.mxu0 %v3502
        %3517 = vmatprep.subr.bf16.mxu0 0
        %3518 = vmatpush1.bf16.msra.mxu0 %v3503
        %3519 = vmatprep.subr.bf16.mxu0 0
        %3520 = vmatpush1.bf16.msra.mxu0 0
        %3521 = vmatprep.subr.bf16.mxu0 0
        %3522 = vmatpush1.bf16.msra.mxu0 0
        %3523 = vmatprep.subr.bf16.mxu0 0
        %3524 = vmatpush1.bf16.msra.mxu0 0
        %3525 = vmatprep.subr.bf16.mxu0 0
        %3526 = vmatpush1.bf16.msra.mxu0 0
        %3527 = vmatprep.subr.bf16.mxu0 0
        %3528 = vmatpush1.bf16.msra.mxu0 0
        %3529 = vmatprep.subr.bf16.mxu0 0
        %3530 = vmatpush1.bf16.msra.mxu0 0
        %3531 = vmatprep.subr.bf16.mxu0 0
        %3532 = vmatpush1.bf16.msra.mxu0 0
        %3533 = vmatprep.subr.bf16.mxu0 0
        %3534 = vmatpush1.bf16.msra.mxu0 0
        %3535 = vmatprep.subr.bf16.mxu0 0
        %3536 = vmatpush1.bf16.msra.mxu0 0
        %3537 = vmatprep.subr.bf16.mxu0 0
        %3538 = vmatpush1.bf16.msra.mxu0 0
        %3539 = vmatprep.subr.bf16.mxu0 0
        %3540 = vmatpush1.bf16.msra.mxu0 0
        %3541 = vmatprep.subr.bf16.mxu0 0
        %3542 = vmatpush1.bf16.msra.mxu0 0
        %3543 = vmatprep.mubr.bf16.mxu0 0
        %3544 = vmatmul.mubr.bf16.gmra.mrb[0].mxu0 %v3509
        %v3545 = vpop.f32.mrb[0].mxu0
        %v3546 = vadd.f32 0.0, %v3545
        %v3547 = vpop.f32.mrb[0].mxu0
        %v3548 = vpop.f32.mrb[0].mxu0
        %v3549 = vpop.f32.mrb[0].mxu0
        %3550 = vdwg.mxu0
        %v3551 = vadd.f32 %v3472, %v3546
        %s3552 = scalar_lea.vmem %s7, 256
        %v3553 = vld [vmem:[%s3552] sm:$0xf]
        %v3554 = vld [vmem:[%s3552 + $0x4] sm:$0xf]
        %v3555 = vld [vmem:[%s3552 + $0x8] sm:$0xf]
        %v3556 = vld [vmem:[%s3552 + $0xc] sm:$0xf]
        %v3557 = vld [vmem:[%s3552 + $0x10] sm:$0xf]
        %v3558 = vld [vmem:[%s3552 + $0x14] sm:$0xf]
        %v3559 = vld [vmem:[%s3552 + $0x18] sm:$0xf]
        %v3560 = vld [vmem:[%s3552 + $0x1c] sm:$0xf]
        %v3569 = vunpack.c.l.b16 %v3553
        %v3570 = vunpack.c.l.b16 %v3554
        %v3571 = vunpack.c.l.b16 %v3555
        %v3572 = vunpack.c.l.b16 %v3556
        %v3573 = vunpack.c.l.b16 %v3557
        %v3574 = vunpack.c.l.b16 %v3558
        %v3575 = vunpack.c.l.b16 %v3559
        %v3576 = vunpack.c.l.b16 %v3560
        %v3577 = vpack.c.b16 %v3570, %v3569
        %v3578 = vpack.c.b16 %v3572, %v3571
        %v3579 = vpack.c.b16 %v3574, %v3573
        %v3580 = vpack.c.b16 %v3576, %v3575
        %v3586 = vsel %vm2723, %v2930, 0
        %3588 = vmatprep.subr.bf16.mxu0 0
        %3589 = vmatpush1.bf16.msra.mxu0 %v3577
        %3590 = vmatprep.subr.bf16.mxu0 0
        %3591 = vmatpush1.bf16.msra.mxu0 %v3578
        %3592 = vmatprep.subr.bf16.mxu0 0
        %3593 = vmatpush1.bf16.msra.mxu0 %v3579
        %3594 = vmatprep.subr.bf16.mxu0 0
        %3595 = vmatpush1.bf16.msra.mxu0 %v3580
        %3596 = vmatprep.subr.bf16.mxu0 0
        %3597 = vmatpush1.bf16.msra.mxu0 0
        %3598 = vmatprep.subr.bf16.mxu0 0
        %3599 = vmatpush1.bf16.msra.mxu0 0
        %3600 = vmatprep.subr.bf16.mxu0 0
        %3601 = vmatpush1.bf16.msra.mxu0 0
        %3602 = vmatprep.subr.bf16.mxu0 0
        %3603 = vmatpush1.bf16.msra.mxu0 0
        %3604 = vmatprep.subr.bf16.mxu0 0
        %3605 = vmatpush1.bf16.msra.mxu0 0
        %3606 = vmatprep.subr.bf16.mxu0 0
        %3607 = vmatpush1.bf16.msra.mxu0 0
        %3608 = vmatprep.subr.bf16.mxu0 0
        %3609 = vmatpush1.bf16.msra.mxu0 0
        %3610 = vmatprep.subr.bf16.mxu0 0
        %3611 = vmatpush1.bf16.msra.mxu0 0
        %3612 = vmatprep.subr.bf16.mxu0 0
        %3613 = vmatpush1.bf16.msra.mxu0 0
        %3614 = vmatprep.subr.bf16.mxu0 0
        %3615 = vmatpush1.bf16.msra.mxu0 0
        %3616 = vmatprep.subr.bf16.mxu0 0
        %3617 = vmatpush1.bf16.msra.mxu0 0
        %3618 = vmatprep.subr.bf16.mxu0 0
        %3619 = vmatpush1.bf16.msra.mxu0 0
        %3620 = vmatprep.mubr.bf16.mxu0 0
        %3621 = vmatmul.mubr.bf16.gmra.mrb[0].mxu0 %v3586
        %v3622 = vpop.f32.mrb[0].mxu0
        %v3623 = vadd.f32 0.0, %v3622
        %v3624 = vpop.f32.mrb[0].mxu0
        %v3625 = vpop.f32.mrb[0].mxu0
        %v3626 = vpop.f32.mrb[0].mxu0
        %3627 = vdwg.mxu0
        %v3628 = vadd.f32 %v3551, %v3623
        %v3629 = vld [vmem:[%s8] sm:$0x1]
        %v3630 = vlaneseq
        %v3631 = vshrl.u32 %v3630, 7
        %v3632 = vsub.s32 0, %v3631
        %v3633 = vrot.slane %v3629, %v3632
        %v3634 = vadd.f32 %v3628, %v3633
        %vm3635 = vcmask 261120
        %v3636 = vsel %vm3635, %v3634, -inf
        %3637 = vmax.xlane.f32.xlu0 %v3636
        %v3638 = vpop.xlane.xlu0 %3637
        %v3639 = vsub.f32 %v3634, %v3638
        %v3640 = vmul.f32 %v3639, 1.442695
        %v3641 = vpow.pop %v3640
        %v3642 = vsel %vm3635, %v3641, 0.0
        %3643 = vadd.xlane.f32.xlu0 %v3642
        %v3644 = vpop.xlane.xlu0 %3643
        %v3645 = vrcp.pop %v3644
        %v3646 = vmul.f32 %v3641, %v3645
        %v3647 = vld [vmem:[%s8 + $0x1] sm:$0x1]
        %v3648 = vlaneseq
        %v3649 = vshrl.u32 %v3648, 7
        %v3650 = vsub.s32 0, %v3649
        %v3651 = vrot.slane %v3647, %v3650
        %v3652 = vmul.f32 %v3646, %v3651
        %v3653 = vld [vmem:[%s8 + $0x2] sm:$0x1]
        %v3654 = vlaneseq
        %v3655 = vshrl.u32 %v3654, 7
        %v3656 = vsub.s32 0, %v3655
        %v3657 = vrot.slane %v3653, %v3656
        %v3658 = vadd.f32 %v3652, %v3657
        %v3659 = vld [vmem:[%s9] sm:$0xff]
        %v3660 = vld [vmem:[%s9 + $0x8] sm:$0xff]
        %v3661 = vld [vmem:[%s9 + $0x10] sm:$0xff]
        %v3662 = vld [vmem:[%s9 + $0x18] sm:$0xff]
        %s3663 = scalar_lea.vmem %s9, 32
        %v3664 = vld [vmem:[%s3663] sm:$0xff]
        %v3665 = vld [vmem:[%s3663 + $0x8] sm:$0xff]
        %v3666 = vld [vmem:[%s3663 + $0x10] sm:$0xff]
        %v3667 = vld [vmem:[%s3663 + $0x18] sm:$0xff]
        %v3669 = vrot.slane %v3658, 1
        %v3670 = vsel %vm3635, %v3669, 0
        %3672 = vmatprep.subr.mxu0 0.0
        %3673 = vmatpush1.msra.mxu0 %v3664
        %3674 = vmatprep.subr.mxu0 0.0
        %3675 = vmatpush1.msra.mxu0 %v3665
        %3676 = vmatprep.subr.mxu0 0.0
        %3677 = vmatpush1.msra.mxu0 %v3666
        %3678 = vmatprep.subr.mxu0 0.0
        %3679 = vmatpush1.msra.mxu0 %v3667
        %3680 = vmatprep.subr.mxu0 0.0
        %3681 = vmatpush1.msra.mxu0 0.0
        %3682 = vmatprep.subr.mxu0 0.0
        %3683 = vmatpush1.msra.mxu0 0.0
        %3684 = vmatprep.subr.mxu0 0.0
        %3685 = vmatpush1.msra.mxu0 0.0
        %3686 = vmatprep.subr.mxu0 0.0
        %3687 = vmatpush1.msra.mxu0 0.0
        %3688 = vmatprep.subr.mxu0 0.0
        %3689 = vmatpush1.msra.mxu0 0.0
        %3690 = vmatprep.subr.mxu0 0.0
        %3691 = vmatpush1.msra.mxu0 0.0
        %3692 = vmatprep.subr.mxu0 0.0
        %3693 = vmatpush1.msra.mxu0 0.0
        %3694 = vmatprep.subr.mxu0 0.0
        %3695 = vmatpush1.msra.mxu0 0.0
        %3696 = vmatprep.subr.mxu0 0.0
        %3697 = vmatpush1.msra.mxu0 0.0
        %3698 = vmatprep.subr.mxu0 0.0
        %3699 = vmatpush1.msra.mxu0 0.0
        %3700 = vmatprep.subr.mxu0 0.0
        %3701 = vmatpush1.msra.mxu0 0.0
        %3702 = vmatprep.subr.mxu0 0.0
        %3703 = vmatpush1.msra.mxu0 0.0
        %3704 = vmatprep.subr.mxu0 0.0
        %3705 = vmatpush1.msra.mxu0 0.0
        %3706 = vmatprep.subr.mxu0 0.0
        %3707 = vmatpush1.msra.mxu0 0.0
        %3708 = vmatprep.subr.mxu0 0.0
        %3709 = vmatpush1.msra.mxu0 0.0
        %3710 = vmatprep.subr.mxu0 0.0
        %3711 = vmatpush1.msra.mxu0 0.0
        %3712 = vmatprep.subr.mxu0 0.0
        %3713 = vmatpush1.msra.mxu0 0.0
        %3714 = vmatprep.subr.mxu0 0.0
        %3715 = vmatpush1.msra.mxu0 0.0
        %3716 = vmatprep.subr.mxu0 0.0
        %3717 = vmatpush1.msra.mxu0 0.0
        %3718 = vmatprep.subr.mxu0 0.0
        %3719 = vmatpush1.msra.mxu0 0.0
        %3720 = vmatprep.subr.mxu0 0.0
        %3721 = vmatpush1.msra.mxu0 0.0
        %3722 = vmatprep.subr.mxu0 0.0
        %3723 = vmatpush1.msra.mxu0 0.0
        %3724 = vmatprep.subr.mxu0 0.0
        %3725 = vmatpush1.msra.mxu0 0.0
        %3726 = vmatprep.subr.mxu0 0.0
        %3727 = vmatpush1.msra.mxu0 0.0
        %3728 = vmatprep.subr.mxu0 0.0
        %3729 = vmatpush1.msra.mxu0 0.0
        %3730 = vmatprep.subr.mxu0 0.0
        %3731 = vmatpush1.msra.mxu0 0.0
        %3732 = vmatprep.subr.mxu0 0.0
        %3733 = vmatpush1.msra.mxu0 0.0
        %3734 = vmatprep.subr.mxu0 0.0
        %3735 = vmatpush1.msra.mxu0 0.0
        %3736 = vmatprep.mubr.f32.mxu0 0.0
        %3737 = vmatmul.mubr.f32.gmra.mrb[0].mxu0 %v3670
        %v3738 = vpop.f32.mrb[0].mxu0
        %v3739 = vadd.f32 0.0, %v3738
        %v3740 = vpop.f32.mrb[0].mxu0
        %3741 = vdwg.mxu0
        %v3742 = vsel %vm3635, %v3658, 0
        %3744 = vmatprep.subr.mxu0 0.0
        %3745 = vmatpush1.msra.mxu0 %v3659
        %3746 = vmatprep.subr.mxu0 0.0
        %3747 = vmatpush1.msra.mxu0 %v3660
        %3748 = vmatprep.subr.mxu0 0.0
        %3749 = vmatpush1.msra.mxu0 %v3661
        %3750 = vmatprep.subr.mxu0 0.0
        %3751 = vmatpush1.msra.mxu0 %v3662
        %3752 = vmatprep.subr.mxu0 0.0
        %3753 = vmatpush1.msra.mxu0 0.0
        %3754 = vmatprep.subr.mxu0 0.0
        %3755 = vmatpush1.msra.mxu0 0.0
        %3756 = vmatprep.subr.mxu0 0.0
        %3757 = vmatpush1.msra.mxu0 0.0
        %3758 = vmatprep.subr.mxu0 0.0
        %3759 = vmatpush1.msra.mxu0 0.0
        %3760 = vmatprep.subr.mxu0 0.0
        %3761 = vmatpush1.msra.mxu0 0.0
        %3762 = vmatprep.subr.mxu0 0.0
        %3763 = vmatpush1.msra.mxu0 0.0
        %3764 = vmatprep.subr.mxu0 0.0
        %3765 = vmatpush1.msra.mxu0 0.0
        %3766 = vmatprep.subr.mxu0 0.0
        %3767 = vmatpush1.msra.mxu0 0.0
        %3768 = vmatprep.subr.mxu0 0.0
        %3769 = vmatpush1.msra.mxu0 0.0
        %3770 = vmatprep.subr.mxu0 0.0
        %3771 = vmatpush1.msra.mxu0 0.0
        %3772 = vmatprep.subr.mxu0 0.0
        %3773 = vmatpush1.msra.mxu0 0.0
        %3774 = vmatprep.subr.mxu0 0.0
        %3775 = vmatpush1.msra.mxu0 0.0
        %3776 = vmatprep.subr.mxu0 0.0
        %3777 = vmatpush1.msra.mxu0 0.0
        %3778 = vmatprep.subr.mxu0 0.0
        %3779 = vmatpush1.msra.mxu0 0.0
        %3780 = vmatprep.subr.mxu0 0.0
        %3781 = vmatpush1.msra.mxu0 0.0
        %3782 = vmatprep.subr.mxu0 0.0
        %3783 = vmatpush1.msra.mxu0 0.0
        %3784 = vmatprep.subr.mxu0 0.0
        %3785 = vmatpush1.msra.mxu0 0.0
        %3786 = vmatprep.subr.mxu0 0.0
        %3787 = vmatpush1.msra.mxu0 0.0
        %3788 = vmatprep.subr.mxu0 0.0
        %3789 = vmatpush1.msra.mxu0 0.0
        %3790 = vmatprep.subr.mxu0 0.0
        %3791 = vmatpush1.msra.mxu0 0.0
        %3792 = vmatprep.subr.mxu0 0.0
        %3793 = vmatpush1.msra.mxu0 0.0
        %3794 = vmatprep.subr.mxu0 0.0
        %3795 = vmatpush1.msra.mxu0 0.0
        %3796 = vmatprep.subr.mxu0 0.0
        %3797 = vmatpush1.msra.mxu0 0.0
        %3798 = vmatprep.subr.mxu0 0.0
        %3799 = vmatpush1.msra.mxu0 0.0
        %3800 = vmatprep.subr.mxu0 0.0
        %3801 = vmatpush1.msra.mxu0 0.0
        %3802 = vmatprep.subr.mxu0 0.0
        %3803 = vmatpush1.msra.mxu0 0.0
        %3804 = vmatprep.subr.mxu0 0.0
        %3805 = vmatpush1.msra.mxu0 0.0
        %3806 = vmatprep.subr.mxu0 0.0
        %3807 = vmatpush1.msra.mxu0 0.0
        %3808 = vmatprep.mubr.f32.mxu0 0.0
        %3809 = vmatmul.mubr.f32.gmra.mrb[0].mxu0 %v3742
        %v3810 = vpop.f32.mrb[0].mxu0
        %v3811 = vadd.f32 %v3739, %v3810
        %v3812 = vpop.f32.mrb[0].mxu0
        %3813 = vdwg.mxu0
        %s3814 = scalar_lea.vmem %s9, 64
        %v3815 = vld [vmem:[%s3814] sm:$0xff]
        %v3816 = vld [vmem:[%s3814 + $0x8] sm:$0xff]
        %v3817 = vld [vmem:[%s3814 + $0x10] sm:$0xff]
        %v3818 = vld [vmem:[%s3814 + $0x18] sm:$0xff]
        %v3819 = vrot.slane %v3658, 2
        %v3820 = vsel %vm3635, %v3819, 0
        %3822 = vmatprep.subr.mxu0 0.0
        %3823 = vmatpush1.msra.mxu0 %v3815
        %3824 = vmatprep.subr.mxu0 0.0
        %3825 = vmatpush1.msra.mxu0 %v3816
        %3826 = vmatprep.subr.mxu0 0.0
        %3827 = vmatpush1.msra.mxu0 %v3817
        %3828 = vmatprep.subr.mxu0 0.0
        %3829 = vmatpush1.msra.mxu0 %v3818
        %3830 = vmatprep.subr.mxu0 0.0
        %3831 = vmatpush1.msra.mxu0 0.0
        %3832 = vmatprep.subr.mxu0 0.0
        %3833 = vmatpush1.msra.mxu0 0.0
        %3834 = vmatprep.subr.mxu0 0.0
        %3835 = vmatpush1.msra.mxu0 0.0
        %3836 = vmatprep.subr.mxu0 0.0
        %3837 = vmatpush1.msra.mxu0 0.0
        %3838 = vmatprep.subr.mxu0 0.0
        %3839 = vmatpush1.msra.mxu0 0.0
        %3840 = vmatprep.subr.mxu0 0.0
        %3841 = vmatpush1.msra.mxu0 0.0
        %3842 = vmatprep.subr.mxu0 0.0
        %3843 = vmatpush1.msra.mxu0 0.0
        %3844 = vmatprep.subr.mxu0 0.0
        %3845 = vmatpush1.msra.mxu0 0.0
        %3846 = vmatprep.subr.mxu0 0.0
        %3847 = vmatpush1.msra.mxu0 0.0
        %3848 = vmatprep.subr.mxu0 0.0
        %3849 = vmatpush1.msra.mxu0 0.0
        %3850 = vmatprep.subr.mxu0 0.0
        %3851 = vmatpush1.msra.mxu0 0.0
        %3852 = vmatprep.subr.mxu0 0.0
        %3853 = vmatpush1.msra.mxu0 0.0
        %3854 = vmatprep.subr.mxu0 0.0
        %3855 = vmatpush1.msra.mxu0 0.0
        %3856 = vmatprep.subr.mxu0 0.0
        %3857 = vmatpush1.msra.mxu0 0.0
        %3858 = vmatprep.subr.mxu0 0.0
        %3859 = vmatpush1.msra.mxu0 0.0
        %3860 = vmatprep.subr.mxu0 0.0
        %3861 = vmatpush1.msra.mxu0 0.0
        %3862 = vmatprep.subr.mxu0 0.0
        %3863 = vmatpush1.msra.mxu0 0.0
        %3864 = vmatprep.subr.mxu0 0.0
        %3865 = vmatpush1.msra.mxu0 0.0
        %3866 = vmatprep.subr.mxu0 0.0
        %3867 = vmatpush1.msra.mxu0 0.0
        %3868 = vmatprep.subr.mxu0 0.0
        %3869 = vmatpush1.msra.mxu0 0.0
        %3870 = vmatprep.subr.mxu0 0.0
        %3871 = vmatpush1.msra.mxu0 0.0
        %3872 = vmatprep.subr.mxu0 0.0
        %3873 = vmatpush1.msra.mxu0 0.0
        %3874 = vmatprep.subr.mxu0 0.0
        %3875 = vmatpush1.msra.mxu0 0.0
        %3876 = vmatprep.subr.mxu0 0.0
        %3877 = vmatpush1.msra.mxu0 0.0
        %3878 = vmatprep.subr.mxu0 0.0
        %3879 = vmatpush1.msra.mxu0 0.0
        %3880 = vmatprep.subr.mxu0 0.0
        %3881 = vmatpush1.msra.mxu0 0.0
        %3882 = vmatprep.subr.mxu0 0.0
        %3883 = vmatpush1.msra.mxu0 0.0
        %3884 = vmatprep.subr.mxu0 0.0
        %3885 = vmatpush1.msra.mxu0 0.0
        %3886 = vmatprep.mubr.f32.mxu0 0.0
        %3887 = vmatmul.mubr.f32.gmra.mrb[0].mxu0 %v3820
        %v3888 = vpop.f32.mrb[0].mxu0
        %v3889 = vadd.f32 0.0, %v3888
        %v3890 = vpop.f32.mrb[0].mxu0
        %3891 = vdwg.mxu0
        %v3892 = vadd.f32 %v3811, %v3889
        %s3893 = scalar_lea.vmem %s9, 96
        %v3894 = vld [vmem:[%s3893] sm:$0xff]
        %v3895 = vld [vmem:[%s3893 + $0x8] sm:$0xff]
        %v3896 = vld [vmem:[%s3893 + $0x10] sm:$0xff]
        %v3897 = vld [vmem:[%s3893 + $0x18] sm:$0xff]
        %v3898 = vrot.slane %v3658, 3
        %v3899 = vsel %vm3635, %v3898, 0
        %3901 = vmatprep.subr.mxu0 0.0
        %3902 = vmatpush1.msra.mxu0 %v3894
        %3903 = vmatprep.subr.mxu0 0.0
        %3904 = vmatpush1.msra.mxu0 %v3895
        %3905 = vmatprep.subr.mxu0 0.0
        %3906 = vmatpush1.msra.mxu0 %v3896
        %3907 = vmatprep.subr.mxu0 0.0
        %3908 = vmatpush1.msra.mxu0 %v3897
        %3909 = vmatprep.subr.mxu0 0.0
        %3910 = vmatpush1.msra.mxu0 0.0
        %3911 = vmatprep.subr.mxu0 0.0
        %3912 = vmatpush1.msra.mxu0 0.0
        %3913 = vmatprep.subr.mxu0 0.0
        %3914 = vmatpush1.msra.mxu0 0.0
        %3915 = vmatprep.subr.mxu0 0.0
        %3916 = vmatpush1.msra.mxu0 0.0
        %3917 = vmatprep.subr.mxu0 0.0
        %3918 = vmatpush1.msra.mxu0 0.0
        %3919 = vmatprep.subr.mxu0 0.0
        %3920 = vmatpush1.msra.mxu0 0.0
        %3921 = vmatprep.subr.mxu0 0.0
        %3922 = vmatpush1.msra.mxu0 0.0
        %3923 = vmatprep.subr.mxu0 0.0
        %3924 = vmatpush1.msra.mxu0 0.0
        %3925 = vmatprep.subr.mxu0 0.0
        %3926 = vmatpush1.msra.mxu0 0.0
        %3927 = vmatprep.subr.mxu0 0.0
        %3928 = vmatpush1.msra.mxu0 0.0
        %3929 = vmatprep.subr.mxu0 0.0
        %3930 = vmatpush1.msra.mxu0 0.0
        %3931 = vmatprep.subr.mxu0 0.0
        %3932 = vmatpush1.msra.mxu0 0.0
        %3933 = vmatprep.subr.mxu0 0.0
        %3934 = vmatpush1.msra.mxu0 0.0
        %3935 = vmatprep.subr.mxu0 0.0
        %3936 = vmatpush1.msra.mxu0 0.0
        %3937 = vmatprep.subr.mxu0 0.0
        %3938 = vmatpush1.msra.mxu0 0.0
        %3939 = vmatprep.subr.mxu0 0.0
        %3940 = vmatpush1.msra.mxu0 0.0
        %3941 = vmatprep.subr.mxu0 0.0
        %3942 = vmatpush1.msra.mxu0 0.0
        %3943 = vmatprep.subr.mxu0 0.0
        %3944 = vmatpush1.msra.mxu0 0.0
        %3945 = vmatprep.subr.mxu0 0.0
        %3946 = vmatpush1.msra.mxu0 0.0
        %3947 = vmatprep.subr.mxu0 0.0
        %3948 = vmatpush1.msra.mxu0 0.0
        %3949 = vmatprep.subr.mxu0 0.0
        %3950 = vmatpush1.msra.mxu0 0.0
        %3951 = vmatprep.subr.mxu0 0.0
        %3952 = vmatpush1.msra.mxu0 0.0
        %3953 = vmatprep.subr.mxu0 0.0
        %3954 = vmatpush1.msra.mxu0 0.0
        %3955 = vmatprep.subr.mxu0 0.0
        %3956 = vmatpush1.msra.mxu0 0.0
        %3957 = vmatprep.subr.mxu0 0.0
        %3958 = vmatpush1.msra.mxu0 0.0
        %3959 = vmatprep.subr.mxu0 0.0
        %3960 = vmatpush1.msra.mxu0 0.0
        %3961 = vmatprep.subr.mxu0 0.0
        %3962 = vmatpush1.msra.mxu0 0.0
        %3963 = vmatprep.subr.mxu0 0.0
        %3964 = vmatpush1.msra.mxu0 0.0
        %3965 = vmatprep.mubr.f32.mxu0 0.0
        %3966 = vmatmul.mubr.f32.gmra.mrb[0].mxu0 %v3899
        %v3967 = vpop.f32.mrb[0].mxu0
        %v3968 = vadd.f32 0.0, %v3967
        %v3969 = vpop.f32.mrb[0].mxu0
        %3970 = vdwg.mxu0
        %v3971 = vadd.f32 %v3892, %v3968
        %v3972 = vld [vmem:[%s10] sm:$0x1]
        %v3973 = vadd.f32 %v3971, %v3972
        %vm3974 = vcmask 122880
        %v3975 = vsel %vm3974, %v3973, -inf
        %3976 = vmax.xlane.f32.xlu0 %v3975
        %v3977 = vpop.xlane.xlu0 %3976
        %v3978 = vsub.f32 %v3973, %v3977
        %v3979 = vmul.f32 %v3978, 1.442695
        %v3980 = vpow.pop %v3979
        %v3981 = vsel %vm3974, %v3980, 0.0
        %3982 = vadd.xlane.f32.xlu0 %v3981
        %v3983 = vpop.xlane.xlu0 %3982
        %v3984 = vrcp.pop %v3983
        %v3985 = vmul.f32 %v3980, %v3984
        %v3986 = vld [vmem:[%s10 + $0x1] sm:$0x1]
        %v3987 = vmul.f32 %v3985, %v3986
        %v3988 = vld [vmem:[%s10 + $0x2] sm:$0x1]
        %v3989 = vadd.f32 %v3987, %v3988
        %3990 = vst.msk [vmem:[%s442] sm:$0x1] %vm3974, %v3989
        %v3991 = vld [vmem:[%s11] sm:$0xff]
        %v3992 = vld [vmem:[%s11 + $0x8] sm:$0xff]
        %vm3993 = vcmask 130048
        %v3995 = vsel %vm3993, %v3989, 0
        %3997 = vmatprep.subr.mxu0 0.0
        %3998 = vmatpush1.msra.mxu0 %v3991
        %3999 = vmatprep.subr.mxu0 0.0
        %4000 = vmatpush1.msra.mxu0 %v3992
        %4001 = vmatprep.subr.mxu0 0.0
        %4002 = vmatpush1.msra.mxu0 0.0
        %4003 = vmatprep.subr.mxu0 0.0
        %4004 = vmatpush1.msra.mxu0 0.0
        %4005 = vmatprep.subr.mxu0 0.0
        %4006 = vmatpush1.msra.mxu0 0.0
        %4007 = vmatprep.subr.mxu0 0.0
        %4008 = vmatpush1.msra.mxu0 0.0
        %4009 = vmatprep.subr.mxu0 0.0
        %4010 = vmatpush1.msra.mxu0 0.0
        %4011 = vmatprep.subr.mxu0 0.0
        %4012 = vmatpush1.msra.mxu0 0.0
        %4013 = vmatprep.subr.mxu0 0.0
        %4014 = vmatpush1.msra.mxu0 0.0
        %4015 = vmatprep.subr.mxu0 0.0
        %4016 = vmatpush1.msra.mxu0 0.0
        %4017 = vmatprep.subr.mxu0 0.0
        %4018 = vmatpush1.msra.mxu0 0.0
        %4019 = vmatprep.subr.mxu0 0.0
        %4020 = vmatpush1.msra.mxu0 0.0
        %4021 = vmatprep.subr.mxu0 0.0
        %4022 = vmatpush1.msra.mxu0 0.0
        %4023 = vmatprep.subr.mxu0 0.0
        %4024 = vmatpush1.msra.mxu0 0.0
        %4025 = vmatprep.subr.mxu0 0.0
        %4026 = vmatpush1.msra.mxu0 0.0
        %4027 = vmatprep.subr.mxu0 0.0
        %4028 = vmatpush1.msra.mxu0 0.0
        %4029 = vmatprep.subr.mxu0 0.0
        %4030 = vmatpush1.msra.mxu0 0.0
        %4031 = vmatprep.subr.mxu0 0.0
        %4032 = vmatpush1.msra.mxu0 0.0
        %4033 = vmatprep.subr.mxu0 0.0
        %4034 = vmatpush1.msra.mxu0 0.0
        %4035 = vmatprep.subr.mxu0 0.0
        %4036 = vmatpush1.msra.mxu0 0.0
        %4037 = vmatprep.subr.mxu0 0.0
        %4038 = vmatpush1.msra.mxu0 0.0
        %4039 = vmatprep.subr.mxu0 0.0
        %4040 = vmatpush1.msra.mxu0 0.0
        %4041 = vmatprep.subr.mxu0 0.0
        %4042 = vmatpush1.msra.mxu0 0.0
        %4043 = vmatprep.subr.mxu0 0.0
        %4044 = vmatpush1.msra.mxu0 0.0
        %4045 = vmatprep.subr.mxu0 0.0
        %4046 = vmatpush1.msra.mxu0 0.0
        %4047 = vmatprep.subr.mxu0 0.0
        %4048 = vmatpush1.msra.mxu0 0.0
        %4049 = vmatprep.subr.mxu0 0.0
        %4050 = vmatpush1.msra.mxu0 0.0
        %4051 = vmatprep.subr.mxu0 0.0
        %4052 = vmatpush1.msra.mxu0 0.0
        %4053 = vmatprep.subr.mxu0 0.0
        %4054 = vmatpush1.msra.mxu0 0.0
        %4055 = vmatprep.subr.mxu0 0.0
        %4056 = vmatpush1.msra.mxu0 0.0
        %4057 = vmatprep.subr.mxu0 0.0
        %4058 = vmatpush1.msra.mxu0 0.0
        %4059 = vmatprep.subr.mxu0 0.0
        %4060 = vmatpush1.msra.mxu0 0.0
        %4061 = vmatprep.mubr.f32.mxu0 0.0
        %4062 = vmatmul.mubr.f32.gmra.mrb[0].mxu0 %v3995
        %v4063 = vpop.f32.mrb[0].mxu0
        %v4064 = vadd.f32 0.0, %v4063
        %v4065 = vpop.f32.mrb[0].mxu0
        %4066 = vdwg.mxu0
        %vm4067 = vcmask 155648
        %4068 = vst.msk [vmem:[%s436] sm:$0x1] %vm4067, %v4064
        %s4069 = sand.u32 %s296, 1
        %s4070 = scalar_lea.sflag [#allocation3], %s4069
        %s4071 = sand.u32 %s296, 1
        %s4072 = scalar_lea.vmem [#allocation2], %s4071
        %s4073 = sand.u32 %s322, 1
        %s4074 = scalar_lea.sflag [#allocation5], %s4073
        %s4075 = sand.u32 %s322, 1
        %s4076 = scalar_lea.vmem [#allocation4], %s4075
        // Predicated region
        $region69: #{cnn_forward.1} parent=67 // pred_check
          %p4077 = pneg %p306
        $region70: #{cnn_forward.1} parent=67 // pred_check_branch
          %4079 = sbr.rel (%p4077) target = $region72
        $region71: #{cnn_forward.1} parent=67 // pred_region
          %s4081 = ssub.s32 16, 16
          %4082 = vsyncadd %s4070, %s4081
          %s4083 = smul.addr %s31, 16
          %s4084 = scalar_lea.hbm %s12, %s4083
          %s4086 = sshll.u32 %s4072, 4
          %s4087 = int_to_ptr.vmem [resolvable:$true] %s4086
          %4089 = dma.vmem_to_hbm [thread:$0]  %s4087, 16, %s4084, %s4070
        $region72: #{cnn_forward.1} parent=67 // pred_fallthru
          _
        // Predicated region
        $region73: #{cnn_forward.1} parent=67 // pred_check
          %p4090 = pneg %p332
        $region74: #{cnn_forward.1} parent=67 // pred_check_branch
          %4092 = sbr.rel (%p4090) target = $region76
        $region75: #{cnn_forward.1} parent=67 // pred_region
          %s4094 = ssub.s32 16, 16
          %4095 = vsyncadd %s4074, %s4094
          %s4096 = smul.addr %s31, 16
          %s4097 = scalar_lea.hbm %s13, %s4096
          %s4099 = sshll.u32 %s4076, 4
          %s4100 = int_to_ptr.vmem [resolvable:$true] %s4099
          %4102 = dma.vmem_to_hbm [thread:$0]  %s4100, 16, %s4097, %s4074
        $region76: #{cnn_forward.1} parent=67 // pred_fallthru
          _
      $region68: #{cnn_forward.1} parent=5 // pred_fallthru
        _
      %p4103 = scmp.le.s32.totalorder 2, %s26
      // Predicated region
      $region77: #{cnn_forward.1} parent=5 // pred_check
        %p4104 = pneg %p4103
      $region78: #{cnn_forward.1} parent=5 // pred_check_branch
        %4106 = sbr.rel (%p4104) target = $region80
      $region79: #{cnn_forward.1} parent=5 // pred_region
        %s4107 = ssub.s32 %s26, 2
        // Predicated region
        $region81: #{cnn_forward.1} parent=79 // pred_check
          %p4108 = pneg %p312
        $region82: #{cnn_forward.1} parent=79 // pred_check_branch
          %4110 = sbr.rel (%p4108) target = $region84
        $region83: #{cnn_forward.1} parent=79 // pred_region
          %s4111 = sand.u32 %s297, 1
          %s4112 = scalar_lea.sflag [#allocation3], %s4111
          %s4113 = sand.u32 %s297, 1
          %s4114 = scalar_lea.vmem [#allocation2], %s4113
          %4115 = dma.done %s4112, 16
        $region84: #{cnn_forward.1} parent=79 // pred_fallthru
          _
        // Predicated region
        $region85: #{cnn_forward.1} parent=79 // pred_check
          %p4116 = pneg %p338
        $region86: #{cnn_forward.1} parent=79 // pred_check_branch
          %4118 = sbr.rel (%p4116) target = $region88
        $region87: #{cnn_forward.1} parent=79 // pred_region
          %s4119 = sand.u32 %s323, 1
          %s4120 = scalar_lea.sflag [#allocation5], %s4119
          %s4121 = sand.u32 %s323, 1
          %s4122 = scalar_lea.vmem [#allocation4], %s4121
          %4123 = dma.done %s4120, 16
        $region88: #{cnn_forward.1} parent=79 // pred_fallthru
          _
      $region80: #{cnn_forward.1} parent=5 // pred_fallthru
        _
    $region6: #{cnn_forward.1} parent=1 // loop_footer
      %s30 = sadd.s32 1, %s26
    $region7: #{cnn_forward.1} parent=1 // loop_footer_branch
      %25 = sbr.rel target = $region3
    $region8: #{cnn_forward.1} parent=1 // loop_exit
      _
    %4124 = vsyncpa [#allocation3], 1
    %s4125 = scalar_lea.sflag [#allocation3], 1
    %4126 = vsyncpa %s4125, 1
    %4127 = vsyncpa [#allocation5], 1
    %s4128 = scalar_lea.sflag [#allocation5], 1
    %4129 = vsyncpa %s4128, 1

</llo_original>
